<compile_context>
chip_gen: v5e
topology: v5e:2x2
jax: 0.10.0
libtpu: 0.0.40
codegen_flags: <defaults>
</compile_context>

<pallas_src>
import numpy as np

import jax
import jax.numpy as jnp
from jax.experimental import pallas as pl
from jax.experimental.pallas import tpu as pltpu

# ----------------------------- configuration ---------------------------------
XYZ_RES = 6          # cfg.xyz_res   -> input_ch       = 3 * (1 + 2*6) = 39
VIEW_RES = 4         # cfg.view_res  -> input_ch_views = 3 * (1 + 2*4) = 27
NET_DEPTH = 8        # cfg.netdepth
NET_WIDTH = 64       # cfg.netwidth
SKIPS = (4,)
TILE_M = 2048        # points per grid step (in-kernel "netchunk")
VMEM_LIMIT_BYTES = 48 * 1024 * 1024   # safe on v5e/v6e (128 MiB) and v7x (64 MiB)


def _round_up(x, m):
    return ((x + m - 1) // m) * m


# ------------------------------ embedders (reference) ------------------------
def positional_embed(x, multires):
    """Standard NeRF positional lift: [x, sin(2^k x), cos(2^k x)]_k."""
    outs = [x]
    for k in range(multires):
        freq = 2.0 ** k
        outs.append(jnp.sin(x * freq))
        outs.append(jnp.cos(x * freq))
    return jnp.concatenate(outs, axis=-1)


def get_embedder(multires):
    def embed(x):
        return positional_embed(x, multires)
    out_dim = 3 * (1 + 2 * multires)
    return embed, out_dim


# ------------------------------ parameter init --------------------------------
def init_linear(key, fan_in, fan_out):
    """PyTorch-style uniform init, weight stored as (in, out)."""
    kw, kb = jax.random.split(key)
    bound = 1.0 / float(np.sqrt(fan_in))
    w = jax.random.uniform(kw, (fan_in, fan_out), jnp.float32, -bound, bound)
    b = jax.random.uniform(kb, (1, fan_out), jnp.float32, -bound, bound)
    return w, b


def init_nerf_params(key, D, W, input_ch, input_ch_views, skips):
    assert all(0 <= s < D - 1 for s in skips)
    params = []
    keys = jax.random.split(key, D + 4)
    in_dim = input_ch
    for i in range(D):                                   # pts_linears
        params.extend(init_linear(keys[i], in_dim, W))
        in_dim = W + input_ch if i in skips else W
    params.extend(init_linear(keys[D + 0], W, W))                        # feature
    params.extend(init_linear(keys[D + 1], W, 1))                        # alpha
    params.extend(init_linear(keys[D + 2], input_ch_views + W, W // 2))  # views
    params.extend(init_linear(keys[D + 3], W // 2, 3))                   # rgb
    return params


# --------------------- restructure params for the kernel ----------------------
def prepare_kernel_params(params, D, W, input_ch, input_ch_views, skips,
                          xyz_res, view_res, compute_dtype,
                          head_dtype=jnp.float32):
    """Offline (host-side, numpy) restructuring:
      * phase matrix F (6, SC) + phase bias so a single in-kernel sin produces
        every sin/cos feature: slab layout [sin_pts | cos_pts | sin_dir | cos_dir],
      * row-permute/split layer-0, skip-layer and view-head weights into a
        "raw (6 rows)" part and a "sin-slab (SC rows)" part,
      * fold feature_linear into views_linears[0] (both linear, no activation),
      * widen alpha / rgb heads to 4 output columns so the kernel does one
        (TM,4) store.
    Body weights are cast to compute_dtype; biases and output heads stay f32."""
    f32 = np.float32
    cdt = compute_dtype

    n_sin_pts = 3 * xyz_res          # 18
    n_sin_view = 3 * view_res        # 12
    sc = 2 * (n_sin_pts + n_sin_view)  # 60
    off_pts_sin = 0
    off_pts_cos = n_sin_pts
    off_dir_sin = 2 * n_sin_pts
    off_dir_cos = 2 * n_sin_pts + n_sin_view

    # phase matrix / bias:  sin(x6 @ F + pb) == [sin_pts | cos_pts | sin_d | cos_d]
    F = np.zeros((6, sc), f32)
    pb = np.zeros((1, sc), f32)
    for k in range(xyz_res):
        for c in range(3):
            F[c, off_pts_sin + 3 * k + c] = 2.0 ** k
            F[c, off_pts_cos + 3 * k + c] = 2.0 ** k
    for k in range(view_res):
        for c in range(3):
            F[3 + c, off_dir_sin + 3 * k + c] = 2.0 ** k
            F[3 + c, off_dir_cos + 3 * k + c] = 2.0 ** k
    pb[0, off_pts_cos:off_pts_cos + n_sin_pts] = np.pi / 2.0
    pb[0, off_dir_cos:off_dir_cos + n_sin_view] = np.pi / 2.0

    def split_pts_rows(w):
        """w rows follow the original pts embedding [x, sin f0, cos f0, ...]."""
        raw = np.zeros((6, w.shape[1]), f32)
        raw[0:3] = w[0:3]
        s = np.zeros((sc, w.shape[1]), f32)
        for k in range(xyz_res):
            s[off_pts_sin + 3 * k: off_pts_sin + 3 * k + 3] = w[3 + 6 * k: 3 + 6 * k + 3]
            s[off_pts_cos + 3 * k: off_pts_cos + 3 * k + 3] = w[3 + 6 * k + 3: 3 + 6 * k + 6]
        return raw, s

    def split_view_rows(w):
        raw = np.zeros((6, w.shape[1]), f32)
        raw[3:6] = w[0:3]
        s = np.zeros((sc, w.shape[1]), f32)
        for k in range(view_res):
            s[off_dir_sin + 3 * k: off_dir_sin + 3 * k + 3] = w[3 + 6 * k: 3 + 6 * k + 3]
            s[off_dir_cos + 3 * k: off_dir_cos + 3 * k + 3] = w[3 + 6 * k + 3: 3 + 6 * k + 6]
        return raw, s

    p = [np.asarray(a, f32) for a in params]
    out = [jnp.asarray(F), jnp.asarray(pb)]

    idx = 0
    for i in range(D):
        w, b = p[idx], p[idx + 1]
        idx += 2
        if i == 0:
            raw, s = split_pts_rows(w)
            out += [jnp.asarray(raw, cdt), jnp.asarray(s, cdt)]
        elif (i - 1) in skips:
            # layer after a skip: cat([input_pts, h]) @ w == pts-part + h-part
            w_pts, w_h = w[:input_ch], w[input_ch:]
            raw, s = split_pts_rows(w_pts)
            out += [jnp.asarray(w_h, cdt), jnp.asarray(raw, cdt), jnp.asarray(s, cdt)]
        else:
            out.append(jnp.asarray(w, cdt))
        out.append(jnp.asarray(b, jnp.float32))

    (feat_w, feat_b, alpha_w, alpha_b,
     views_w, views_b, rgb_w, rgb_b) = p[idx:]

    wv_f = views_w[:W]               # multiplies `feature`
    wv_d = views_w[W:]               # multiplies the view-dir embedding
    vf_fused = feat_w @ wv_f                             # feature_linear folded in
    bv_fused = views_b + feat_b @ wv_f
    vd_raw, vd_sc = split_view_rows(wv_d)

    alpha_w4 = np.zeros((W, 4), f32)
    alpha_w4[:, 3] = alpha_w[:, 0]                       # alpha -> channel 3
    rgb_w4 = np.zeros((W // 2, 4), f32)
    rgb_w4[:, :3] = rgb_w                                # rgb -> channels 0..2
    out_b4 = np.zeros((1, 4), f32)
    out_b4[0, :3] = rgb_b[0]
    out_b4[0, 3] = alpha_b[0, 0]

    out += [jnp.asarray(alpha_w4, head_dtype),
            jnp.asarray(vf_fused, cdt), jnp.asarray(vd_raw, cdt),
            jnp.asarray(vd_sc, cdt), jnp.asarray(bv_fused, jnp.float32),
            jnp.asarray(rgb_w4, head_dtype), jnp.asarray(out_b4, head_dtype)]
    return out


# ------------------------------ Pallas kernel ---------------------------------
def make_nerf_kernel(D, W, skips, compute_dtype):
    f32 = jnp.float32
    cdt = compute_dtype

    def kernel(x_ref, *refs):
        out_ref = refs[-1]
        prm = refs[:-1]

        def mm(a, w_ref):   # MXU matmul, f32 accumulation
            return jnp.dot(a, w_ref[...], preferred_element_type=f32)

        x6 = x_ref[...]                                     # (TM, 6) f32
        # One lane-dense transcendental for the whole embedding (sin + cos).
        phases = mm(x6, prm[0]) + prm[1][...]               # (TM, SC) f32
        sin_all = jnp.sin(phases)
        x6_c = x6.astype(cdt)                               # cast once
        sin_c = sin_all.astype(cdt)

        idx = 2
        # layer 0: raw-coords part + sin/cos part (row-split weight, no concat)
        w_raw, w_sc, b0 = prm[idx], prm[idx + 1], prm[idx + 2]
        idx += 3
        z = mm(x6_c, w_raw) + mm(sin_c, w_sc) + b0[...]
        h = jnp.maximum(z, 0.0).astype(cdt)

        for i in range(1, D):
            if (i - 1) in skips:
                # skip-concat of the reference realized as summed matmuls
                w_h, ws_raw, ws_sc, b = prm[idx:idx + 4]
                idx += 4
                z = mm(h, w_h) + mm(x6_c, ws_raw) + mm(sin_c, ws_sc) + b[...]
            else:
                w, b = prm[idx], prm[idx + 1]
                idx += 2
                z = mm(h, w) + b[...]
            h = jnp.maximum(z, 0.0).astype(cdt)

        (alpha_w4, vf_w, vd_raw, vd_sc, bv, rgb_w4, out_b4) = prm[idx:idx + 7]

        # views head (feature_linear already folded into vf_w offline)
        hv = jnp.maximum(
            mm(h, vf_w) + mm(x6_c, vd_raw) + mm(sin_c, vd_sc) + bv[...], 0.0)

        # rgb (cols 0..2) + alpha (col 3) in f32, one (TM,4) store
        out4 = mm(hv, rgb_w4) + mm(h.astype(f32), alpha_w4) + out_b4[...]
        out_ref[...] = out4.astype(out_ref.dtype)

    return kernel


def nerf_mlp_pallas(pts, dirs, kparams, *, D, W, skips, compute_dtype,
                    tile_m=TILE_M, vmem_limit_bytes=VMEM_LIMIT_BYTES):
    """pts, dirs: (N, 3) float32. Returns (N, 4) float32 = [rgb, alpha]."""
    n = pts.shape[0]
    # Pack pts + dirs into one (N, 6) input (single narrow DMA stream).
    x6 = jnp.concatenate(
        [pts.astype(jnp.float32), dirs.astype(jnp.float32)], axis=-1)

    tile = min(tile_m, max(8, _round_up(n, 8)))
    n_pad = _round_up(n, tile)
    if n_pad != n:
        x6 = jnp.pad(x6, ((0, n_pad - n), (0, 0)))

    kernel = make_nerf_kernel(D, W, skips, compute_dtype)

    in_specs = [pl.BlockSpec((tile, 6), lambda i: (i, 0))]
    # Constant index_maps: weights/biases are DMA'd once and stay VMEM-resident.
    in_specs += [pl.BlockSpec(p.shape, lambda i: (0, 0)) for p in kparams]

    out = pl.pallas_call(
        kernel,
        out_shape=jax.ShapeDtypeStruct((n_pad, 4), jnp.float32),
        grid_spec=pltpu.PrefetchScalarGridSpec(
            num_scalar_prefetch=0,
            grid=(n_pad // tile,),
            in_specs=in_specs,
            out_specs=pl.BlockSpec((tile, 4), lambda i: (i, 0)),
        ),
        compiler_params=pltpu.CompilerParams(
            # Point tiles are independent; on v7x this axis can additionally be
            # split across both TensorCores (CORE_PARALLEL) if profiling shows
            # only one TC busy.
            dimension_semantics=("parallel",),
            vmem_limit_bytes=vmem_limit_bytes,
        ),
    )(x6, *kparams)

    return out[:n]


# ------------------------------ Network forward --------------------------------
class Network:
    """JAX/Pallas port of the PyTorch `Network` module (coarse + fine models)."""
    # TODO(synk): the use_viewdirs=False branch of the original Nerf references an
    # undefined self.output_linear; only the (used) use_viewdirs=True path is ported.

    def __init__(self, key, compute_dtype=jnp.bfloat16):
        self.embed_fn, self.input_ch = get_embedder(XYZ_RES)
        self.embeddirs_fn, self.input_ch_views = get_embedder(VIEW_RES)
        self.compute_dtype = compute_dtype
        k_coarse, k_fine = jax.random.split(key)
        self.params_coarse = init_nerf_params(
            k_coarse, NET_DEPTH, NET_WIDTH, self.input_ch,
            self.input_ch_views, SKIPS)
        self.params_fine = init_nerf_params(
            k_fine, NET_DEPTH, NET_WIDTH, self.input_ch,
            self.input_ch_views, SKIPS)
        self.kparams_coarse = prepare_kernel_params(
            self.params_coarse, NET_DEPTH, NET_WIDTH, self.input_ch,
            self.input_ch_views, SKIPS, XYZ_RES, VIEW_RES, compute_dtype)
        self.kparams_fine = prepare_kernel_params(
            self.params_fine, NET_DEPTH, NET_WIDTH, self.input_ch,
            self.input_ch_views, SKIPS, XYZ_RES, VIEW_RES, compute_dtype)

    def __call__(self, inputs, viewdirs, model=""):
        kparams = self.kparams_fine if model == "fine" else self.kparams_coarse
        pts_flat = inputs.reshape(-1, inputs.shape[-1])                  # (N, 3)
        dirs_flat = jnp.broadcast_to(
            viewdirs[:, None, :], inputs.shape).reshape(-1, 3)           # (N, 3)
        out = nerf_mlp_pallas(
            pts_flat, dirs_flat, kparams,
            D=NET_DEPTH, W=NET_WIDTH, skips=SKIPS,
            compute_dtype=self.compute_dtype)
        return out.reshape(inputs.shape[:-1] + (out.shape[-1],))


# ------------------------------ pure-JAX reference ------------------------------
def nerf_mlp_ref(embedded, params, D, input_ch, input_ch_views, skips):
    input_pts = embedded[:, :input_ch]
    input_views = embedded[:, input_ch:input_ch + input_ch_views]
    h = input_pts
    idx = 0
    for i in range(D):
        w, b = params[idx], params[idx + 1]
        idx += 2
        h = jnp.maximum(h @ w + b, 0.0)
        if i in skips:
            h = jnp.concatenate([input_pts, h], axis=-1)
    feat_w, feat_b, alpha_w, alpha_b, views_w, views_b, rgb_w, rgb_b = params[idx:]
    alpha = h @ alpha_w + alpha_b
    feature = h @ feat_w + feat_b
    hv = jnp.maximum(
        jnp.concatenate([feature, input_views], -1) @ views_w + views_b, 0.0)
    rgb = hv @ rgb_w + rgb_b
    return jnp.concatenate([rgb, alpha], axis=-1)


# ------------------------------ main -------------------------------------------
if __name__ == "__main__":
    key = jax.random.PRNGKey(0)
    k_net, k_in, k_dirs = jax.random.split(key, 3)

    n_rays, n_samples = 2, 64                          # N = 128 flattened points
    inputs = jax.random.normal(k_in, (n_rays, n_samples, 3), jnp.float32)
    viewdirs = jax.random.normal(k_dirs, (n_rays, 3), jnp.float32)
    viewdirs = viewdirs / jnp.linalg.norm(viewdirs, axis=-1, keepdims=True)

    # pure-JAX reference of the original unfused / unsplit MLP
    net_f32 = Network(k_net, compute_dtype=jnp.float32)
    pts_flat = inputs.reshape(-1, 3)
    dirs_flat = jnp.broadcast_to(viewdirs[:, None, :], inputs.shape).reshape(-1, 3)
    emb = jnp.concatenate(
        [net_f32.embed_fn(pts_flat), net_f32.embeddirs_fn(dirs_flat)], axis=-1)
    ref = nerf_mlp_ref(emb, net_f32.params_coarse, NET_DEPTH, net_f32.input_ch,
                       net_f32.input_ch_views, SKIPS).reshape(n_rays, n_samples, 4)

    # f32 compute path: tight check against the reference
    out_f32 = jax.block_until_ready(net_f32(inputs, viewdirs, model=""))
    assert out_f32.shape == (n_rays, n_samples, 4), out_f32.shape
    assert jnp.allclose(out_f32, ref, atol=2e-3, rtol=2e-3), \
        float(jnp.max(jnp.abs(out_f32 - ref)))

    # exercise the 'fine' model path once
    out_fine = jax.block_until_ready(net_f32(inputs, viewdirs, model="fine"))
    assert out_fine.shape == (n_rays, n_samples, 4)

    # default bfloat16 compute path (MXU-native on v5e/v6e/v7x; f32 heads) — loose check
    net = Network(k_net)    # compute_dtype defaults to bfloat16
    out_bf16 = jax.block_until_ready(net(inputs, viewdirs, model=""))
    assert out_bf16.shape == (n_rays, n_samples, 4)
    assert bool(jnp.all(jnp.isfinite(out_bf16)))
    assert jnp.allclose(out_bf16, ref, atol=1e-1, rtol=1e-1), \
        float(jnp.max(jnp.abs(out_bf16 - ref)))

    print("KERNEL_OK")
</pallas_src>

<mosaic_0001>
module attributes {stable_mosaic.version = 11 : i64} {
  func.func @kernel(%arg0: i32, %arg1: memref<128x6xf32, #tpu.memory_space<vmem>>, %arg2: memref<6x60xf32, #tpu.memory_space<vmem>>, %arg3: memref<1x60xf32, #tpu.memory_space<vmem>>, %arg4: memref<6x64xf32, #tpu.memory_space<vmem>>, %arg5: memref<60x64xf32, #tpu.memory_space<vmem>>, %arg6: memref<1x64xf32, #tpu.memory_space<vmem>>, %arg7: memref<64x64xf32, #tpu.memory_space<vmem>>, %arg8: memref<1x64xf32, #tpu.memory_space<vmem>>, %arg9: memref<64x64xf32, #tpu.memory_space<vmem>>, %arg10: memref<1x64xf32, #tpu.memory_space<vmem>>, %arg11: memref<64x64xf32, #tpu.memory_space<vmem>>, %arg12: memref<1x64xf32, #tpu.memory_space<vmem>>, %arg13: memref<64x64xf32, #tpu.memory_space<vmem>>, %arg14: memref<1x64xf32, #tpu.memory_space<vmem>>, %arg15: memref<64x64xf32, #tpu.memory_space<vmem>>, %arg16: memref<6x64xf32, #tpu.memory_space<vmem>>, %arg17: memref<60x64xf32, #tpu.memory_space<vmem>>, %arg18: memref<1x64xf32, #tpu.memory_space<vmem>>, %arg19: memref<64x64xf32, #tpu.memory_space<vmem>>, %arg20: memref<1x64xf32, #tpu.memory_space<vmem>>, %arg21: memref<64x64xf32, #tpu.memory_space<vmem>>, %arg22: memref<1x64xf32, #tpu.memory_space<vmem>>, %arg23: memref<64x4xf32, #tpu.memory_space<vmem>>, %arg24: memref<64x32xf32, #tpu.memory_space<vmem>>, %arg25: memref<6x32xf32, #tpu.memory_space<vmem>>, %arg26: memref<60x32xf32, #tpu.memory_space<vmem>>, %arg27: memref<1x32xf32, #tpu.memory_space<vmem>>, %arg28: memref<32x4xf32, #tpu.memory_space<vmem>>, %arg29: memref<1x4xf32, #tpu.memory_space<vmem>>, %arg30: memref<128x4xf32, #tpu.memory_space<vmem>>) attributes {dimension_semantics = [#tpu.dimension_semantics<parallel>], iteration_bounds = array<i64: 1>, scalar_prefetch = 0 : i64, scratch_operands = 0 : i64, tpu.core_type = #tpu.core_type<tc>, window_params = [{transform_indices = @transform_0, window_bounds = array<i64: 128, 6>}, {pipeline_mode = #tpu.pipeline_mode<synchronous>, transform_indices = @transform_1, window_bounds = array<i64: 6, 60>}, {pipeline_mode = #tpu.pipeline_mode<synchronous>, transform_indices = @transform_2, window_bounds = array<i64: 1, 60>}, {pipeline_mode = #tpu.pipeline_mode<synchronous>, transform_indices = @transform_3, window_bounds = array<i64: 6, 64>}, {pipeline_mode = #tpu.pipeline_mode<synchronous>, transform_indices = @transform_4, window_bounds = array<i64: 60, 64>}, {pipeline_mode = #tpu.pipeline_mode<synchronous>, transform_indices = @transform_5, window_bounds = array<i64: 1, 64>}, {pipeline_mode = #tpu.pipeline_mode<synchronous>, transform_indices = @transform_6, window_bounds = array<i64: 64, 64>}, {pipeline_mode = #tpu.pipeline_mode<synchronous>, transform_indices = @transform_7, window_bounds = array<i64: 1, 64>}, {pipeline_mode = #tpu.pipeline_mode<synchronous>, transform_indices = @transform_8, window_bounds = array<i64: 64, 64>}, {pipeline_mode = #tpu.pipeline_mode<synchronous>, transform_indices = @transform_9, window_bounds = array<i64: 1, 64>}, {pipeline_mode = #tpu.pipeline_mode<synchronous>, transform_indices = @transform_10, window_bounds = array<i64: 64, 64>}, {pipeline_mode = #tpu.pipeline_mode<synchronous>, transform_indices = @transform_11, window_bounds = array<i64: 1, 64>}, {pipeline_mode = #tpu.pipeline_mode<synchronous>, transform_indices = @transform_12, window_bounds = array<i64: 64, 64>}, {pipeline_mode = #tpu.pipeline_mode<synchronous>, transform_indices = @transform_13, window_bounds = array<i64: 1, 64>}, {pipeline_mode = #tpu.pipeline_mode<synchronous>, transform_indices = @transform_14, window_bounds = array<i64: 64, 64>}, {pipeline_mode = #tpu.pipeline_mode<synchronous>, transform_indices = @transform_15, window_bounds = array<i64: 6, 64>}, {pipeline_mode = #tpu.pipeline_mode<synchronous>, transform_indices = @transform_16, window_bounds = array<i64: 60, 64>}, {pipeline_mode = #tpu.pipeline_mode<synchronous>, transform_indices = @transform_17, window_bounds = array<i64: 1, 64>}, {pipeline_mode = #tpu.pipeline_mode<synchronous>, transform_indices = @transform_18, window_bounds = array<i64: 64, 64>}, {pipeline_mode = #tpu.pipeline_mode<synchronous>, transform_indices = @transform_19, window_bounds = array<i64: 1, 64>}, {pipeline_mode = #tpu.pipeline_mode<synchronous>, transform_indices = @transform_20, window_bounds = array<i64: 64, 64>}, {pipeline_mode = #tpu.pipeline_mode<synchronous>, transform_indices = @transform_21, window_bounds = array<i64: 1, 64>}, {pipeline_mode = #tpu.pipeline_mode<synchronous>, transform_indices = @transform_22, window_bounds = array<i64: 64, 4>}, {pipeline_mode = #tpu.pipeline_mode<synchronous>, transform_indices = @transform_23, window_bounds = array<i64: 64, 32>}, {pipeline_mode = #tpu.pipeline_mode<synchronous>, transform_indices = @transform_24, window_bounds = array<i64: 6, 32>}, {pipeline_mode = #tpu.pipeline_mode<synchronous>, transform_indices = @transform_25, window_bounds = array<i64: 60, 32>}, {pipeline_mode = #tpu.pipeline_mode<synchronous>, transform_indices = @transform_26, window_bounds = array<i64: 1, 32>}, {pipeline_mode = #tpu.pipeline_mode<synchronous>, transform_indices = @transform_27, window_bounds = array<i64: 32, 4>}, {pipeline_mode = #tpu.pipeline_mode<synchronous>, transform_indices = @transform_28, window_bounds = array<i64: 1, 4>}, {transform_indices = @transform_29, window_bounds = array<i64: 128, 4>}]} {
    %c0 = arith.constant 0 : index
    %c0_0 = arith.constant 0 : index
    %0 = vector.load %arg1[%c0, %c0_0] : memref<128x6xf32, #tpu.memory_space<vmem>>, vector<128x6xf32>
    %c0_1 = arith.constant 0 : index
    %c0_2 = arith.constant 0 : index
    %1 = vector.load %arg2[%c0_1, %c0_2] : memref<6x60xf32, #tpu.memory_space<vmem>>, vector<6x60xf32>
    %cst = arith.constant dense<0.000000e+00> : vector<128x60xf32>
    %2 = tpu.matmul %0, %1, %cst {dimension_numbers = #tpu.dot_dimension_numbers<[1], [0], [0], [1], [0, 0, 1, 1], [], []>} : vector<128x6xf32>, vector<6x60xf32>, vector<128x60xf32> -> vector<128x60xf32>
    %c0_3 = arith.constant 0 : index
    %c0_4 = arith.constant 0 : index
    %3 = vector.load %arg3[%c0_3, %c0_4] : memref<1x60xf32, #tpu.memory_space<vmem>>, vector<1x60xf32>
    %4 = vector.broadcast %3 : vector<1x60xf32> to vector<128x60xf32>
    %5 = arith.addf %2, %4 : vector<128x60xf32>
    %6 = math.sin %5 : vector<128x60xf32>
    %c0_5 = arith.constant 0 : index
    %c0_6 = arith.constant 0 : index
    %7 = vector.load %arg4[%c0_5, %c0_6] : memref<6x64xf32, #tpu.memory_space<vmem>>, vector<6x64xf32>
    %cst_7 = arith.constant dense<0.000000e+00> : vector<128x64xf32>
    %8 = tpu.matmul %0, %7, %cst_7 {dimension_numbers = #tpu.dot_dimension_numbers<[1], [0], [0], [1], [0, 0, 1, 1], [], []>} : vector<128x6xf32>, vector<6x64xf32>, vector<128x64xf32> -> vector<128x64xf32>
    %c0_8 = arith.constant 0 : index
    %c0_9 = arith.constant 0 : index
    %9 = vector.load %arg5[%c0_8, %c0_9] : memref<60x64xf32, #tpu.memory_space<vmem>>, vector<60x64xf32>
    %cst_10 = arith.constant dense<0.000000e+00> : vector<128x64xf32>
    %10 = tpu.matmul %6, %9, %cst_10 {dimension_numbers = #tpu.dot_dimension_numbers<[1], [0], [0], [1], [0, 0, 1, 1], [], []>} : vector<128x60xf32>, vector<60x64xf32>, vector<128x64xf32> -> vector<128x64xf32>
    %11 = arith.addf %8, %10 : vector<128x64xf32>
    %c0_11 = arith.constant 0 : index
    %c0_12 = arith.constant 0 : index
    %12 = vector.load %arg6[%c0_11, %c0_12] : memref<1x64xf32, #tpu.memory_space<vmem>>, vector<1x64xf32>
    %13 = vector.broadcast %12 : vector<1x64xf32> to vector<128x64xf32>
    %14 = arith.addf %11, %13 : vector<128x64xf32>
    %cst_13 = arith.constant 0.000000e+00 : f32
    %15 = vector.broadcast %cst_13 : f32 to vector<128x64xf32>
    %16 = arith.maximumf %14, %15 : vector<128x64xf32>
    %c0_14 = arith.constant 0 : index
    %c0_15 = arith.constant 0 : index
    %17 = vector.load %arg7[%c0_14, %c0_15] : memref<64x64xf32, #tpu.memory_space<vmem>>, vector<64x64xf32>
    %cst_16 = arith.constant dense<0.000000e+00> : vector<128x64xf32>
    %18 = tpu.matmul %16, %17, %cst_16 {dimension_numbers = #tpu.dot_dimension_numbers<[1], [0], [0], [1], [0, 0, 1, 1], [], []>} : vector<128x64xf32>, vector<64x64xf32>, vector<128x64xf32> -> vector<128x64xf32>
    %c0_17 = arith.constant 0 : index
    %c0_18 = arith.constant 0 : index
    %19 = vector.load %arg8[%c0_17, %c0_18] : memref<1x64xf32, #tpu.memory_space<vmem>>, vector<1x64xf32>
    %20 = vector.broadcast %19 : vector<1x64xf32> to vector<128x64xf32>
    %21 = arith.addf %18, %20 : vector<128x64xf32>
    %cst_19 = arith.constant 0.000000e+00 : f32
    %22 = vector.broadcast %cst_19 : f32 to vector<128x64xf32>
    %23 = arith.maximumf %21, %22 : vector<128x64xf32>
    %c0_20 = arith.constant 0 : index
    %c0_21 = arith.constant 0 : index
    %24 = vector.load %arg9[%c0_20, %c0_21] : memref<64x64xf32, #tpu.memory_space<vmem>>, vector<64x64xf32>
    %cst_22 = arith.constant dense<0.000000e+00> : vector<128x64xf32>
    %25 = tpu.matmul %23, %24, %cst_22 {dimension_numbers = #tpu.dot_dimension_numbers<[1], [0], [0], [1], [0, 0, 1, 1], [], []>} : vector<128x64xf32>, vector<64x64xf32>, vector<128x64xf32> -> vector<128x64xf32>
    %c0_23 = arith.constant 0 : index
    %c0_24 = arith.constant 0 : index
    %26 = vector.load %arg10[%c0_23, %c0_24] : memref<1x64xf32, #tpu.memory_space<vmem>>, vector<1x64xf32>
    %27 = vector.broadcast %26 : vector<1x64xf32> to vector<128x64xf32>
    %28 = arith.addf %25, %27 : vector<128x64xf32>
    %cst_25 = arith.constant 0.000000e+00 : f32
    %29 = vector.broadcast %cst_25 : f32 to vector<128x64xf32>
    %30 = arith.maximumf %28, %29 : vector<128x64xf32>
    %c0_26 = arith.constant 0 : index
    %c0_27 = arith.constant 0 : index
    %31 = vector.load %arg11[%c0_26, %c0_27] : memref<64x64xf32, #tpu.memory_space<vmem>>, vector<64x64xf32>
    %cst_28 = arith.constant dense<0.000000e+00> : vector<128x64xf32>
    %32 = tpu.matmul %30, %31, %cst_28 {dimension_numbers = #tpu.dot_dimension_numbers<[1], [0], [0], [1], [0, 0, 1, 1], [], []>} : vector<128x64xf32>, vector<64x64xf32>, vector<128x64xf32> -> vector<128x64xf32>
    %c0_29 = arith.constant 0 : index
    %c0_30 = arith.constant 0 : index
    %33 = vector.load %arg12[%c0_29, %c0_30] : memref<1x64xf32, #tpu.memory_space<vmem>>, vector<1x64xf32>
    %34 = vector.broadcast %33 : vector<1x64xf32> to vector<128x64xf32>
    %35 = arith.addf %32, %34 : vector<128x64xf32>
    %cst_31 = arith.constant 0.000000e+00 : f32
    %36 = vector.broadcast %cst_31 : f32 to vector<128x64xf32>
    %37 = arith.maximumf %35, %36 : vector<128x64xf32>
    %c0_32 = arith.constant 0 : index
    %c0_33 = arith.constant 0 : index
    %38 = vector.load %arg13[%c0_32, %c0_33] : memref<64x64xf32, #tpu.memory_space<vmem>>, vector<64x64xf32>
    %cst_34 = arith.constant dense<0.000000e+00> : vector<128x64xf32>
    %39 = tpu.matmul %37, %38, %cst_34 {dimension_numbers = #tpu.dot_dimension_numbers<[1], [0], [0], [1], [0, 0, 1, 1], [], []>} : vector<128x64xf32>, vector<64x64xf32>, vector<128x64xf32> -> vector<128x64xf32>
    %c0_35 = arith.constant 0 : index
    %c0_36 = arith.constant 0 : index
    %40 = vector.load %arg14[%c0_35, %c0_36] : memref<1x64xf32, #tpu.memory_space<vmem>>, vector<1x64xf32>
    %41 = vector.broadcast %40 : vector<1x64xf32> to vector<128x64xf32>
    %42 = arith.addf %39, %41 : vector<128x64xf32>
    %cst_37 = arith.constant 0.000000e+00 : f32
    %43 = vector.broadcast %cst_37 : f32 to vector<128x64xf32>
    %44 = arith.maximumf %42, %43 : vector<128x64xf32>
    %c0_38 = arith.constant 0 : index
    %c0_39 = arith.constant 0 : index
    %45 = vector.load %arg15[%c0_38, %c0_39] : memref<64x64xf32, #tpu.memory_space<vmem>>, vector<64x64xf32>
    %cst_40 = arith.constant dense<0.000000e+00> : vector<128x64xf32>
    %46 = tpu.matmul %44, %45, %cst_40 {dimension_numbers = #tpu.dot_dimension_numbers<[1], [0], [0], [1], [0, 0, 1, 1], [], []>} : vector<128x64xf32>, vector<64x64xf32>, vector<128x64xf32> -> vector<128x64xf32>
    %c0_41 = arith.constant 0 : index
    %c0_42 = arith.constant 0 : index
    %47 = vector.load %arg16[%c0_41, %c0_42] : memref<6x64xf32, #tpu.memory_space<vmem>>, vector<6x64xf32>
    %cst_43 = arith.constant dense<0.000000e+00> : vector<128x64xf32>
    %48 = tpu.matmul %0, %47, %cst_43 {dimension_numbers = #tpu.dot_dimension_numbers<[1], [0], [0], [1], [0, 0, 1, 1], [], []>} : vector<128x6xf32>, vector<6x64xf32>, vector<128x64xf32> -> vector<128x64xf32>
    %49 = arith.addf %46, %48 : vector<128x64xf32>
    %c0_44 = arith.constant 0 : index
    %c0_45 = arith.constant 0 : index
    %50 = vector.load %arg17[%c0_44, %c0_45] : memref<60x64xf32, #tpu.memory_space<vmem>>, vector<60x64xf32>
    %cst_46 = arith.constant dense<0.000000e+00> : vector<128x64xf32>
    %51 = tpu.matmul %6, %50, %cst_46 {dimension_numbers = #tpu.dot_dimension_numbers<[1], [0], [0], [1], [0, 0, 1, 1], [], []>} : vector<128x60xf32>, vector<60x64xf32>, vector<128x64xf32> -> vector<128x64xf32>
    %52 = arith.addf %49, %51 : vector<128x64xf32>
    %c0_47 = arith.constant 0 : index
    %c0_48 = arith.constant 0 : index
    %53 = vector.load %arg18[%c0_47, %c0_48] : memref<1x64xf32, #tpu.memory_space<vmem>>, vector<1x64xf32>
    %54 = vector.broadcast %53 : vector<1x64xf32> to vector<128x64xf32>
    %55 = arith.addf %52, %54 : vector<128x64xf32>
    %cst_49 = arith.constant 0.000000e+00 : f32
    %56 = vector.broadcast %cst_49 : f32 to vector<128x64xf32>
    %57 = arith.maximumf %55, %56 : vector<128x64xf32>
    %c0_50 = arith.constant 0 : index
    %c0_51 = arith.constant 0 : index
    %58 = vector.load %arg19[%c0_50, %c0_51] : memref<64x64xf32, #tpu.memory_space<vmem>>, vector<64x64xf32>
    %cst_52 = arith.constant dense<0.000000e+00> : vector<128x64xf32>
    %59 = tpu.matmul %57, %58, %cst_52 {dimension_numbers = #tpu.dot_dimension_numbers<[1], [0], [0], [1], [0, 0, 1, 1], [], []>} : vector<128x64xf32>, vector<64x64xf32>, vector<128x64xf32> -> vector<128x64xf32>
    %c0_53 = arith.constant 0 : index
    %c0_54 = arith.constant 0 : index
    %60 = vector.load %arg20[%c0_53, %c0_54] : memref<1x64xf32, #tpu.memory_space<vmem>>, vector<1x64xf32>
    %61 = vector.broadcast %60 : vector<1x64xf32> to vector<128x64xf32>
    %62 = arith.addf %59, %61 : vector<128x64xf32>
    %cst_55 = arith.constant 0.000000e+00 : f32
    %63 = vector.broadcast %cst_55 : f32 to vector<128x64xf32>
    %64 = arith.maximumf %62, %63 : vector<128x64xf32>
    %c0_56 = arith.constant 0 : index
    %c0_57 = arith.constant 0 : index
    %65 = vector.load %arg21[%c0_56, %c0_57] : memref<64x64xf32, #tpu.memory_space<vmem>>, vector<64x64xf32>
    %cst_58 = arith.constant dense<0.000000e+00> : vector<128x64xf32>
    %66 = tpu.matmul %64, %65, %cst_58 {dimension_numbers = #tpu.dot_dimension_numbers<[1], [0], [0], [1], [0, 0, 1, 1], [], []>} : vector<128x64xf32>, vector<64x64xf32>, vector<128x64xf32> -> vector<128x64xf32>
    %c0_59 = arith.constant 0 : index
    %c0_60 = arith.constant 0 : index
    %67 = vector.load %arg22[%c0_59, %c0_60] : memref<1x64xf32, #tpu.memory_space<vmem>>, vector<1x64xf32>
    %68 = vector.broadcast %67 : vector<1x64xf32> to vector<128x64xf32>
    %69 = arith.addf %66, %68 : vector<128x64xf32>
    %cst_61 = arith.constant 0.000000e+00 : f32
    %70 = vector.broadcast %cst_61 : f32 to vector<128x64xf32>
    %71 = arith.maximumf %69, %70 : vector<128x64xf32>
    %c0_62 = arith.constant 0 : index
    %c0_63 = arith.constant 0 : index
    %72 = vector.load %arg24[%c0_62, %c0_63] : memref<64x32xf32, #tpu.memory_space<vmem>>, vector<64x32xf32>
    %cst_64 = arith.constant dense<0.000000e+00> : vector<128x32xf32>
    %73 = tpu.matmul %71, %72, %cst_64 {dimension_numbers = #tpu.dot_dimension_numbers<[1], [0], [0], [1], [0, 0, 1, 1], [], []>} : vector<128x64xf32>, vector<64x32xf32>, vector<128x32xf32> -> vector<128x32xf32>
    %c0_65 = arith.constant 0 : index
    %c0_66 = arith.constant 0 : index
    %74 = vector.load %arg25[%c0_65, %c0_66] : memref<6x32xf32, #tpu.memory_space<vmem>>, vector<6x32xf32>
    %cst_67 = arith.constant dense<0.000000e+00> : vector<128x32xf32>
    %75 = tpu.matmul %0, %74, %cst_67 {dimension_numbers = #tpu.dot_dimension_numbers<[1], [0], [0], [1], [0, 0, 1, 1], [], []>} : vector<128x6xf32>, vector<6x32xf32>, vector<128x32xf32> -> vector<128x32xf32>
    %76 = arith.addf %73, %75 : vector<128x32xf32>
    %c0_68 = arith.constant 0 : index
    %c0_69 = arith.constant 0 : index
    %77 = vector.load %arg26[%c0_68, %c0_69] : memref<60x32xf32, #tpu.memory_space<vmem>>, vector<60x32xf32>
    %cst_70 = arith.constant dense<0.000000e+00> : vector<128x32xf32>
    %78 = tpu.matmul %6, %77, %cst_70 {dimension_numbers = #tpu.dot_dimension_numbers<[1], [0], [0], [1], [0, 0, 1, 1], [], []>} : vector<128x60xf32>, vector<60x32xf32>, vector<128x32xf32> -> vector<128x32xf32>
    %79 = arith.addf %76, %78 : vector<128x32xf32>
    %c0_71 = arith.constant 0 : index
    %c0_72 = arith.constant 0 : index
    %80 = vector.load %arg27[%c0_71, %c0_72] : memref<1x32xf32, #tpu.memory_space<vmem>>, vector<1x32xf32>
    %81 = vector.broadcast %80 : vector<1x32xf32> to vector<128x32xf32>
    %82 = arith.addf %79, %81 : vector<128x32xf32>
    %cst_73 = arith.constant 0.000000e+00 : f32
    %83 = vector.broadcast %cst_73 : f32 to vector<128x32xf32>
    %84 = arith.maximumf %82, %83 : vector<128x32xf32>
    %c0_74 = arith.constant 0 : index
    %c0_75 = arith.constant 0 : index
    %85 = vector.load %arg28[%c0_74, %c0_75] : memref<32x4xf32, #tpu.memory_space<vmem>>, vector<32x4xf32>
    %cst_76 = arith.constant dense<0.000000e+00> : vector<128x4xf32>
    %86 = tpu.matmul %84, %85, %cst_76 {dimension_numbers = #tpu.dot_dimension_numbers<[1], [0], [0], [1], [0, 0, 1, 1], [], []>} : vector<128x32xf32>, vector<32x4xf32>, vector<128x4xf32> -> vector<128x4xf32>
    %c0_77 = arith.constant 0 : index
    %c0_78 = arith.constant 0 : index
    %87 = vector.load %arg23[%c0_77, %c0_78] : memref<64x4xf32, #tpu.memory_space<vmem>>, vector<64x4xf32>
    %cst_79 = arith.constant dense<0.000000e+00> : vector<128x4xf32>
    %88 = tpu.matmul %71, %87, %cst_79 {dimension_numbers = #tpu.dot_dimension_numbers<[1], [0], [0], [1], [0, 0, 1, 1], [], []>} : vector<128x64xf32>, vector<64x4xf32>, vector<128x4xf32> -> vector<128x4xf32>
    %89 = arith.addf %86, %88 : vector<128x4xf32>
    %c0_80 = arith.constant 0 : index
    %c0_81 = arith.constant 0 : index
    %90 = vector.load %arg29[%c0_80, %c0_81] : memref<1x4xf32, #tpu.memory_space<vmem>>, vector<1x4xf32>
    %91 = vector.broadcast %90 : vector<1x4xf32> to vector<128x4xf32>
    %92 = arith.addf %89, %91 : vector<128x4xf32>
    %c0_82 = arith.constant 0 : index
    %c0_83 = arith.constant 0 : index
    %93 = vector.load %arg30[%c0_82, %c0_83] : memref<128x4xf32, #tpu.memory_space<vmem>>, vector<128x4xf32>
    tpu.vector_store %arg30[%c0_82, %c0_83], %92 {strides = array<i32>} : memref<128x4xf32, #tpu.memory_space<vmem>>, vector<128x4xf32>,
    return
  }
  func.func @transform_0(%arg0: i32) -> (i32, i32) {
    %c0_i32 = arith.constant 0 : i32
    %c0_i32_0 = arith.constant 0 : i32
    return %arg0, %c0_i32 : i32, i32
  }
  func.func @transform_1(%arg0: i32) -> (i32, i32) {
    %c0_i32 = arith.constant 0 : i32
    %c0_i32_0 = arith.constant 0 : i32
    %c0_i32_1 = arith.constant 0 : i32
    return %c0_i32, %c0_i32_0 : i32, i32
  }
  func.func @transform_2(%arg0: i32) -> (i32, i32) {
    %c0_i32 = arith.constant 0 : i32
    %c0_i32_0 = arith.constant 0 : i32
    %c0_i32_1 = arith.constant 0 : i32
    return %c0_i32, %c0_i32_0 : i32, i32
  }
  func.func @transform_3(%arg0: i32) -> (i32, i32) {
    %c0_i32 = arith.constant 0 : i32
    %c0_i32_0 = arith.constant 0 : i32
    %c0_i32_1 = arith.constant 0 : i32
    return %c0_i32, %c0_i32_0 : i32, i32
  }
  func.func @transform_4(%arg0: i32) -> (i32, i32) {
    %c0_i32 = arith.constant 0 : i32
    %c0_i32_0 = arith.constant 0 : i32
    %c0_i32_1 = arith.constant 0 : i32
    return %c0_i32, %c0_i32_0 : i32, i32
  }
  func.func @transform_5(%arg0: i32) -> (i32, i32) {
    %c0_i32 = arith.constant 0 : i32
    %c0_i32_0 = arith.constant 0 : i32
    %c0_i32_1 = arith.constant 0 : i32
    return %c0_i32, %c0_i32_0 : i32, i32
  }
  func.func @transform_6(%arg0: i32) -> (i32, i32) {
    %c0_i32 = arith.constant 0 : i32
    %c0_i32_0 = arith.constant 0 : i32
    %c0_i32_1 = arith.constant 0 : i32
    return %c0_i32, %c0_i32_0 : i32, i32
  }
  func.func @transform_7(%arg0: i32) -> (i32, i32) {
    %c0_i32 = arith.constant 0 : i32
    %c0_i32_0 = arith.constant 0 : i32
    %c0_i32_1 = arith.constant 0 : i32
    return %c0_i32, %c0_i32_0 : i32, i32
  }
  func.func @transform_8(%arg0: i32) -> (i32, i32) {
    %c0_i32 = arith.constant 0 : i32
    %c0_i32_0 = arith.constant 0 : i32
    %c0_i32_1 = arith.constant 0 : i32
    return %c0_i32, %c0_i32_0 : i32, i32
  }
  func.func @transform_9(%arg0: i32) -> (i32, i32) {
    %c0_i32 = arith.constant 0 : i32
    %c0_i32_0 = arith.constant 0 : i32
    %c0_i32_1 = arith.constant 0 : i32
    return %c0_i32, %c0_i32_0 : i32, i32
  }
  func.func @transform_10(%arg0: i32) -> (i32, i32) {
    %c0_i32 = arith.constant 0 : i32
    %c0_i32_0 = arith.constant 0 : i32
    %c0_i32_1 = arith.constant 0 : i32
    return %c0_i32, %c0_i32_0 : i32, i32
  }
  func.func @transform_11(%arg0: i32) -> (i32, i32) {
    %c0_i32 = arith.constant 0 : i32
    %c0_i32_0 = arith.constant 0 : i32
    %c0_i32_1 = arith.constant 0 : i32
    return %c0_i32, %c0_i32_0 : i32, i32
  }
  func.func @transform_12(%arg0: i32) -> (i32, i32) {
    %c0_i32 = arith.constant 0 : i32
    %c0_i32_0 = arith.constant 0 : i32
    %c0_i32_1 = arith.constant 0 : i32
    return %c0_i32, %c0_i32_0 : i32, i32
  }
  func.func @transform_13(%arg0: i32) -> (i32, i32) {
    %c0_i32 = arith.constant 0 : i32
    %c0_i32_0 = arith.constant 0 : i32
    %c0_i32_1 = arith.constant 0 : i32
    return %c0_i32, %c0_i32_0 : i32, i32
  }
  func.func @transform_14(%arg0: i32) -> (i32, i32) {
    %c0_i32 = arith.constant 0 : i32
    %c0_i32_0 = arith.constant 0 : i32
    %c0_i32_1 = arith.constant 0 : i32
    return %c0_i32, %c0_i32_0 : i32, i32
  }
  func.func @transform_15(%arg0: i32) -> (i32, i32) {
    %c0_i32 = arith.constant 0 : i32
    %c0_i32_0 = arith.constant 0 : i32
    %c0_i32_1 = arith.constant 0 : i32
    return %c0_i32, %c0_i32_0 : i32, i32
  }
  func.func @transform_16(%arg0: i32) -> (i32, i32) {
    %c0_i32 = arith.constant 0 : i32
    %c0_i32_0 = arith.constant 0 : i32
    %c0_i32_1 = arith.constant 0 : i32
    return %c0_i32, %c0_i32_0 : i32, i32
  }
  func.func @transform_17(%arg0: i32) -> (i32, i32) {
    %c0_i32 = arith.constant 0 : i32
    %c0_i32_0 = arith.constant 0 : i32
    %c0_i32_1 = arith.constant 0 : i32
    return %c0_i32, %c0_i32_0 : i32, i32
  }
  func.func @transform_18(%arg0: i32) -> (i32, i32) {
    %c0_i32 = arith.constant 0 : i32
    %c0_i32_0 = arith.constant 0 : i32
    %c0_i32_1 = arith.constant 0 : i32
    return %c0_i32, %c0_i32_0 : i32, i32
  }
  func.func @transform_19(%arg0: i32) -> (i32, i32) {
    %c0_i32 = arith.constant 0 : i32
    %c0_i32_0 = arith.constant 0 : i32
    %c0_i32_1 = arith.constant 0 : i32
    return %c0_i32, %c0_i32_0 : i32, i32
  }
  func.func @transform_20(%arg0: i32) -> (i32, i32) {
    %c0_i32 = arith.constant 0 : i32
    %c0_i32_0 = arith.constant 0 : i32
    %c0_i32_1 = arith.constant 0 : i32
    return %c0_i32, %c0_i32_0 : i32, i32
  }
  func.func @transform_21(%arg0: i32) -> (i32, i32) {
    %c0_i32 = arith.constant 0 : i32
    %c0_i32_0 = arith.constant 0 : i32
    %c0_i32_1 = arith.constant 0 : i32
    return %c0_i32, %c0_i32_0 : i32, i32
  }
  func.func @transform_22(%arg0: i32) -> (i32, i32) {
    %c0_i32 = arith.constant 0 : i32
    %c0_i32_0 = arith.constant 0 : i32
    %c0_i32_1 = arith.constant 0 : i32
    return %c0_i32, %c0_i32_0 : i32, i32
  }
  func.func @transform_23(%arg0: i32) -> (i32, i32) {
    %c0_i32 = arith.constant 0 : i32
    %c0_i32_0 = arith.constant 0 : i32
    %c0_i32_1 = arith.constant 0 : i32
    return %c0_i32, %c0_i32_0 : i32, i32
  }
  func.func @transform_24(%arg0: i32) -> (i32, i32) {
    %c0_i32 = arith.constant 0 : i32
    %c0_i32_0 = arith.constant 0 : i32
    %c0_i32_1 = arith.constant 0 : i32
    return %c0_i32, %c0_i32_0 : i32, i32
  }
  func.func @transform_25(%arg0: i32) -> (i32, i32) {
    %c0_i32 = arith.constant 0 : i32
    %c0_i32_0 = arith.constant 0 : i32
    %c0_i32_1 = arith.constant 0 : i32
    return %c0_i32, %c0_i32_0 : i32, i32
  }
  func.func @transform_26(%arg0: i32) -> (i32, i32) {
    %c0_i32 = arith.constant 0 : i32
    %c0_i32_0 = arith.constant 0 : i32
    %c0_i32_1 = arith.constant 0 : i32
    return %c0_i32, %c0_i32_0 : i32, i32
  }
  func.func @transform_27(%arg0: i32) -> (i32, i32) {
    %c0_i32 = arith.constant 0 : i32
    %c0_i32_0 = arith.constant 0 : i32
    %c0_i32_1 = arith.constant 0 : i32
    return %c0_i32, %c0_i32_0 : i32, i32
  }
  func.func @transform_28(%arg0: i32) -> (i32, i32) {
    %c0_i32 = arith.constant 0 : i32
    %c0_i32_0 = arith.constant 0 : i32
    %c0_i32_1 = arith.constant 0 : i32
    return %c0_i32, %c0_i32_0 : i32, i32
  }
  func.func @transform_29(%arg0: i32) -> (i32, i32) {
    %c0_i32 = arith.constant 0 : i32
    %c0_i32_0 = arith.constant 0 : i32
    return %arg0, %c0_i32 : i32, i32
  }
}

</mosaic_0001>

<llo_original>
// kernel: tpu_custom_call.1
$region0: #{tpu_custom_call.1}
  #allocation0 [shape = 'u32[]', space=smem, size = 0x4, offset = 0x4, fixed_abs, tag = 'smem constant byte address 0x4 - core index']
  #allocation1 [shape = 'u32[72,128]{1,0:T(1,128)}', space=vmem, size = 0x9000, scoped, tag = 'internal scratch']
  %s0 = inlined_call_operand.smem [shape: u32[30], index: -1, kind: input, shape index: {}]
  %s1 = sld [smem:[%s0]]
  %s2 = scalar_lea.smem %s0, 1
  %s3 = sld [smem:[%s2]]
  %s4 = scalar_lea.smem %s0, 2
  %s5 = sld [smem:[%s4]]
  %s6 = scalar_lea.smem %s0, 3
  %s7 = sld [smem:[%s6]]
  %s8 = scalar_lea.smem %s0, 4
  %s9 = sld [smem:[%s8]]
  %s10 = scalar_lea.smem %s0, 5
  %s11 = sld [smem:[%s10]]
  %s12 = scalar_lea.smem %s0, 6
  %s13 = sld [smem:[%s12]]
  %s14 = scalar_lea.smem %s0, 7
  %s15 = sld [smem:[%s14]]
  %s16 = scalar_lea.smem %s0, 8
  %s17 = sld [smem:[%s16]]
  %s18 = scalar_lea.smem %s0, 9
  %s19 = sld [smem:[%s18]]
  %s20 = scalar_lea.smem %s0, 10
  %s21 = sld [smem:[%s20]]
  %s22 = scalar_lea.smem %s0, 11
  %s23 = sld [smem:[%s22]]
  %s24 = scalar_lea.smem %s0, 12
  %s25 = sld [smem:[%s24]]
  %s26 = scalar_lea.smem %s0, 13
  %s27 = sld [smem:[%s26]]
  %s28 = scalar_lea.smem %s0, 14
  %s29 = sld [smem:[%s28]]
  %s30 = scalar_lea.smem %s0, 15
  %s31 = sld [smem:[%s30]]
  %s32 = scalar_lea.smem %s0, 16
  %s33 = sld [smem:[%s32]]
  %s34 = scalar_lea.smem %s0, 17
  %s35 = sld [smem:[%s34]]
  %s36 = scalar_lea.smem %s0, 18
  %s37 = sld [smem:[%s36]]
  %s38 = scalar_lea.smem %s0, 19
  %s39 = sld [smem:[%s38]]
  %s40 = scalar_lea.smem %s0, 20
  %s41 = sld [smem:[%s40]]
  %s42 = scalar_lea.smem %s0, 21
  %s43 = sld [smem:[%s42]]
  %s44 = scalar_lea.smem %s0, 22
  %s45 = sld [smem:[%s44]]
  %s46 = scalar_lea.smem %s0, 23
  %s47 = sld [smem:[%s46]]
  %s48 = scalar_lea.smem %s0, 24
  %s49 = sld [smem:[%s48]]
  %s50 = scalar_lea.smem %s0, 25
  %s51 = sld [smem:[%s50]]
  %s52 = scalar_lea.smem %s0, 26
  %s53 = sld [smem:[%s52]]
  %s54 = scalar_lea.smem %s0, 27
  %s55 = sld [smem:[%s54]]
  %s56 = scalar_lea.smem %s0, 28
  %s57 = sld [smem:[%s56]]
  %s58 = scalar_lea.smem %s0, 29
  %s59 = sld [smem:[%s58]]
  %s60 = sld [smem:[#allocation0]]
  $region142: #{tpu_custom_call.1} parent=0
    _
  %s62 = ssub.s32 1, %s60
  %s63 = scalar_select 0, %s62, %s60
  $region1: #{tpu_custom_call.1} parent=0
    #allocation2 [shape = 'u8[32768]{0}', space=vmem, size = 0x8000, scoped, tag = 'input window, operand 14, single buffered']
    #allocation3 [shape = 's32[1]{0}', space=sflag, size = 0x4, scoped, tag = 'scoped memory for tpu_custom_call.1']
    #allocation4 [shape = 'u8[32768]{0}', space=vmem, size = 0x8000, scoped, tag = 'input window, operand 16, single buffered']
    #allocation5 [shape = 's32[1]{0}', space=sflag, size = 0x4, scoped, tag = 'scoped memory for tpu_custom_call.1']
    #allocation6 [shape = 'u8[32768]{0}', space=vmem, size = 0x8000, scoped, tag = 'input window, operand 18, single buffered']
    #allocation7 [shape = 'u8[32768]{0}', space=vmem, size = 0x8000, scoped, tag = 'input window, operand 20, single buffered']
    #allocation8 [shape = 's32[1]{0}', space=sflag, size = 0x4, scoped, tag = 'scoped memory for tpu_custom_call.1']
    %64 = vsyncpa [#allocation3], 0
    %65 = vsyncpa [#allocation5], 0
    %66 = vsyncpa [#allocation8], 0
    // Predicated region
    $region2: #{tpu_custom_call.1} parent=1 // pred_check
      _
    $region3: #{tpu_custom_call.1} parent=1 // pred_check_branch
      %68 = sbr.rel (0) target = $region5
    $region4: #{tpu_custom_call.1} parent=1 // pred_region
      _
    $region5: #{tpu_custom_call.1} parent=1 // pred_fallthru
      _
    // Predicated region
    $region6: #{tpu_custom_call.1} parent=1 // pred_check
      _
    $region7: #{tpu_custom_call.1} parent=1 // pred_check_branch
      %70 = sbr.rel (0) target = $region9
    $region8: #{tpu_custom_call.1} parent=1 // pred_region
      _
    $region9: #{tpu_custom_call.1} parent=1 // pred_fallthru
      _
    // Predicated region
    $region10: #{tpu_custom_call.1} parent=1 // pred_check
      _
    $region11: #{tpu_custom_call.1} parent=1 // pred_check_branch
      %72 = sbr.rel (0) target = $region13
    $region12: #{tpu_custom_call.1} parent=1 // pred_region
      _
    $region13: #{tpu_custom_call.1} parent=1 // pred_fallthru
      _
    // Predicated region
    $region14: #{tpu_custom_call.1} parent=1 // pred_check
      _
    $region15: #{tpu_custom_call.1} parent=1 // pred_check_branch
      %74 = sbr.rel (0) target = $region17
    $region16: #{tpu_custom_call.1} parent=1 // pred_region
      _
    $region17: #{tpu_custom_call.1} parent=1 // pred_fallthru
      _
    // Predicated region
    $region18: #{tpu_custom_call.1} parent=1 // pred_check
      _
    $region19: #{tpu_custom_call.1} parent=1 // pred_check_branch
      %76 = sbr.rel (0) target = $region21
    $region20: #{tpu_custom_call.1} parent=1 // pred_region
      _
    $region21: #{tpu_custom_call.1} parent=1 // pred_fallthru
      _
    // Predicated region
    $region22: #{tpu_custom_call.1} parent=1 // pred_check
      _
    $region23: #{tpu_custom_call.1} parent=1 // pred_check_branch
      %78 = sbr.rel (0) target = $region25
    $region24: #{tpu_custom_call.1} parent=1 // pred_region
      _
    $region25: #{tpu_custom_call.1} parent=1 // pred_fallthru
      _
    // Predicated region
    $region26: #{tpu_custom_call.1} parent=1 // pred_check
      _
    $region27: #{tpu_custom_call.1} parent=1 // pred_check_branch
      %80 = sbr.rel (0) target = $region29
    $region28: #{tpu_custom_call.1} parent=1 // pred_region
      _
    $region29: #{tpu_custom_call.1} parent=1 // pred_fallthru
      _
    // Predicated region
    $region30: #{tpu_custom_call.1} parent=1 // pred_check
      _
    $region31: #{tpu_custom_call.1} parent=1 // pred_check_branch
      %82 = sbr.rel (0) target = $region33
    $region32: #{tpu_custom_call.1} parent=1 // pred_region
      _
    $region33: #{tpu_custom_call.1} parent=1 // pred_fallthru
      _
    // Predicated region
    $region34: #{tpu_custom_call.1} parent=1 // pred_check
      _
    $region35: #{tpu_custom_call.1} parent=1 // pred_check_branch
      %84 = sbr.rel (0) target = $region37
    $region36: #{tpu_custom_call.1} parent=1 // pred_region
      _
    $region37: #{tpu_custom_call.1} parent=1 // pred_fallthru
      _
    // Predicated region
    $region38: #{tpu_custom_call.1} parent=1 // pred_check
      _
    $region39: #{tpu_custom_call.1} parent=1 // pred_check_branch
      %86 = sbr.rel (0) target = $region41
    $region40: #{tpu_custom_call.1} parent=1 // pred_region
      _
    $region41: #{tpu_custom_call.1} parent=1 // pred_fallthru
      _
    // Predicated region
    $region42: #{tpu_custom_call.1} parent=1 // pred_check
      _
    $region43: #{tpu_custom_call.1} parent=1 // pred_check_branch
      %88 = sbr.rel (0) target = $region45
    $region44: #{tpu_custom_call.1} parent=1 // pred_region
      _
    $region45: #{tpu_custom_call.1} parent=1 // pred_fallthru
      _
    // Predicated region
    $region46: #{tpu_custom_call.1} parent=1 // pred_check
      _
    $region47: #{tpu_custom_call.1} parent=1 // pred_check_branch
      %90 = sbr.rel (0) target = $region49
    $region48: #{tpu_custom_call.1} parent=1 // pred_region
      _
    $region49: #{tpu_custom_call.1} parent=1 // pred_fallthru
      _
    // Predicated region
    $region50: #{tpu_custom_call.1} parent=1 // pred_check
      _
    $region51: #{tpu_custom_call.1} parent=1 // pred_check_branch
      %92 = sbr.rel (0) target = $region53
    $region52: #{tpu_custom_call.1} parent=1 // pred_region
      _
    $region53: #{tpu_custom_call.1} parent=1 // pred_fallthru
      _
    // Predicated region
    $region54: #{tpu_custom_call.1} parent=1 // pred_check
      _
    $region55: #{tpu_custom_call.1} parent=1 // pred_check_branch
      %94 = sbr.rel (0) target = $region57
    $region56: #{tpu_custom_call.1} parent=1 // pred_region
      _
    $region57: #{tpu_custom_call.1} parent=1 // pred_fallthru
      _
    // Predicated region
    $region58: #{tpu_custom_call.1} parent=1 // pred_check
      _
    $region59: #{tpu_custom_call.1} parent=1 // pred_check_branch
      %96 = sbr.rel (0) target = $region61
    $region60: #{tpu_custom_call.1} parent=1 // pred_region
      %98 = vsyncadd [#allocation3], 0
      %s99 = sshll.u32 %s29, 4
      %s100 = int_to_ptr.hbm [resolvable:$true] %s99
      %s101 = sshll.u32 [#allocation2], 4
      %s102 = int_to_ptr.vmem [resolvable:$true] %s101
      %107 = dma.hbm_to_vmem [thread:$0]  %s100, 1024, %s102, [#allocation3], 128, 128, 8
    $region61: #{tpu_custom_call.1} parent=1 // pred_fallthru
      _
    // Predicated region
    $region62: #{tpu_custom_call.1} parent=1 // pred_check
      _
    $region63: #{tpu_custom_call.1} parent=1 // pred_check_branch
      %109 = sbr.rel (0) target = $region65
    $region64: #{tpu_custom_call.1} parent=1 // pred_region
      _
    $region65: #{tpu_custom_call.1} parent=1 // pred_fallthru
      _
    // Predicated region
    $region66: #{tpu_custom_call.1} parent=1 // pred_check
      _
    $region67: #{tpu_custom_call.1} parent=1 // pred_check_branch
      %111 = sbr.rel (0) target = $region69
    $region68: #{tpu_custom_call.1} parent=1 // pred_region
      %113 = vsyncadd [#allocation5], 0
      %s114 = sshll.u32 %s33, 4
      %s115 = int_to_ptr.hbm [resolvable:$true] %s114
      %s116 = sshll.u32 [#allocation4], 4
      %s117 = int_to_ptr.vmem [resolvable:$true] %s116
      %122 = dma.hbm_to_vmem [thread:$0]  %s115, 1024, %s117, [#allocation5], 128, 128, 8
    $region69: #{tpu_custom_call.1} parent=1 // pred_fallthru
      _
    // Predicated region
    $region70: #{tpu_custom_call.1} parent=1 // pred_check
      _
    $region71: #{tpu_custom_call.1} parent=1 // pred_check_branch
      %124 = sbr.rel (0) target = $region73
    $region72: #{tpu_custom_call.1} parent=1 // pred_region
      _
    $region73: #{tpu_custom_call.1} parent=1 // pred_fallthru
      _
    // Predicated region
    $region74: #{tpu_custom_call.1} parent=1 // pred_check
      _
    $region75: #{tpu_custom_call.1} parent=1 // pred_check_branch
      %126 = sbr.rel (0) target = $region77
    $region76: #{tpu_custom_call.1} parent=1 // pred_region
      %128 = vsyncadd [#allocation5], 0
      %s129 = sshll.u32 %s37, 4
      %s130 = int_to_ptr.hbm [resolvable:$true] %s129
      %s131 = sshll.u32 [#allocation6], 4
      %s132 = int_to_ptr.vmem [resolvable:$true] %s131
      %137 = dma.hbm_to_vmem [thread:$0]  %s130, 1024, %s132, [#allocation5], 128, 128, 8
    $region77: #{tpu_custom_call.1} parent=1 // pred_fallthru
      _
    // Predicated region
    $region78: #{tpu_custom_call.1} parent=1 // pred_check
      _
    $region79: #{tpu_custom_call.1} parent=1 // pred_check_branch
      %139 = sbr.rel (0) target = $region81
    $region80: #{tpu_custom_call.1} parent=1 // pred_region
      _
    $region81: #{tpu_custom_call.1} parent=1 // pred_fallthru
      _
    // Predicated region
    $region82: #{tpu_custom_call.1} parent=1 // pred_check
      _
    $region83: #{tpu_custom_call.1} parent=1 // pred_check_branch
      %141 = sbr.rel (0) target = $region85
    $region84: #{tpu_custom_call.1} parent=1 // pred_region
      %143 = vsyncadd [#allocation8], 0
      %s144 = sshll.u32 %s41, 4
      %s145 = int_to_ptr.hbm [resolvable:$true] %s144
      %s146 = sshll.u32 [#allocation7], 4
      %s147 = int_to_ptr.vmem [resolvable:$true] %s146
      %152 = dma.hbm_to_vmem [thread:$0]  %s145, 1024, %s147, [#allocation8], 128, 128, 8
    $region85: #{tpu_custom_call.1} parent=1 // pred_fallthru
      _
    // Predicated region
    $region86: #{tpu_custom_call.1} parent=1 // pred_check
      _
    $region87: #{tpu_custom_call.1} parent=1 // pred_check_branch
      %154 = sbr.rel (0) target = $region89
    $region88: #{tpu_custom_call.1} parent=1 // pred_region
      _
    $region89: #{tpu_custom_call.1} parent=1 // pred_fallthru
      _
    // Predicated region
    $region90: #{tpu_custom_call.1} parent=1 // pred_check
      _
    $region91: #{tpu_custom_call.1} parent=1 // pred_check_branch
      %156 = sbr.rel (0) target = $region93
    $region92: #{tpu_custom_call.1} parent=1 // pred_region
      _
    $region93: #{tpu_custom_call.1} parent=1 // pred_fallthru
      _
    // Predicated region
    $region94: #{tpu_custom_call.1} parent=1 // pred_check
      _
    $region95: #{tpu_custom_call.1} parent=1 // pred_check_branch
      %158 = sbr.rel (0) target = $region97
    $region96: #{tpu_custom_call.1} parent=1 // pred_region
      _
    $region97: #{tpu_custom_call.1} parent=1 // pred_fallthru
      _
    // Predicated region
    $region98: #{tpu_custom_call.1} parent=1 // pred_check
      _
    $region99: #{tpu_custom_call.1} parent=1 // pred_check_branch
      %160 = sbr.rel (0) target = $region101
    $region100: #{tpu_custom_call.1} parent=1 // pred_region
      _
    $region101: #{tpu_custom_call.1} parent=1 // pred_fallthru
      _
    // Predicated region
    $region102: #{tpu_custom_call.1} parent=1 // pred_check
      _
    $region103: #{tpu_custom_call.1} parent=1 // pred_check_branch
      %162 = sbr.rel (0) target = $region105
    $region104: #{tpu_custom_call.1} parent=1 // pred_region
      _
    $region105: #{tpu_custom_call.1} parent=1 // pred_fallthru
      _
    // Predicated region
    $region106: #{tpu_custom_call.1} parent=1 // pred_check
      _
    $region107: #{tpu_custom_call.1} parent=1 // pred_check_branch
      %164 = sbr.rel (0) target = $region109
    $region108: #{tpu_custom_call.1} parent=1 // pred_region
      _
    $region109: #{tpu_custom_call.1} parent=1 // pred_fallthru
      _
    // Predicated region
    $region110: #{tpu_custom_call.1} parent=1 // pred_check
      _
    $region111: #{tpu_custom_call.1} parent=1 // pred_check_branch
      %166 = sbr.rel (0) target = $region113
    $region112: #{tpu_custom_call.1} parent=1 // pred_region
      _
    $region113: #{tpu_custom_call.1} parent=1 // pred_fallthru
      _
    // Predicated region
    $region114: #{tpu_custom_call.1} parent=1 // pred_check
      _
    $region115: #{tpu_custom_call.1} parent=1 // pred_check_branch
      %168 = sbr.rel (0) target = $region117
    $region116: #{tpu_custom_call.1} parent=1 // pred_region
      _
    $region117: #{tpu_custom_call.1} parent=1 // pred_fallthru
      _
    // Predicated region
    $region118: #{tpu_custom_call.1} parent=1 // pred_check
      _
    $region119: #{tpu_custom_call.1} parent=1 // pred_check_branch
      %170 = sbr.rel (0) target = $region121
    $region120: #{tpu_custom_call.1} parent=1 // pred_region
      %172 = dma.done [#allocation3], 1024
    $region121: #{tpu_custom_call.1} parent=1 // pred_fallthru
      _
    // Predicated region
    $region122: #{tpu_custom_call.1} parent=1 // pred_check
      _
    $region123: #{tpu_custom_call.1} parent=1 // pred_check_branch
      %174 = sbr.rel (0) target = $region125
    $region124: #{tpu_custom_call.1} parent=1 // pred_region
      %176 = dma.done [#allocation5], 1024
    $region125: #{tpu_custom_call.1} parent=1 // pred_fallthru
      _
    // Predicated region
    $region126: #{tpu_custom_call.1} parent=1 // pred_check
      _
    $region127: #{tpu_custom_call.1} parent=1 // pred_check_branch
      %178 = sbr.rel (0) target = $region129
    $region128: #{tpu_custom_call.1} parent=1 // pred_region
      %180 = dma.done [#allocation5], 1024
    $region129: #{tpu_custom_call.1} parent=1 // pred_fallthru
      _
    // Predicated region
    $region130: #{tpu_custom_call.1} parent=1 // pred_check
      _
    $region131: #{tpu_custom_call.1} parent=1 // pred_check_branch
      %182 = sbr.rel (0) target = $region133
    $region132: #{tpu_custom_call.1} parent=1 // pred_region
      %184 = dma.done [#allocation8], 1024
    $region133: #{tpu_custom_call.1} parent=1 // pred_fallthru
      _
    %v185 = vld [vmem:[%s1] sm:$0xff]
    %v186 = vld [vmem:[%s1 + $0x8] sm:$0xff]
    %v187 = vld [vmem:[%s1 + $0x10] sm:$0xff]
    %v188 = vld [vmem:[%s1 + $0x18] sm:$0xff]
    %v189 = vld [vmem:[%s1 + $0x20] sm:$0xff]
    %v190 = vld [vmem:[%s1 + $0x28] sm:$0xff]
    %v191 = vld [vmem:[%s1 + $0x30] sm:$0xff]
    %v192 = vld [vmem:[%s1 + $0x38] sm:$0xff]
    %v193 = vld [vmem:[%s1 + $0x40] sm:$0xff]
    %v194 = vld [vmem:[%s1 + $0x48] sm:$0xff]
    %v195 = vld [vmem:[%s1 + $0x50] sm:$0xff]
    %v196 = vld [vmem:[%s1 + $0x58] sm:$0xff]
    %v197 = vld [vmem:[%s1 + $0x60] sm:$0xff]
    %v198 = vld [vmem:[%s1 + $0x68] sm:$0xff]
    %v199 = vld [vmem:[%s1 + $0x70] sm:$0xff]
    %v200 = vld [vmem:[%s1 + $0x78] sm:$0xff]
    %v201 = vld [vmem:[%s3] sm:$0x3f]
    %v202 = vld [vmem:[%s5] sm:$0x1]
    %v204 = vperm.slane %v202, 0
    %vm206 = vcmask 48128
    %v208 = vsel %vm206, %v185, 0
    %v211 = vsel %vm206, %v186, 0
    %v214 = vsel %vm206, %v187, 0
    %v217 = vsel %vm206, %v188, 0
    %v220 = vsel %vm206, %v189, 0
    %v223 = vsel %vm206, %v190, 0
    %v226 = vsel %vm206, %v191, 0
    %v229 = vsel %vm206, %v192, 0
    %v232 = vsel %vm206, %v193, 0
    %v235 = vsel %vm206, %v194, 0
    %v238 = vsel %vm206, %v195, 0
    %v241 = vsel %vm206, %v196, 0
    %v244 = vsel %vm206, %v197, 0
    %v247 = vsel %vm206, %v198, 0
    %v250 = vsel %vm206, %v199, 0
    %v253 = vsel %vm206, %v200, 0
    %vm255 = vcmask 1045504
    %v257 = vsel %vm255, %v201, 0
    %259 = vmatpush.msra.mxu0 0.0
    %260 = vmatpush.msra.mxu0 0.0
    %261 = vmatpush.msra.mxu0 0.0
    %262 = vmatpush.msra.mxu0 0.0
    %263 = vmatpush.msra.mxu0 0.0
    %264 = vmatpush.msra.mxu0 0.0
    %265 = vmatpush.msra.mxu0 0.0
    %266 = vmatpush.msra.mxu0 0.0
    %267 = vmatpush.msra.mxu0 0.0
    %268 = vmatpush.msra.mxu0 0.0
    %269 = vmatpush.msra.mxu0 0.0
    %270 = vmatpush.msra.mxu0 0.0
    %271 = vmatpush.msra.mxu0 0.0
    %272 = vmatpush.msra.mxu0 0.0
    %273 = vmatpush.msra.mxu0 0.0
    %274 = vmatpush.msra.mxu0 %v257
    %275 = vmatmul.f32.gmra.mxu0 %v208
    %v276 = vpop.f32.mrf.mxu0
    %v277 = vadd.f32 %v204, %v276
    %278 = vmatmul.f32.gmra.mxu0 %v211
    %v279 = vpop.f32.mrf.mxu0
    %v280 = vadd.f32 %v204, %v279
    %281 = vmatmul.f32.gmra.mxu0 %v214
    %v282 = vpop.f32.mrf.mxu0
    %v283 = vadd.f32 %v204, %v282
    %284 = vmatmul.f32.gmra.mxu0 %v217
    %v285 = vpop.f32.mrf.mxu0
    %v286 = vadd.f32 %v204, %v285
    %287 = vmatmul.f32.gmra.mxu0 %v220
    %v288 = vpop.f32.mrf.mxu0
    %v289 = vadd.f32 %v204, %v288
    %290 = vmatmul.f32.gmra.mxu0 %v223
    %v291 = vpop.f32.mrf.mxu0
    %v292 = vadd.f32 %v204, %v291
    %293 = vmatmul.f32.gmra.mxu0 %v226
    %v294 = vpop.f32.mrf.mxu0
    %v295 = vadd.f32 %v204, %v294
    %296 = vmatmul.f32.gmra.mxu0 %v229
    %v297 = vpop.f32.mrf.mxu0
    %v298 = vadd.f32 %v204, %v297
    %299 = vmatmul.f32.gmra.mxu0 %v232
    %v300 = vpop.f32.mrf.mxu0
    %v301 = vadd.f32 %v204, %v300
    %302 = vmatmul.f32.gmra.mxu0 %v235
    %v303 = vpop.f32.mrf.mxu0
    %v304 = vadd.f32 %v204, %v303
    %305 = vmatmul.f32.gmra.mxu0 %v238
    %v306 = vpop.f32.mrf.mxu0
    %v307 = vadd.f32 %v204, %v306
    %308 = vmatmul.f32.gmra.mxu0 %v241
    %v309 = vpop.f32.mrf.mxu0
    %v310 = vadd.f32 %v204, %v309
    %311 = vmatmul.f32.gmra.mxu0 %v244
    %v312 = vpop.f32.mrf.mxu0
    %v313 = vadd.f32 %v204, %v312
    %314 = vmatmul.f32.gmra.mxu0 %v247
    %v315 = vpop.f32.mrf.mxu0
    %v316 = vadd.f32 %v204, %v315
    %317 = vmatmul.f32.gmra.mxu0 %v250
    %v318 = vpop.f32.mrf.mxu0
    %v319 = vadd.f32 %v204, %v318
    %320 = vmatmul.f32.gmra.mxu0 %v253
    %v321 = vpop.f32.mrf.mxu0
    %v322 = vadd.f32 %v204, %v321
    %323 = vdwg.mxu0
    %v324 = vand.u32 2147483647, %v277
    %vm325 = vcmp.le.f32.partialorder %v324, 0.7853982
    %vm326 = vcmp.lt.s32.totalorder %v277, 0
    %v327 = vand.u32 %v277, 2139095040
    %v328 = vshrl.u32 %v327, 23
    %v329 = vsub.s32 %v328, 127
    %v330 = vand.u32 2147483647, %v277
    %v331 = vand.u32 %v330, 8388607
    %v332 = vor.u32 %v331, 8388608
    %v333 = vsub.s32 0, %v332
    %v334 = vadd.s32 %v329, 1
    %vm335 = vcmp.gt.s32.totalorder %v334, 0
    %v336 = vsel %vm335, %v334, 0
    %v337 = vshrl.u32 %v336, 5
    %v338 = vand.u32 %v336, 31
    %v339 = vsub.s32 32, %v338
    %v340 = vshrl.u32 683565275, %v339
    %v341 = vshll.u32 683565275, %v338
    %v342 = vshrl.u32 2475754826, %v339
    %v343 = vor.u32 %v341, %v342
    %v344 = vshll.u32 2475754826, %v338
    %v345 = vshrl.u32 2131351028, %v339
    %v346 = vor.u32 %v344, %v345
    %v347 = vshll.u32 2131351028, %v338
    %v348 = vshrl.u32 2102212464, %v339
    %v349 = vor.u32 %v347, %v348
    %v350 = vshll.u32 2102212464, %v338
    %v351 = vshrl.u32 920167782, %v339
    %v352 = vor.u32 %v350, %v351
    %v353 = vshll.u32 920167782, %v338
    %v354 = vshrl.u32 1326507024, %v339
    %v355 = vor.u32 %v353, %v354
    %vm356 = vcmp.lt.s32.totalorder %v337, 1
    %vm357 = vcmp.lt.s32.totalorder %v337, 2
    %vm358 = vcmp.lt.s32.totalorder %v337, 3
    %vm359 = vcmp.lt.s32.totalorder %v337, 4
    %v360 = vsel %vm356, %v340, %v343
    %v361 = vsel %vm359, %v349, 2102212464
    %v362 = vsel %vm358, %v346, %v361
    %v363 = vsel %vm357, %v360, %v362
    %v364 = vsel %vm356, %v343, %v346
    %v365 = vsel %vm359, %v352, 920167782
    %v366 = vsel %vm358, %v349, %v365
    %v367 = vsel %vm357, %v364, %v366
    %v368 = vsel %vm356, %v346, %v349
    %v369 = vsel %vm359, %v355, 1326507024
    %v370 = vsel %vm358, %v352, %v369
    %v371 = vsel %vm357, %v368, %v370
    %v372 = vshll.u32 %v332, 8
    %v373 = vand.u32 %v372, 65535
    %v374 = vshrl.u32 %v372, 16
    %v375 = vand.u32 %v371, 65535
    %v376 = vshrl.u32 %v371, 16
    %v377 = vmul.u32 %v373, %v375
    %v378 = vmul.u32 %v373, %v376
    %v379 = vmul.u32 %v374, %v375
    %v380 = vmul.u32 %v374, %v376
    %v381 = vshll.u32 %v378, 16
    %v382 = vshrl.u32 %v378, 16
    %v383 = vshll.u32 %v379, 16
    %v384 = vshrl.u32 %v379, 16
    %vm385 = vc.u32 %v377, %v381
    %v386 = vsel %vm385, 1, 0
    %v387 = vadd.s32 %v377, %v381
    %v388 = vadd.s32 %v380, %v386
    %vm389 = vc.u32 %v387, %v383
    %v390 = vsel %vm389, 1, 0
    %v391 = vadd.s32 %v387, %v383
    %v392 = vadd.s32 %v388, %v390
    %v393 = vadd.s32 %v392, %v382
    %v394 = vadd.s32 %v393, %v384
    %v395 = vand.u32 %v372, 65535
    %v396 = vshrl.u32 %v372, 16
    %v397 = vand.u32 %v367, 65535
    %v398 = vshrl.u32 %v367, 16
    %v399 = vmul.u32 %v395, %v397
    %v400 = vmul.u32 %v395, %v398
    %v401 = vmul.u32 %v396, %v397
    %v402 = vmul.u32 %v396, %v398
    %v403 = vshll.u32 %v400, 16
    %v404 = vshrl.u32 %v400, 16
    %v405 = vshll.u32 %v401, 16
    %v406 = vshrl.u32 %v401, 16
    %vm407 = vc.u32 %v399, %v403
    %v408 = vsel %vm407, 1, 0
    %v409 = vadd.s32 %v399, %v403
    %v410 = vadd.s32 %v402, %v408
    %vm411 = vc.u32 %v409, %v405
    %v412 = vsel %vm411, 1, 0
    %v413 = vadd.s32 %v409, %v405
    %v414 = vadd.s32 %v410, %v412
    %v415 = vadd.s32 %v414, %v404
    %v416 = vadd.s32 %v415, %v406
    %v417 = vmul.u32 %v372, %v363
    %v418 = vadd.s32 %v394, %v413
    %vm419 = vc.u32 %v394, %v413
    %v420 = vadd.s32 %v416, 1
    %v421 = vsel %vm419, %v420, %v416
    %v422 = vadd.s32 %v417, %v421
    %v423 = vadd.s32 %v422, 536870912
    %v424 = vshrl.u32 %v423, 30
    %v425 = vshll.u32 %v424, 30
    %v426 = vsub.s32 %v422, %v425
    %vm427 = vcmp.lt.s32.totalorder %v426, 0
    %v428 = vsub.s32 0, %v426
    %v429 = vsel %vm427, %v428, %v426
    %v430 = vclz %v429
    %v431 = vsub.s32 %v430, 2
    %vm432 = vcmp.gt.s32.totalorder 0, %v431
    %v433 = vsel %vm432, 0, %v431
    %v434 = vsub.s32 32, %v433
    %v435 = vshll.u32 %v426, %v433
    %v436 = vshrl.u32 %v418, %v434
    %v437 = vor.u32 %v435, %v436
    %v438 = vsub.s32 4294967266, %v433
    %v439 = vadd.s32 %v438, 127
    %v440 = vshll.u32 %v439, 23
    %v441 = vor.u32 4788187, %v440
    %v442 = vand.u32 2147483647, %v441
    %v444 = vcvt.s32.f32 %v437
    %v445 = vmul.f32 %v444, %v442
    %v446 = vxor.u32 %v445, 2147483648
    %v447 = vsel %vm326, %v446, %v445
    %v448 = vsub.s32 4, %v424
    %v449 = vsel %vm326, %v448, %v424
    %v450 = vsel %vm325, %v277, %v447
    %v451 = vsel %vm325, 0, %v449
    %v452 = vmul.f32 %v450, %v450
    %v453 = vmul.f32 %v452, -0.001358992
    %v454 = vadd.f32 %v453, 0.041655596
    %v455 = vmul.f32 %v452, %v454
    %v456 = vadd.f32 %v455, -0.4999988
    %v457 = vmul.f32 %v452, %v456
    %v458 = vadd.f32 1.0, %v457
    %v459 = vmul.f32 %v450, %v450
    %v460 = vmul.f32 %v459, -0.00019511016
    %v461 = vadd.f32 %v460, 0.008332121
    %v462 = vmul.f32 %v459, %v461
    %v463 = vadd.f32 %v462, -0.16666654
    %v464 = vmul.f32 %v459, %v463
    %v465 = vadd.f32 %v464, 1.0
    %v466 = vmul.f32 %v465, %v450
    %vm467 = vweird.f32 %v277
    %v468 = vadd.s32 %v451, 3
    %v469 = vand.u32 %v468, 3
    %vm470 = vcmp.lt.s32.totalorder %v469, 2
    %vm471 = vcmp.eq.s32.totalorder %v469, 0
    %v472 = vxor.u32 %v466, 2147483648
    %v473 = vsel %vm471, %v458, %v472
    %vm474 = vcmp.eq.s32.totalorder %v469, 2
    %v475 = vxor.u32 %v458, 2147483648
    %v476 = vsel %vm474, %v475, %v466
    %v477 = vsel %vm470, %v473, %v476
    %v478 = vsel %vm467, nan, %v477
    %v479 = vand.u32 2147483647, %v280
    %vm480 = vcmp.le.f32.partialorder %v479, 0.7853982
    %vm481 = vcmp.lt.s32.totalorder %v280, 0
    %v482 = vand.u32 %v280, 2139095040
    %v483 = vshrl.u32 %v482, 23
    %v484 = vsub.s32 %v483, 127
    %v485 = vand.u32 2147483647, %v280
    %v486 = vand.u32 %v485, 8388607
    %v487 = vor.u32 %v486, 8388608
    %v488 = vsub.s32 0, %v487
    %v489 = vadd.s32 %v484, 1
    %vm490 = vcmp.gt.s32.totalorder %v489, 0
    %v491 = vsel %vm490, %v489, 0
    %v492 = vshrl.u32 %v491, 5
    %v493 = vand.u32 %v491, 31
    %v494 = vsub.s32 32, %v493
    %v495 = vshrl.u32 683565275, %v494
    %v496 = vshll.u32 683565275, %v493
    %v497 = vshrl.u32 2475754826, %v494
    %v498 = vor.u32 %v496, %v497
    %v499 = vshll.u32 2475754826, %v493
    %v500 = vshrl.u32 2131351028, %v494
    %v501 = vor.u32 %v499, %v500
    %v502 = vshll.u32 2131351028, %v493
    %v503 = vshrl.u32 2102212464, %v494
    %v504 = vor.u32 %v502, %v503
    %v505 = vshll.u32 2102212464, %v493
    %v506 = vshrl.u32 920167782, %v494
    %v507 = vor.u32 %v505, %v506
    %v508 = vshll.u32 920167782, %v493
    %v509 = vshrl.u32 1326507024, %v494
    %v510 = vor.u32 %v508, %v509
    %vm511 = vcmp.lt.s32.totalorder %v492, 1
    %vm512 = vcmp.lt.s32.totalorder %v492, 2
    %vm513 = vcmp.lt.s32.totalorder %v492, 3
    %vm514 = vcmp.lt.s32.totalorder %v492, 4
    %v515 = vsel %vm511, %v495, %v498
    %v516 = vsel %vm514, %v504, 2102212464
    %v517 = vsel %vm513, %v501, %v516
    %v518 = vsel %vm512, %v515, %v517
    %v519 = vsel %vm511, %v498, %v501
    %v520 = vsel %vm514, %v507, 920167782
    %v521 = vsel %vm513, %v504, %v520
    %v522 = vsel %vm512, %v519, %v521
    %v523 = vsel %vm511, %v501, %v504
    %v524 = vsel %vm514, %v510, 1326507024
    %v525 = vsel %vm513, %v507, %v524
    %v526 = vsel %vm512, %v523, %v525
    %v527 = vshll.u32 %v487, 8
    %v528 = vand.u32 %v527, 65535
    %v529 = vshrl.u32 %v527, 16
    %v530 = vand.u32 %v526, 65535
    %v531 = vshrl.u32 %v526, 16
    %v532 = vmul.u32 %v528, %v530
    %v533 = vmul.u32 %v528, %v531
    %v534 = vmul.u32 %v529, %v530
    %v535 = vmul.u32 %v529, %v531
    %v536 = vshll.u32 %v533, 16
    %v537 = vshrl.u32 %v533, 16
    %v538 = vshll.u32 %v534, 16
    %v539 = vshrl.u32 %v534, 16
    %vm540 = vc.u32 %v532, %v536
    %v541 = vsel %vm540, 1, 0
    %v542 = vadd.s32 %v532, %v536
    %v543 = vadd.s32 %v535, %v541
    %vm544 = vc.u32 %v542, %v538
    %v545 = vsel %vm544, 1, 0
    %v546 = vadd.s32 %v542, %v538
    %v547 = vadd.s32 %v543, %v545
    %v548 = vadd.s32 %v547, %v537
    %v549 = vadd.s32 %v548, %v539
    %v550 = vand.u32 %v527, 65535
    %v551 = vshrl.u32 %v527, 16
    %v552 = vand.u32 %v522, 65535
    %v553 = vshrl.u32 %v522, 16
    %v554 = vmul.u32 %v550, %v552
    %v555 = vmul.u32 %v550, %v553
    %v556 = vmul.u32 %v551, %v552
    %v557 = vmul.u32 %v551, %v553
    %v558 = vshll.u32 %v555, 16
    %v559 = vshrl.u32 %v555, 16
    %v560 = vshll.u32 %v556, 16
    %v561 = vshrl.u32 %v556, 16
    %vm562 = vc.u32 %v554, %v558
    %v563 = vsel %vm562, 1, 0
    %v564 = vadd.s32 %v554, %v558
    %v565 = vadd.s32 %v557, %v563
    %vm566 = vc.u32 %v564, %v560
    %v567 = vsel %vm566, 1, 0
    %v568 = vadd.s32 %v564, %v560
    %v569 = vadd.s32 %v565, %v567
    %v570 = vadd.s32 %v569, %v559
    %v571 = vadd.s32 %v570, %v561
    %v572 = vmul.u32 %v527, %v518
    %v573 = vadd.s32 %v549, %v568
    %vm574 = vc.u32 %v549, %v568
    %v575 = vadd.s32 %v571, 1
    %v576 = vsel %vm574, %v575, %v571
    %v577 = vadd.s32 %v572, %v576
    %v578 = vadd.s32 %v577, 536870912
    %v579 = vshrl.u32 %v578, 30
    %v580 = vshll.u32 %v579, 30
    %v581 = vsub.s32 %v577, %v580
    %vm582 = vcmp.lt.s32.totalorder %v581, 0
    %v583 = vsub.s32 0, %v581
    %v584 = vsel %vm582, %v583, %v581
    %v585 = vclz %v584
    %v586 = vsub.s32 %v585, 2
    %vm587 = vcmp.gt.s32.totalorder 0, %v586
    %v588 = vsel %vm587, 0, %v586
    %v589 = vsub.s32 32, %v588
    %v590 = vshll.u32 %v581, %v588
    %v591 = vshrl.u32 %v573, %v589
    %v592 = vor.u32 %v590, %v591
    %v593 = vsub.s32 4294967266, %v588
    %v594 = vadd.s32 %v593, 127
    %v595 = vshll.u32 %v594, 23
    %v596 = vor.u32 4788187, %v595
    %v597 = vand.u32 2147483647, %v596
    %v599 = vcvt.s32.f32 %v592
    %v600 = vmul.f32 %v599, %v597
    %v601 = vxor.u32 %v600, 2147483648
    %v602 = vsel %vm481, %v601, %v600
    %v603 = vsub.s32 4, %v579
    %v604 = vsel %vm481, %v603, %v579
    %v605 = vsel %vm480, %v280, %v602
    %v606 = vsel %vm480, 0, %v604
    %v607 = vmul.f32 %v605, %v605
    %v608 = vmul.f32 %v607, -0.001358992
    %v609 = vadd.f32 %v608, 0.041655596
    %v610 = vmul.f32 %v607, %v609
    %v611 = vadd.f32 %v610, -0.4999988
    %v612 = vmul.f32 %v607, %v611
    %v613 = vadd.f32 1.0, %v612
    %v614 = vmul.f32 %v605, %v605
    %v615 = vmul.f32 %v614, -0.00019511016
    %v616 = vadd.f32 %v615, 0.008332121
    %v617 = vmul.f32 %v614, %v616
    %v618 = vadd.f32 %v617, -0.16666654
    %v619 = vmul.f32 %v614, %v618
    %v620 = vadd.f32 %v619, 1.0
    %v621 = vmul.f32 %v620, %v605
    %vm622 = vweird.f32 %v280
    %v623 = vadd.s32 %v606, 3
    %v624 = vand.u32 %v623, 3
    %vm625 = vcmp.lt.s32.totalorder %v624, 2
    %vm626 = vcmp.eq.s32.totalorder %v624, 0
    %v627 = vxor.u32 %v621, 2147483648
    %v628 = vsel %vm626, %v613, %v627
    %vm629 = vcmp.eq.s32.totalorder %v624, 2
    %v630 = vxor.u32 %v613, 2147483648
    %v631 = vsel %vm629, %v630, %v621
    %v632 = vsel %vm625, %v628, %v631
    %v633 = vsel %vm622, nan, %v632
    %v634 = vand.u32 2147483647, %v283
    %vm635 = vcmp.le.f32.partialorder %v634, 0.7853982
    %vm636 = vcmp.lt.s32.totalorder %v283, 0
    %v637 = vand.u32 %v283, 2139095040
    %v638 = vshrl.u32 %v637, 23
    %v639 = vsub.s32 %v638, 127
    %v640 = vand.u32 2147483647, %v283
    %v641 = vand.u32 %v640, 8388607
    %v642 = vor.u32 %v641, 8388608
    %v643 = vsub.s32 0, %v642
    %v644 = vadd.s32 %v639, 1
    %vm645 = vcmp.gt.s32.totalorder %v644, 0
    %v646 = vsel %vm645, %v644, 0
    %v647 = vshrl.u32 %v646, 5
    %v648 = vand.u32 %v646, 31
    %v649 = vsub.s32 32, %v648
    %v650 = vshrl.u32 683565275, %v649
    %v651 = vshll.u32 683565275, %v648
    %v652 = vshrl.u32 2475754826, %v649
    %v653 = vor.u32 %v651, %v652
    %v654 = vshll.u32 2475754826, %v648
    %v655 = vshrl.u32 2131351028, %v649
    %v656 = vor.u32 %v654, %v655
    %v657 = vshll.u32 2131351028, %v648
    %v658 = vshrl.u32 2102212464, %v649
    %v659 = vor.u32 %v657, %v658
    %v660 = vshll.u32 2102212464, %v648
    %v661 = vshrl.u32 920167782, %v649
    %v662 = vor.u32 %v660, %v661
    %v663 = vshll.u32 920167782, %v648
    %v664 = vshrl.u32 1326507024, %v649
    %v665 = vor.u32 %v663, %v664
    %vm666 = vcmp.lt.s32.totalorder %v647, 1
    %vm667 = vcmp.lt.s32.totalorder %v647, 2
    %vm668 = vcmp.lt.s32.totalorder %v647, 3
    %vm669 = vcmp.lt.s32.totalorder %v647, 4
    %v670 = vsel %vm666, %v650, %v653
    %v671 = vsel %vm669, %v659, 2102212464
    %v672 = vsel %vm668, %v656, %v671
    %v673 = vsel %vm667, %v670, %v672
    %v674 = vsel %vm666, %v653, %v656
    %v675 = vsel %vm669, %v662, 920167782
    %v676 = vsel %vm668, %v659, %v675
    %v677 = vsel %vm667, %v674, %v676
    %v678 = vsel %vm666, %v656, %v659
    %v679 = vsel %vm669, %v665, 1326507024
    %v680 = vsel %vm668, %v662, %v679
    %v681 = vsel %vm667, %v678, %v680
    %v682 = vshll.u32 %v642, 8
    %v683 = vand.u32 %v682, 65535
    %v684 = vshrl.u32 %v682, 16
    %v685 = vand.u32 %v681, 65535
    %v686 = vshrl.u32 %v681, 16
    %v687 = vmul.u32 %v683, %v685
    %v688 = vmul.u32 %v683, %v686
    %v689 = vmul.u32 %v684, %v685
    %v690 = vmul.u32 %v684, %v686
    %v691 = vshll.u32 %v688, 16
    %v692 = vshrl.u32 %v688, 16
    %v693 = vshll.u32 %v689, 16
    %v694 = vshrl.u32 %v689, 16
    %vm695 = vc.u32 %v687, %v691
    %v696 = vsel %vm695, 1, 0
    %v697 = vadd.s32 %v687, %v691
    %v698 = vadd.s32 %v690, %v696
    %vm699 = vc.u32 %v697, %v693
    %v700 = vsel %vm699, 1, 0
    %v701 = vadd.s32 %v697, %v693
    %v702 = vadd.s32 %v698, %v700
    %v703 = vadd.s32 %v702, %v692
    %v704 = vadd.s32 %v703, %v694
    %v705 = vand.u32 %v682, 65535
    %v706 = vshrl.u32 %v682, 16
    %v707 = vand.u32 %v677, 65535
    %v708 = vshrl.u32 %v677, 16
    %v709 = vmul.u32 %v705, %v707
    %v710 = vmul.u32 %v705, %v708
    %v711 = vmul.u32 %v706, %v707
    %v712 = vmul.u32 %v706, %v708
    %v713 = vshll.u32 %v710, 16
    %v714 = vshrl.u32 %v710, 16
    %v715 = vshll.u32 %v711, 16
    %v716 = vshrl.u32 %v711, 16
    %vm717 = vc.u32 %v709, %v713
    %v718 = vsel %vm717, 1, 0
    %v719 = vadd.s32 %v709, %v713
    %v720 = vadd.s32 %v712, %v718
    %vm721 = vc.u32 %v719, %v715
    %v722 = vsel %vm721, 1, 0
    %v723 = vadd.s32 %v719, %v715
    %v724 = vadd.s32 %v720, %v722
    %v725 = vadd.s32 %v724, %v714
    %v726 = vadd.s32 %v725, %v716
    %v727 = vmul.u32 %v682, %v673
    %v728 = vadd.s32 %v704, %v723
    %vm729 = vc.u32 %v704, %v723
    %v730 = vadd.s32 %v726, 1
    %v731 = vsel %vm729, %v730, %v726
    %v732 = vadd.s32 %v727, %v731
    %v733 = vadd.s32 %v732, 536870912
    %v734 = vshrl.u32 %v733, 30
    %v735 = vshll.u32 %v734, 30
    %v736 = vsub.s32 %v732, %v735
    %vm737 = vcmp.lt.s32.totalorder %v736, 0
    %v738 = vsub.s32 0, %v736
    %v739 = vsel %vm737, %v738, %v736
    %v740 = vclz %v739
    %v741 = vsub.s32 %v740, 2
    %vm742 = vcmp.gt.s32.totalorder 0, %v741
    %v743 = vsel %vm742, 0, %v741
    %v744 = vsub.s32 32, %v743
    %v745 = vshll.u32 %v736, %v743
    %v746 = vshrl.u32 %v728, %v744
    %v747 = vor.u32 %v745, %v746
    %v748 = vsub.s32 4294967266, %v743
    %v749 = vadd.s32 %v748, 127
    %v750 = vshll.u32 %v749, 23
    %v751 = vor.u32 4788187, %v750
    %v752 = vand.u32 2147483647, %v751
    %v754 = vcvt.s32.f32 %v747
    %v755 = vmul.f32 %v754, %v752
    %v756 = vxor.u32 %v755, 2147483648
    %v757 = vsel %vm636, %v756, %v755
    %v758 = vsub.s32 4, %v734
    %v759 = vsel %vm636, %v758, %v734
    %v760 = vsel %vm635, %v283, %v757
    %v761 = vsel %vm635, 0, %v759
    %v762 = vmul.f32 %v760, %v760
    %v763 = vmul.f32 %v762, -0.001358992
    %v764 = vadd.f32 %v763, 0.041655596
    %v765 = vmul.f32 %v762, %v764
    %v766 = vadd.f32 %v765, -0.4999988
    %v767 = vmul.f32 %v762, %v766
    %v768 = vadd.f32 1.0, %v767
    %v769 = vmul.f32 %v760, %v760
    %v770 = vmul.f32 %v769, -0.00019511016
    %v771 = vadd.f32 %v770, 0.008332121
    %v772 = vmul.f32 %v769, %v771
    %v773 = vadd.f32 %v772, -0.16666654
    %v774 = vmul.f32 %v769, %v773
    %v775 = vadd.f32 %v774, 1.0
    %v776 = vmul.f32 %v775, %v760
    %vm777 = vweird.f32 %v283
    %v778 = vadd.s32 %v761, 3
    %v779 = vand.u32 %v778, 3
    %vm780 = vcmp.lt.s32.totalorder %v779, 2
    %vm781 = vcmp.eq.s32.totalorder %v779, 0
    %v782 = vxor.u32 %v776, 2147483648
    %v783 = vsel %vm781, %v768, %v782
    %vm784 = vcmp.eq.s32.totalorder %v779, 2
    %v785 = vxor.u32 %v768, 2147483648
    %v786 = vsel %vm784, %v785, %v776
    %v787 = vsel %vm780, %v783, %v786
    %v788 = vsel %vm777, nan, %v787
    %v789 = vand.u32 2147483647, %v286
    %vm790 = vcmp.le.f32.partialorder %v789, 0.7853982
    %vm791 = vcmp.lt.s32.totalorder %v286, 0
    %v792 = vand.u32 %v286, 2139095040
    %v793 = vshrl.u32 %v792, 23
    %v794 = vsub.s32 %v793, 127
    %v795 = vand.u32 2147483647, %v286
    %v796 = vand.u32 %v795, 8388607
    %v797 = vor.u32 %v796, 8388608
    %v798 = vsub.s32 0, %v797
    %v799 = vadd.s32 %v794, 1
    %vm800 = vcmp.gt.s32.totalorder %v799, 0
    %v801 = vsel %vm800, %v799, 0
    %v802 = vshrl.u32 %v801, 5
    %v803 = vand.u32 %v801, 31
    %v804 = vsub.s32 32, %v803
    %v805 = vshrl.u32 683565275, %v804
    %v806 = vshll.u32 683565275, %v803
    %v807 = vshrl.u32 2475754826, %v804
    %v808 = vor.u32 %v806, %v807
    %v809 = vshll.u32 2475754826, %v803
    %v810 = vshrl.u32 2131351028, %v804
    %v811 = vor.u32 %v809, %v810
    %v812 = vshll.u32 2131351028, %v803
    %v813 = vshrl.u32 2102212464, %v804
    %v814 = vor.u32 %v812, %v813
    %v815 = vshll.u32 2102212464, %v803
    %v816 = vshrl.u32 920167782, %v804
    %v817 = vor.u32 %v815, %v816
    %v818 = vshll.u32 920167782, %v803
    %v819 = vshrl.u32 1326507024, %v804
    %v820 = vor.u32 %v818, %v819
    %vm821 = vcmp.lt.s32.totalorder %v802, 1
    %vm822 = vcmp.lt.s32.totalorder %v802, 2
    %vm823 = vcmp.lt.s32.totalorder %v802, 3
    %vm824 = vcmp.lt.s32.totalorder %v802, 4
    %v825 = vsel %vm821, %v805, %v808
    %v826 = vsel %vm824, %v814, 2102212464
    %v827 = vsel %vm823, %v811, %v826
    %v828 = vsel %vm822, %v825, %v827
    %v829 = vsel %vm821, %v808, %v811
    %v830 = vsel %vm824, %v817, 920167782
    %v831 = vsel %vm823, %v814, %v830
    %v832 = vsel %vm822, %v829, %v831
    %v833 = vsel %vm821, %v811, %v814
    %v834 = vsel %vm824, %v820, 1326507024
    %v835 = vsel %vm823, %v817, %v834
    %v836 = vsel %vm822, %v833, %v835
    %v837 = vshll.u32 %v797, 8
    %v838 = vand.u32 %v837, 65535
    %v839 = vshrl.u32 %v837, 16
    %v840 = vand.u32 %v836, 65535
    %v841 = vshrl.u32 %v836, 16
    %v842 = vmul.u32 %v838, %v840
    %v843 = vmul.u32 %v838, %v841
    %v844 = vmul.u32 %v839, %v840
    %v845 = vmul.u32 %v839, %v841
    %v846 = vshll.u32 %v843, 16
    %v847 = vshrl.u32 %v843, 16
    %v848 = vshll.u32 %v844, 16
    %v849 = vshrl.u32 %v844, 16
    %vm850 = vc.u32 %v842, %v846
    %v851 = vsel %vm850, 1, 0
    %v852 = vadd.s32 %v842, %v846
    %v853 = vadd.s32 %v845, %v851
    %vm854 = vc.u32 %v852, %v848
    %v855 = vsel %vm854, 1, 0
    %v856 = vadd.s32 %v852, %v848
    %v857 = vadd.s32 %v853, %v855
    %v858 = vadd.s32 %v857, %v847
    %v859 = vadd.s32 %v858, %v849
    %v860 = vand.u32 %v837, 65535
    %v861 = vshrl.u32 %v837, 16
    %v862 = vand.u32 %v832, 65535
    %v863 = vshrl.u32 %v832, 16
    %v864 = vmul.u32 %v860, %v862
    %v865 = vmul.u32 %v860, %v863
    %v866 = vmul.u32 %v861, %v862
    %v867 = vmul.u32 %v861, %v863
    %v868 = vshll.u32 %v865, 16
    %v869 = vshrl.u32 %v865, 16
    %v870 = vshll.u32 %v866, 16
    %v871 = vshrl.u32 %v866, 16
    %vm872 = vc.u32 %v864, %v868
    %v873 = vsel %vm872, 1, 0
    %v874 = vadd.s32 %v864, %v868
    %v875 = vadd.s32 %v867, %v873
    %vm876 = vc.u32 %v874, %v870
    %v877 = vsel %vm876, 1, 0
    %v878 = vadd.s32 %v874, %v870
    %v879 = vadd.s32 %v875, %v877
    %v880 = vadd.s32 %v879, %v869
    %v881 = vadd.s32 %v880, %v871
    %v882 = vmul.u32 %v837, %v828
    %v883 = vadd.s32 %v859, %v878
    %vm884 = vc.u32 %v859, %v878
    %v885 = vadd.s32 %v881, 1
    %v886 = vsel %vm884, %v885, %v881
    %v887 = vadd.s32 %v882, %v886
    %v888 = vadd.s32 %v887, 536870912
    %v889 = vshrl.u32 %v888, 30
    %v890 = vshll.u32 %v889, 30
    %v891 = vsub.s32 %v887, %v890
    %vm892 = vcmp.lt.s32.totalorder %v891, 0
    %v893 = vsub.s32 0, %v891
    %v894 = vsel %vm892, %v893, %v891
    %v895 = vclz %v894
    %v896 = vsub.s32 %v895, 2
    %vm897 = vcmp.gt.s32.totalorder 0, %v896
    %v898 = vsel %vm897, 0, %v896
    %v899 = vsub.s32 32, %v898
    %v900 = vshll.u32 %v891, %v898
    %v901 = vshrl.u32 %v883, %v899
    %v902 = vor.u32 %v900, %v901
    %v903 = vsub.s32 4294967266, %v898
    %v904 = vadd.s32 %v903, 127
    %v905 = vshll.u32 %v904, 23
    %v906 = vor.u32 4788187, %v905
    %v907 = vand.u32 2147483647, %v906
    %v909 = vcvt.s32.f32 %v902
    %v910 = vmul.f32 %v909, %v907
    %v911 = vxor.u32 %v910, 2147483648
    %v912 = vsel %vm791, %v911, %v910
    %v913 = vsub.s32 4, %v889
    %v914 = vsel %vm791, %v913, %v889
    %v915 = vsel %vm790, %v286, %v912
    %v916 = vsel %vm790, 0, %v914
    %v917 = vmul.f32 %v915, %v915
    %v918 = vmul.f32 %v917, -0.001358992
    %v919 = vadd.f32 %v918, 0.041655596
    %v920 = vmul.f32 %v917, %v919
    %v921 = vadd.f32 %v920, -0.4999988
    %v922 = vmul.f32 %v917, %v921
    %v923 = vadd.f32 1.0, %v922
    %v924 = vmul.f32 %v915, %v915
    %v925 = vmul.f32 %v924, -0.00019511016
    %v926 = vadd.f32 %v925, 0.008332121
    %v927 = vmul.f32 %v924, %v926
    %v928 = vadd.f32 %v927, -0.16666654
    %v929 = vmul.f32 %v924, %v928
    %v930 = vadd.f32 %v929, 1.0
    %v931 = vmul.f32 %v930, %v915
    %vm932 = vweird.f32 %v286
    %v933 = vadd.s32 %v916, 3
    %v934 = vand.u32 %v933, 3
    %vm935 = vcmp.lt.s32.totalorder %v934, 2
    %vm936 = vcmp.eq.s32.totalorder %v934, 0
    %v937 = vxor.u32 %v931, 2147483648
    %v938 = vsel %vm936, %v923, %v937
    %vm939 = vcmp.eq.s32.totalorder %v934, 2
    %v940 = vxor.u32 %v923, 2147483648
    %v941 = vsel %vm939, %v940, %v931
    %v942 = vsel %vm935, %v938, %v941
    %v943 = vsel %vm932, nan, %v942
    %v944 = vand.u32 2147483647, %v289
    %vm945 = vcmp.le.f32.partialorder %v944, 0.7853982
    %vm946 = vcmp.lt.s32.totalorder %v289, 0
    %v947 = vand.u32 %v289, 2139095040
    %v948 = vshrl.u32 %v947, 23
    %v949 = vsub.s32 %v948, 127
    %v950 = vand.u32 2147483647, %v289
    %v951 = vand.u32 %v950, 8388607
    %v952 = vor.u32 %v951, 8388608
    %v953 = vsub.s32 0, %v952
    %v954 = vadd.s32 %v949, 1
    %vm955 = vcmp.gt.s32.totalorder %v954, 0
    %v956 = vsel %vm955, %v954, 0
    %v957 = vshrl.u32 %v956, 5
    %v958 = vand.u32 %v956, 31
    %v959 = vsub.s32 32, %v958
    %v960 = vshrl.u32 683565275, %v959
    %v961 = vshll.u32 683565275, %v958
    %v962 = vshrl.u32 2475754826, %v959
    %v963 = vor.u32 %v961, %v962
    %v964 = vshll.u32 2475754826, %v958
    %v965 = vshrl.u32 2131351028, %v959
    %v966 = vor.u32 %v964, %v965
    %v967 = vshll.u32 2131351028, %v958
    %v968 = vshrl.u32 2102212464, %v959
    %v969 = vor.u32 %v967, %v968
    %v970 = vshll.u32 2102212464, %v958
    %v971 = vshrl.u32 920167782, %v959
    %v972 = vor.u32 %v970, %v971
    %v973 = vshll.u32 920167782, %v958
    %v974 = vshrl.u32 1326507024, %v959
    %v975 = vor.u32 %v973, %v974
    %vm976 = vcmp.lt.s32.totalorder %v957, 1
    %vm977 = vcmp.lt.s32.totalorder %v957, 2
    %vm978 = vcmp.lt.s32.totalorder %v957, 3
    %vm979 = vcmp.lt.s32.totalorder %v957, 4
    %v980 = vsel %vm976, %v960, %v963
    %v981 = vsel %vm979, %v969, 2102212464
    %v982 = vsel %vm978, %v966, %v981
    %v983 = vsel %vm977, %v980, %v982
    %v984 = vsel %vm976, %v963, %v966
    %v985 = vsel %vm979, %v972, 920167782
    %v986 = vsel %vm978, %v969, %v985
    %v987 = vsel %vm977, %v984, %v986
    %v988 = vsel %vm976, %v966, %v969
    %v989 = vsel %vm979, %v975, 1326507024
    %v990 = vsel %vm978, %v972, %v989
    %v991 = vsel %vm977, %v988, %v990
    %v992 = vshll.u32 %v952, 8
    %v993 = vand.u32 %v992, 65535
    %v994 = vshrl.u32 %v992, 16
    %v995 = vand.u32 %v991, 65535
    %v996 = vshrl.u32 %v991, 16
    %v997 = vmul.u32 %v993, %v995
    %v998 = vmul.u32 %v993, %v996
    %v999 = vmul.u32 %v994, %v995
    %v1000 = vmul.u32 %v994, %v996
    %v1001 = vshll.u32 %v998, 16
    %v1002 = vshrl.u32 %v998, 16
    %v1003 = vshll.u32 %v999, 16
    %v1004 = vshrl.u32 %v999, 16
    %vm1005 = vc.u32 %v997, %v1001
    %v1006 = vsel %vm1005, 1, 0
    %v1007 = vadd.s32 %v997, %v1001
    %v1008 = vadd.s32 %v1000, %v1006
    %vm1009 = vc.u32 %v1007, %v1003
    %v1010 = vsel %vm1009, 1, 0
    %v1011 = vadd.s32 %v1007, %v1003
    %v1012 = vadd.s32 %v1008, %v1010
    %v1013 = vadd.s32 %v1012, %v1002
    %v1014 = vadd.s32 %v1013, %v1004
    %v1015 = vand.u32 %v992, 65535
    %v1016 = vshrl.u32 %v992, 16
    %v1017 = vand.u32 %v987, 65535
    %v1018 = vshrl.u32 %v987, 16
    %v1019 = vmul.u32 %v1015, %v1017
    %v1020 = vmul.u32 %v1015, %v1018
    %v1021 = vmul.u32 %v1016, %v1017
    %v1022 = vmul.u32 %v1016, %v1018
    %v1023 = vshll.u32 %v1020, 16
    %v1024 = vshrl.u32 %v1020, 16
    %v1025 = vshll.u32 %v1021, 16
    %v1026 = vshrl.u32 %v1021, 16
    %vm1027 = vc.u32 %v1019, %v1023
    %v1028 = vsel %vm1027, 1, 0
    %v1029 = vadd.s32 %v1019, %v1023
    %v1030 = vadd.s32 %v1022, %v1028
    %vm1031 = vc.u32 %v1029, %v1025
    %v1032 = vsel %vm1031, 1, 0
    %v1033 = vadd.s32 %v1029, %v1025
    %v1034 = vadd.s32 %v1030, %v1032
    %v1035 = vadd.s32 %v1034, %v1024
    %v1036 = vadd.s32 %v1035, %v1026
    %v1037 = vmul.u32 %v992, %v983
    %v1038 = vadd.s32 %v1014, %v1033
    %vm1039 = vc.u32 %v1014, %v1033
    %v1040 = vadd.s32 %v1036, 1
    %v1041 = vsel %vm1039, %v1040, %v1036
    %v1042 = vadd.s32 %v1037, %v1041
    %v1043 = vadd.s32 %v1042, 536870912
    %v1044 = vshrl.u32 %v1043, 30
    %v1045 = vshll.u32 %v1044, 30
    %v1046 = vsub.s32 %v1042, %v1045
    %vm1047 = vcmp.lt.s32.totalorder %v1046, 0
    %v1048 = vsub.s32 0, %v1046
    %v1049 = vsel %vm1047, %v1048, %v1046
    %v1050 = vclz %v1049
    %v1051 = vsub.s32 %v1050, 2
    %vm1052 = vcmp.gt.s32.totalorder 0, %v1051
    %v1053 = vsel %vm1052, 0, %v1051
    %v1054 = vsub.s32 32, %v1053
    %v1055 = vshll.u32 %v1046, %v1053
    %v1056 = vshrl.u32 %v1038, %v1054
    %v1057 = vor.u32 %v1055, %v1056
    %v1058 = vsub.s32 4294967266, %v1053
    %v1059 = vadd.s32 %v1058, 127
    %v1060 = vshll.u32 %v1059, 23
    %v1061 = vor.u32 4788187, %v1060
    %v1062 = vand.u32 2147483647, %v1061
    %v1064 = vcvt.s32.f32 %v1057
    %v1065 = vmul.f32 %v1064, %v1062
    %v1066 = vxor.u32 %v1065, 2147483648
    %v1067 = vsel %vm946, %v1066, %v1065
    %v1068 = vsub.s32 4, %v1044
    %v1069 = vsel %vm946, %v1068, %v1044
    %v1070 = vsel %vm945, %v289, %v1067
    %v1071 = vsel %vm945, 0, %v1069
    %v1072 = vmul.f32 %v1070, %v1070
    %v1073 = vmul.f32 %v1072, -0.001358992
    %v1074 = vadd.f32 %v1073, 0.041655596
    %v1075 = vmul.f32 %v1072, %v1074
    %v1076 = vadd.f32 %v1075, -0.4999988
    %v1077 = vmul.f32 %v1072, %v1076
    %v1078 = vadd.f32 1.0, %v1077
    %v1079 = vmul.f32 %v1070, %v1070
    %v1080 = vmul.f32 %v1079, -0.00019511016
    %v1081 = vadd.f32 %v1080, 0.008332121
    %v1082 = vmul.f32 %v1079, %v1081
    %v1083 = vadd.f32 %v1082, -0.16666654
    %v1084 = vmul.f32 %v1079, %v1083
    %v1085 = vadd.f32 %v1084, 1.0
    %v1086 = vmul.f32 %v1085, %v1070
    %vm1087 = vweird.f32 %v289
    %v1088 = vadd.s32 %v1071, 3
    %v1089 = vand.u32 %v1088, 3
    %vm1090 = vcmp.lt.s32.totalorder %v1089, 2
    %vm1091 = vcmp.eq.s32.totalorder %v1089, 0
    %v1092 = vxor.u32 %v1086, 2147483648
    %v1093 = vsel %vm1091, %v1078, %v1092
    %vm1094 = vcmp.eq.s32.totalorder %v1089, 2
    %v1095 = vxor.u32 %v1078, 2147483648
    %v1096 = vsel %vm1094, %v1095, %v1086
    %v1097 = vsel %vm1090, %v1093, %v1096
    %v1098 = vsel %vm1087, nan, %v1097
    %v1099 = vand.u32 2147483647, %v292
    %vm1100 = vcmp.le.f32.partialorder %v1099, 0.7853982
    %vm1101 = vcmp.lt.s32.totalorder %v292, 0
    %v1102 = vand.u32 %v292, 2139095040
    %v1103 = vshrl.u32 %v1102, 23
    %v1104 = vsub.s32 %v1103, 127
    %v1105 = vand.u32 2147483647, %v292
    %v1106 = vand.u32 %v1105, 8388607
    %v1107 = vor.u32 %v1106, 8388608
    %v1108 = vsub.s32 0, %v1107
    %v1109 = vadd.s32 %v1104, 1
    %vm1110 = vcmp.gt.s32.totalorder %v1109, 0
    %v1111 = vsel %vm1110, %v1109, 0
    %v1112 = vshrl.u32 %v1111, 5
    %v1113 = vand.u32 %v1111, 31
    %v1114 = vsub.s32 32, %v1113
    %v1115 = vshrl.u32 683565275, %v1114
    %v1116 = vshll.u32 683565275, %v1113
    %v1117 = vshrl.u32 2475754826, %v1114
    %v1118 = vor.u32 %v1116, %v1117
    %v1119 = vshll.u32 2475754826, %v1113
    %v1120 = vshrl.u32 2131351028, %v1114
    %v1121 = vor.u32 %v1119, %v1120
    %v1122 = vshll.u32 2131351028, %v1113
    %v1123 = vshrl.u32 2102212464, %v1114
    %v1124 = vor.u32 %v1122, %v1123
    %v1125 = vshll.u32 2102212464, %v1113
    %v1126 = vshrl.u32 920167782, %v1114
    %v1127 = vor.u32 %v1125, %v1126
    %v1128 = vshll.u32 920167782, %v1113
    %v1129 = vshrl.u32 1326507024, %v1114
    %v1130 = vor.u32 %v1128, %v1129
    %vm1131 = vcmp.lt.s32.totalorder %v1112, 1
    %vm1132 = vcmp.lt.s32.totalorder %v1112, 2
    %vm1133 = vcmp.lt.s32.totalorder %v1112, 3
    %vm1134 = vcmp.lt.s32.totalorder %v1112, 4
    %v1135 = vsel %vm1131, %v1115, %v1118
    %v1136 = vsel %vm1134, %v1124, 2102212464
    %v1137 = vsel %vm1133, %v1121, %v1136
    %v1138 = vsel %vm1132, %v1135, %v1137
    %v1139 = vsel %vm1131, %v1118, %v1121
    %v1140 = vsel %vm1134, %v1127, 920167782
    %v1141 = vsel %vm1133, %v1124, %v1140
    %v1142 = vsel %vm1132, %v1139, %v1141
    %v1143 = vsel %vm1131, %v1121, %v1124
    %v1144 = vsel %vm1134, %v1130, 1326507024
    %v1145 = vsel %vm1133, %v1127, %v1144
    %v1146 = vsel %vm1132, %v1143, %v1145
    %v1147 = vshll.u32 %v1107, 8
    %v1148 = vand.u32 %v1147, 65535
    %v1149 = vshrl.u32 %v1147, 16
    %v1150 = vand.u32 %v1146, 65535
    %v1151 = vshrl.u32 %v1146, 16
    %v1152 = vmul.u32 %v1148, %v1150
    %v1153 = vmul.u32 %v1148, %v1151
    %v1154 = vmul.u32 %v1149, %v1150
    %v1155 = vmul.u32 %v1149, %v1151
    %v1156 = vshll.u32 %v1153, 16
    %v1157 = vshrl.u32 %v1153, 16
    %v1158 = vshll.u32 %v1154, 16
    %v1159 = vshrl.u32 %v1154, 16
    %vm1160 = vc.u32 %v1152, %v1156
    %v1161 = vsel %vm1160, 1, 0
    %v1162 = vadd.s32 %v1152, %v1156
    %v1163 = vadd.s32 %v1155, %v1161
    %vm1164 = vc.u32 %v1162, %v1158
    %v1165 = vsel %vm1164, 1, 0
    %v1166 = vadd.s32 %v1162, %v1158
    %v1167 = vadd.s32 %v1163, %v1165
    %v1168 = vadd.s32 %v1167, %v1157
    %v1169 = vadd.s32 %v1168, %v1159
    %v1170 = vand.u32 %v1147, 65535
    %v1171 = vshrl.u32 %v1147, 16
    %v1172 = vand.u32 %v1142, 65535
    %v1173 = vshrl.u32 %v1142, 16
    %v1174 = vmul.u32 %v1170, %v1172
    %v1175 = vmul.u32 %v1170, %v1173
    %v1176 = vmul.u32 %v1171, %v1172
    %v1177 = vmul.u32 %v1171, %v1173
    %v1178 = vshll.u32 %v1175, 16
    %v1179 = vshrl.u32 %v1175, 16
    %v1180 = vshll.u32 %v1176, 16
    %v1181 = vshrl.u32 %v1176, 16
    %vm1182 = vc.u32 %v1174, %v1178
    %v1183 = vsel %vm1182, 1, 0
    %v1184 = vadd.s32 %v1174, %v1178
    %v1185 = vadd.s32 %v1177, %v1183
    %vm1186 = vc.u32 %v1184, %v1180
    %v1187 = vsel %vm1186, 1, 0
    %v1188 = vadd.s32 %v1184, %v1180
    %v1189 = vadd.s32 %v1185, %v1187
    %v1190 = vadd.s32 %v1189, %v1179
    %v1191 = vadd.s32 %v1190, %v1181
    %v1192 = vmul.u32 %v1147, %v1138
    %v1193 = vadd.s32 %v1169, %v1188
    %vm1194 = vc.u32 %v1169, %v1188
    %v1195 = vadd.s32 %v1191, 1
    %v1196 = vsel %vm1194, %v1195, %v1191
    %v1197 = vadd.s32 %v1192, %v1196
    %v1198 = vadd.s32 %v1197, 536870912
    %v1199 = vshrl.u32 %v1198, 30
    %v1200 = vshll.u32 %v1199, 30
    %v1201 = vsub.s32 %v1197, %v1200
    %vm1202 = vcmp.lt.s32.totalorder %v1201, 0
    %v1203 = vsub.s32 0, %v1201
    %v1204 = vsel %vm1202, %v1203, %v1201
    %v1205 = vclz %v1204
    %v1206 = vsub.s32 %v1205, 2
    %vm1207 = vcmp.gt.s32.totalorder 0, %v1206
    %v1208 = vsel %vm1207, 0, %v1206
    %v1209 = vsub.s32 32, %v1208
    %v1210 = vshll.u32 %v1201, %v1208
    %v1211 = vshrl.u32 %v1193, %v1209
    %v1212 = vor.u32 %v1210, %v1211
    %v1213 = vsub.s32 4294967266, %v1208
    %v1214 = vadd.s32 %v1213, 127
    %v1215 = vshll.u32 %v1214, 23
    %v1216 = vor.u32 4788187, %v1215
    %v1217 = vand.u32 2147483647, %v1216
    %v1219 = vcvt.s32.f32 %v1212
    %v1220 = vmul.f32 %v1219, %v1217
    %v1221 = vxor.u32 %v1220, 2147483648
    %v1222 = vsel %vm1101, %v1221, %v1220
    %v1223 = vsub.s32 4, %v1199
    %v1224 = vsel %vm1101, %v1223, %v1199
    %v1225 = vsel %vm1100, %v292, %v1222
    %v1226 = vsel %vm1100, 0, %v1224
    %v1227 = vmul.f32 %v1225, %v1225
    %v1228 = vmul.f32 %v1227, -0.001358992
    %v1229 = vadd.f32 %v1228, 0.041655596
    %v1230 = vmul.f32 %v1227, %v1229
    %v1231 = vadd.f32 %v1230, -0.4999988
    %v1232 = vmul.f32 %v1227, %v1231
    %v1233 = vadd.f32 1.0, %v1232
    %v1234 = vmul.f32 %v1225, %v1225
    %v1235 = vmul.f32 %v1234, -0.00019511016
    %v1236 = vadd.f32 %v1235, 0.008332121
    %v1237 = vmul.f32 %v1234, %v1236
    %v1238 = vadd.f32 %v1237, -0.16666654
    %v1239 = vmul.f32 %v1234, %v1238
    %v1240 = vadd.f32 %v1239, 1.0
    %v1241 = vmul.f32 %v1240, %v1225
    %vm1242 = vweird.f32 %v292
    %v1243 = vadd.s32 %v1226, 3
    %v1244 = vand.u32 %v1243, 3
    %vm1245 = vcmp.lt.s32.totalorder %v1244, 2
    %vm1246 = vcmp.eq.s32.totalorder %v1244, 0
    %v1247 = vxor.u32 %v1241, 2147483648
    %v1248 = vsel %vm1246, %v1233, %v1247
    %vm1249 = vcmp.eq.s32.totalorder %v1244, 2
    %v1250 = vxor.u32 %v1233, 2147483648
    %v1251 = vsel %vm1249, %v1250, %v1241
    %v1252 = vsel %vm1245, %v1248, %v1251
    %v1253 = vsel %vm1242, nan, %v1252
    %v1254 = vand.u32 2147483647, %v295
    %vm1255 = vcmp.le.f32.partialorder %v1254, 0.7853982
    %vm1256 = vcmp.lt.s32.totalorder %v295, 0
    %v1257 = vand.u32 %v295, 2139095040
    %v1258 = vshrl.u32 %v1257, 23
    %v1259 = vsub.s32 %v1258, 127
    %v1260 = vand.u32 2147483647, %v295
    %v1261 = vand.u32 %v1260, 8388607
    %v1262 = vor.u32 %v1261, 8388608
    %v1263 = vsub.s32 0, %v1262
    %v1264 = vadd.s32 %v1259, 1
    %vm1265 = vcmp.gt.s32.totalorder %v1264, 0
    %v1266 = vsel %vm1265, %v1264, 0
    %v1267 = vshrl.u32 %v1266, 5
    %v1268 = vand.u32 %v1266, 31
    %v1269 = vsub.s32 32, %v1268
    %v1270 = vshrl.u32 683565275, %v1269
    %v1271 = vshll.u32 683565275, %v1268
    %v1272 = vshrl.u32 2475754826, %v1269
    %v1273 = vor.u32 %v1271, %v1272
    %v1274 = vshll.u32 2475754826, %v1268
    %v1275 = vshrl.u32 2131351028, %v1269
    %v1276 = vor.u32 %v1274, %v1275
    %v1277 = vshll.u32 2131351028, %v1268
    %v1278 = vshrl.u32 2102212464, %v1269
    %v1279 = vor.u32 %v1277, %v1278
    %v1280 = vshll.u32 2102212464, %v1268
    %v1281 = vshrl.u32 920167782, %v1269
    %v1282 = vor.u32 %v1280, %v1281
    %v1283 = vshll.u32 920167782, %v1268
    %v1284 = vshrl.u32 1326507024, %v1269
    %v1285 = vor.u32 %v1283, %v1284
    %vm1286 = vcmp.lt.s32.totalorder %v1267, 1
    %vm1287 = vcmp.lt.s32.totalorder %v1267, 2
    %vm1288 = vcmp.lt.s32.totalorder %v1267, 3
    %vm1289 = vcmp.lt.s32.totalorder %v1267, 4
    %v1290 = vsel %vm1286, %v1270, %v1273
    %v1291 = vsel %vm1289, %v1279, 2102212464
    %v1292 = vsel %vm1288, %v1276, %v1291
    %v1293 = vsel %vm1287, %v1290, %v1292
    %v1294 = vsel %vm1286, %v1273, %v1276
    %v1295 = vsel %vm1289, %v1282, 920167782
    %v1296 = vsel %vm1288, %v1279, %v1295
    %v1297 = vsel %vm1287, %v1294, %v1296
    %v1298 = vsel %vm1286, %v1276, %v1279
    %v1299 = vsel %vm1289, %v1285, 1326507024
    %v1300 = vsel %vm1288, %v1282, %v1299
    %v1301 = vsel %vm1287, %v1298, %v1300
    %v1302 = vshll.u32 %v1262, 8
    %v1303 = vand.u32 %v1302, 65535
    %v1304 = vshrl.u32 %v1302, 16
    %v1305 = vand.u32 %v1301, 65535
    %v1306 = vshrl.u32 %v1301, 16
    %v1307 = vmul.u32 %v1303, %v1305
    %v1308 = vmul.u32 %v1303, %v1306
    %v1309 = vmul.u32 %v1304, %v1305
    %v1310 = vmul.u32 %v1304, %v1306
    %v1311 = vshll.u32 %v1308, 16
    %v1312 = vshrl.u32 %v1308, 16
    %v1313 = vshll.u32 %v1309, 16
    %v1314 = vshrl.u32 %v1309, 16
    %vm1315 = vc.u32 %v1307, %v1311
    %v1316 = vsel %vm1315, 1, 0
    %v1317 = vadd.s32 %v1307, %v1311
    %v1318 = vadd.s32 %v1310, %v1316
    %vm1319 = vc.u32 %v1317, %v1313
    %v1320 = vsel %vm1319, 1, 0
    %v1321 = vadd.s32 %v1317, %v1313
    %v1322 = vadd.s32 %v1318, %v1320
    %v1323 = vadd.s32 %v1322, %v1312
    %v1324 = vadd.s32 %v1323, %v1314
    %v1325 = vand.u32 %v1302, 65535
    %v1326 = vshrl.u32 %v1302, 16
    %v1327 = vand.u32 %v1297, 65535
    %v1328 = vshrl.u32 %v1297, 16
    %v1329 = vmul.u32 %v1325, %v1327
    %v1330 = vmul.u32 %v1325, %v1328
    %v1331 = vmul.u32 %v1326, %v1327
    %v1332 = vmul.u32 %v1326, %v1328
    %v1333 = vshll.u32 %v1330, 16
    %v1334 = vshrl.u32 %v1330, 16
    %v1335 = vshll.u32 %v1331, 16
    %v1336 = vshrl.u32 %v1331, 16
    %vm1337 = vc.u32 %v1329, %v1333
    %v1338 = vsel %vm1337, 1, 0
    %v1339 = vadd.s32 %v1329, %v1333
    %v1340 = vadd.s32 %v1332, %v1338
    %vm1341 = vc.u32 %v1339, %v1335
    %v1342 = vsel %vm1341, 1, 0
    %v1343 = vadd.s32 %v1339, %v1335
    %v1344 = vadd.s32 %v1340, %v1342
    %v1345 = vadd.s32 %v1344, %v1334
    %v1346 = vadd.s32 %v1345, %v1336
    %v1347 = vmul.u32 %v1302, %v1293
    %v1348 = vadd.s32 %v1324, %v1343
    %vm1349 = vc.u32 %v1324, %v1343
    %v1350 = vadd.s32 %v1346, 1
    %v1351 = vsel %vm1349, %v1350, %v1346
    %v1352 = vadd.s32 %v1347, %v1351
    %v1353 = vadd.s32 %v1352, 536870912
    %v1354 = vshrl.u32 %v1353, 30
    %v1355 = vshll.u32 %v1354, 30
    %v1356 = vsub.s32 %v1352, %v1355
    %vm1357 = vcmp.lt.s32.totalorder %v1356, 0
    %v1358 = vsub.s32 0, %v1356
    %v1359 = vsel %vm1357, %v1358, %v1356
    %v1360 = vclz %v1359
    %v1361 = vsub.s32 %v1360, 2
    %vm1362 = vcmp.gt.s32.totalorder 0, %v1361
    %v1363 = vsel %vm1362, 0, %v1361
    %v1364 = vsub.s32 32, %v1363
    %v1365 = vshll.u32 %v1356, %v1363
    %v1366 = vshrl.u32 %v1348, %v1364
    %v1367 = vor.u32 %v1365, %v1366
    %v1368 = vsub.s32 4294967266, %v1363
    %v1369 = vadd.s32 %v1368, 127
    %v1370 = vshll.u32 %v1369, 23
    %v1371 = vor.u32 4788187, %v1370
    %v1372 = vand.u32 2147483647, %v1371
    %v1374 = vcvt.s32.f32 %v1367
    %v1375 = vmul.f32 %v1374, %v1372
    %v1376 = vxor.u32 %v1375, 2147483648
    %v1377 = vsel %vm1256, %v1376, %v1375
    %v1378 = vsub.s32 4, %v1354
    %v1379 = vsel %vm1256, %v1378, %v1354
    %v1380 = vsel %vm1255, %v295, %v1377
    %v1381 = vsel %vm1255, 0, %v1379
    %v1382 = vmul.f32 %v1380, %v1380
    %v1383 = vmul.f32 %v1382, -0.001358992
    %v1384 = vadd.f32 %v1383, 0.041655596
    %v1385 = vmul.f32 %v1382, %v1384
    %v1386 = vadd.f32 %v1385, -0.4999988
    %v1387 = vmul.f32 %v1382, %v1386
    %v1388 = vadd.f32 1.0, %v1387
    %v1389 = vmul.f32 %v1380, %v1380
    %v1390 = vmul.f32 %v1389, -0.00019511016
    %v1391 = vadd.f32 %v1390, 0.008332121
    %v1392 = vmul.f32 %v1389, %v1391
    %v1393 = vadd.f32 %v1392, -0.16666654
    %v1394 = vmul.f32 %v1389, %v1393
    %v1395 = vadd.f32 %v1394, 1.0
    %v1396 = vmul.f32 %v1395, %v1380
    %vm1397 = vweird.f32 %v295
    %v1398 = vadd.s32 %v1381, 3
    %v1399 = vand.u32 %v1398, 3
    %vm1400 = vcmp.lt.s32.totalorder %v1399, 2
    %vm1401 = vcmp.eq.s32.totalorder %v1399, 0
    %v1402 = vxor.u32 %v1396, 2147483648
    %v1403 = vsel %vm1401, %v1388, %v1402
    %vm1404 = vcmp.eq.s32.totalorder %v1399, 2
    %v1405 = vxor.u32 %v1388, 2147483648
    %v1406 = vsel %vm1404, %v1405, %v1396
    %v1407 = vsel %vm1400, %v1403, %v1406
    %v1408 = vsel %vm1397, nan, %v1407
    %v1409 = vand.u32 2147483647, %v298
    %vm1410 = vcmp.le.f32.partialorder %v1409, 0.7853982
    %vm1411 = vcmp.lt.s32.totalorder %v298, 0
    %v1412 = vand.u32 %v298, 2139095040
    %v1413 = vshrl.u32 %v1412, 23
    %v1414 = vsub.s32 %v1413, 127
    %v1415 = vand.u32 2147483647, %v298
    %v1416 = vand.u32 %v1415, 8388607
    %v1417 = vor.u32 %v1416, 8388608
    %v1418 = vsub.s32 0, %v1417
    %v1419 = vadd.s32 %v1414, 1
    %vm1420 = vcmp.gt.s32.totalorder %v1419, 0
    %v1421 = vsel %vm1420, %v1419, 0
    %v1422 = vshrl.u32 %v1421, 5
    %v1423 = vand.u32 %v1421, 31
    %v1424 = vsub.s32 32, %v1423
    %v1425 = vshrl.u32 683565275, %v1424
    %v1426 = vshll.u32 683565275, %v1423
    %v1427 = vshrl.u32 2475754826, %v1424
    %v1428 = vor.u32 %v1426, %v1427
    %v1429 = vshll.u32 2475754826, %v1423
    %v1430 = vshrl.u32 2131351028, %v1424
    %v1431 = vor.u32 %v1429, %v1430
    %v1432 = vshll.u32 2131351028, %v1423
    %v1433 = vshrl.u32 2102212464, %v1424
    %v1434 = vor.u32 %v1432, %v1433
    %v1435 = vshll.u32 2102212464, %v1423
    %v1436 = vshrl.u32 920167782, %v1424
    %v1437 = vor.u32 %v1435, %v1436
    %v1438 = vshll.u32 920167782, %v1423
    %v1439 = vshrl.u32 1326507024, %v1424
    %v1440 = vor.u32 %v1438, %v1439
    %vm1441 = vcmp.lt.s32.totalorder %v1422, 1
    %vm1442 = vcmp.lt.s32.totalorder %v1422, 2
    %vm1443 = vcmp.lt.s32.totalorder %v1422, 3
    %vm1444 = vcmp.lt.s32.totalorder %v1422, 4
    %v1445 = vsel %vm1441, %v1425, %v1428
    %v1446 = vsel %vm1444, %v1434, 2102212464
    %v1447 = vsel %vm1443, %v1431, %v1446
    %v1448 = vsel %vm1442, %v1445, %v1447
    %v1449 = vsel %vm1441, %v1428, %v1431
    %v1450 = vsel %vm1444, %v1437, 920167782
    %v1451 = vsel %vm1443, %v1434, %v1450
    %v1452 = vsel %vm1442, %v1449, %v1451
    %v1453 = vsel %vm1441, %v1431, %v1434
    %v1454 = vsel %vm1444, %v1440, 1326507024
    %v1455 = vsel %vm1443, %v1437, %v1454
    %v1456 = vsel %vm1442, %v1453, %v1455
    %v1457 = vshll.u32 %v1417, 8
    %v1458 = vand.u32 %v1457, 65535
    %v1459 = vshrl.u32 %v1457, 16
    %v1460 = vand.u32 %v1456, 65535
    %v1461 = vshrl.u32 %v1456, 16
    %v1462 = vmul.u32 %v1458, %v1460
    %v1463 = vmul.u32 %v1458, %v1461
    %v1464 = vmul.u32 %v1459, %v1460
    %v1465 = vmul.u32 %v1459, %v1461
    %v1466 = vshll.u32 %v1463, 16
    %v1467 = vshrl.u32 %v1463, 16
    %v1468 = vshll.u32 %v1464, 16
    %v1469 = vshrl.u32 %v1464, 16
    %vm1470 = vc.u32 %v1462, %v1466
    %v1471 = vsel %vm1470, 1, 0
    %v1472 = vadd.s32 %v1462, %v1466
    %v1473 = vadd.s32 %v1465, %v1471
    %vm1474 = vc.u32 %v1472, %v1468
    %v1475 = vsel %vm1474, 1, 0
    %v1476 = vadd.s32 %v1472, %v1468
    %v1477 = vadd.s32 %v1473, %v1475
    %v1478 = vadd.s32 %v1477, %v1467
    %v1479 = vadd.s32 %v1478, %v1469
    %v1480 = vand.u32 %v1457, 65535
    %v1481 = vshrl.u32 %v1457, 16
    %v1482 = vand.u32 %v1452, 65535
    %v1483 = vshrl.u32 %v1452, 16
    %v1484 = vmul.u32 %v1480, %v1482
    %v1485 = vmul.u32 %v1480, %v1483
    %v1486 = vmul.u32 %v1481, %v1482
    %v1487 = vmul.u32 %v1481, %v1483
    %v1488 = vshll.u32 %v1485, 16
    %v1489 = vshrl.u32 %v1485, 16
    %v1490 = vshll.u32 %v1486, 16
    %v1491 = vshrl.u32 %v1486, 16
    %vm1492 = vc.u32 %v1484, %v1488
    %v1493 = vsel %vm1492, 1, 0
    %v1494 = vadd.s32 %v1484, %v1488
    %v1495 = vadd.s32 %v1487, %v1493
    %vm1496 = vc.u32 %v1494, %v1490
    %v1497 = vsel %vm1496, 1, 0
    %v1498 = vadd.s32 %v1494, %v1490
    %v1499 = vadd.s32 %v1495, %v1497
    %v1500 = vadd.s32 %v1499, %v1489
    %v1501 = vadd.s32 %v1500, %v1491
    %v1502 = vmul.u32 %v1457, %v1448
    %v1503 = vadd.s32 %v1479, %v1498
    %vm1504 = vc.u32 %v1479, %v1498
    %v1505 = vadd.s32 %v1501, 1
    %v1506 = vsel %vm1504, %v1505, %v1501
    %v1507 = vadd.s32 %v1502, %v1506
    %v1508 = vadd.s32 %v1507, 536870912
    %v1509 = vshrl.u32 %v1508, 30
    %v1510 = vshll.u32 %v1509, 30
    %v1511 = vsub.s32 %v1507, %v1510
    %vm1512 = vcmp.lt.s32.totalorder %v1511, 0
    %v1513 = vsub.s32 0, %v1511
    %v1514 = vsel %vm1512, %v1513, %v1511
    %v1515 = vclz %v1514
    %v1516 = vsub.s32 %v1515, 2
    %vm1517 = vcmp.gt.s32.totalorder 0, %v1516
    %v1518 = vsel %vm1517, 0, %v1516
    %v1519 = vsub.s32 32, %v1518
    %v1520 = vshll.u32 %v1511, %v1518
    %v1521 = vshrl.u32 %v1503, %v1519
    %v1522 = vor.u32 %v1520, %v1521
    %v1523 = vsub.s32 4294967266, %v1518
    %v1524 = vadd.s32 %v1523, 127
    %v1525 = vshll.u32 %v1524, 23
    %v1526 = vor.u32 4788187, %v1525
    %v1527 = vand.u32 2147483647, %v1526
    %v1529 = vcvt.s32.f32 %v1522
    %v1530 = vmul.f32 %v1529, %v1527
    %v1531 = vxor.u32 %v1530, 2147483648
    %v1532 = vsel %vm1411, %v1531, %v1530
    %v1533 = vsub.s32 4, %v1509
    %v1534 = vsel %vm1411, %v1533, %v1509
    %v1535 = vsel %vm1410, %v298, %v1532
    %v1536 = vsel %vm1410, 0, %v1534
    %v1537 = vmul.f32 %v1535, %v1535
    %v1538 = vmul.f32 %v1537, -0.001358992
    %v1539 = vadd.f32 %v1538, 0.041655596
    %v1540 = vmul.f32 %v1537, %v1539
    %v1541 = vadd.f32 %v1540, -0.4999988
    %v1542 = vmul.f32 %v1537, %v1541
    %v1543 = vadd.f32 1.0, %v1542
    %v1544 = vmul.f32 %v1535, %v1535
    %v1545 = vmul.f32 %v1544, -0.00019511016
    %v1546 = vadd.f32 %v1545, 0.008332121
    %v1547 = vmul.f32 %v1544, %v1546
    %v1548 = vadd.f32 %v1547, -0.16666654
    %v1549 = vmul.f32 %v1544, %v1548
    %v1550 = vadd.f32 %v1549, 1.0
    %v1551 = vmul.f32 %v1550, %v1535
    %vm1552 = vweird.f32 %v298
    %v1553 = vadd.s32 %v1536, 3
    %v1554 = vand.u32 %v1553, 3
    %vm1555 = vcmp.lt.s32.totalorder %v1554, 2
    %vm1556 = vcmp.eq.s32.totalorder %v1554, 0
    %v1557 = vxor.u32 %v1551, 2147483648
    %v1558 = vsel %vm1556, %v1543, %v1557
    %vm1559 = vcmp.eq.s32.totalorder %v1554, 2
    %v1560 = vxor.u32 %v1543, 2147483648
    %v1561 = vsel %vm1559, %v1560, %v1551
    %v1562 = vsel %vm1555, %v1558, %v1561
    %v1563 = vsel %vm1552, nan, %v1562
    %v1564 = vand.u32 2147483647, %v301
    %vm1565 = vcmp.le.f32.partialorder %v1564, 0.7853982
    %vm1566 = vcmp.lt.s32.totalorder %v301, 0
    %v1567 = vand.u32 %v301, 2139095040
    %v1568 = vshrl.u32 %v1567, 23
    %v1569 = vsub.s32 %v1568, 127
    %v1570 = vand.u32 2147483647, %v301
    %v1571 = vand.u32 %v1570, 8388607
    %v1572 = vor.u32 %v1571, 8388608
    %v1573 = vsub.s32 0, %v1572
    %v1574 = vadd.s32 %v1569, 1
    %vm1575 = vcmp.gt.s32.totalorder %v1574, 0
    %v1576 = vsel %vm1575, %v1574, 0
    %v1577 = vshrl.u32 %v1576, 5
    %v1578 = vand.u32 %v1576, 31
    %v1579 = vsub.s32 32, %v1578
    %v1580 = vshrl.u32 683565275, %v1579
    %v1581 = vshll.u32 683565275, %v1578
    %v1582 = vshrl.u32 2475754826, %v1579
    %v1583 = vor.u32 %v1581, %v1582
    %v1584 = vshll.u32 2475754826, %v1578
    %v1585 = vshrl.u32 2131351028, %v1579
    %v1586 = vor.u32 %v1584, %v1585
    %v1587 = vshll.u32 2131351028, %v1578
    %v1588 = vshrl.u32 2102212464, %v1579
    %v1589 = vor.u32 %v1587, %v1588
    %v1590 = vshll.u32 2102212464, %v1578
    %v1591 = vshrl.u32 920167782, %v1579
    %v1592 = vor.u32 %v1590, %v1591
    %v1593 = vshll.u32 920167782, %v1578
    %v1594 = vshrl.u32 1326507024, %v1579
    %v1595 = vor.u32 %v1593, %v1594
    %vm1596 = vcmp.lt.s32.totalorder %v1577, 1
    %vm1597 = vcmp.lt.s32.totalorder %v1577, 2
    %vm1598 = vcmp.lt.s32.totalorder %v1577, 3
    %vm1599 = vcmp.lt.s32.totalorder %v1577, 4
    %v1600 = vsel %vm1596, %v1580, %v1583
    %v1601 = vsel %vm1599, %v1589, 2102212464
    %v1602 = vsel %vm1598, %v1586, %v1601
    %v1603 = vsel %vm1597, %v1600, %v1602
    %v1604 = vsel %vm1596, %v1583, %v1586
    %v1605 = vsel %vm1599, %v1592, 920167782
    %v1606 = vsel %vm1598, %v1589, %v1605
    %v1607 = vsel %vm1597, %v1604, %v1606
    %v1608 = vsel %vm1596, %v1586, %v1589
    %v1609 = vsel %vm1599, %v1595, 1326507024
    %v1610 = vsel %vm1598, %v1592, %v1609
    %v1611 = vsel %vm1597, %v1608, %v1610
    %v1612 = vshll.u32 %v1572, 8
    %v1613 = vand.u32 %v1612, 65535
    %v1614 = vshrl.u32 %v1612, 16
    %v1615 = vand.u32 %v1611, 65535
    %v1616 = vshrl.u32 %v1611, 16
    %v1617 = vmul.u32 %v1613, %v1615
    %v1618 = vmul.u32 %v1613, %v1616
    %v1619 = vmul.u32 %v1614, %v1615
    %v1620 = vmul.u32 %v1614, %v1616
    %v1621 = vshll.u32 %v1618, 16
    %v1622 = vshrl.u32 %v1618, 16
    %v1623 = vshll.u32 %v1619, 16
    %v1624 = vshrl.u32 %v1619, 16
    %vm1625 = vc.u32 %v1617, %v1621
    %v1626 = vsel %vm1625, 1, 0
    %v1627 = vadd.s32 %v1617, %v1621
    %v1628 = vadd.s32 %v1620, %v1626
    %vm1629 = vc.u32 %v1627, %v1623
    %v1630 = vsel %vm1629, 1, 0
    %v1631 = vadd.s32 %v1627, %v1623
    %v1632 = vadd.s32 %v1628, %v1630
    %v1633 = vadd.s32 %v1632, %v1622
    %v1634 = vadd.s32 %v1633, %v1624
    %v1635 = vand.u32 %v1612, 65535
    %v1636 = vshrl.u32 %v1612, 16
    %v1637 = vand.u32 %v1607, 65535
    %v1638 = vshrl.u32 %v1607, 16
    %v1639 = vmul.u32 %v1635, %v1637
    %v1640 = vmul.u32 %v1635, %v1638
    %v1641 = vmul.u32 %v1636, %v1637
    %v1642 = vmul.u32 %v1636, %v1638
    %v1643 = vshll.u32 %v1640, 16
    %v1644 = vshrl.u32 %v1640, 16
    %v1645 = vshll.u32 %v1641, 16
    %v1646 = vshrl.u32 %v1641, 16
    %vm1647 = vc.u32 %v1639, %v1643
    %v1648 = vsel %vm1647, 1, 0
    %v1649 = vadd.s32 %v1639, %v1643
    %v1650 = vadd.s32 %v1642, %v1648
    %vm1651 = vc.u32 %v1649, %v1645
    %v1652 = vsel %vm1651, 1, 0
    %v1653 = vadd.s32 %v1649, %v1645
    %v1654 = vadd.s32 %v1650, %v1652
    %v1655 = vadd.s32 %v1654, %v1644
    %v1656 = vadd.s32 %v1655, %v1646
    %v1657 = vmul.u32 %v1612, %v1603
    %v1658 = vadd.s32 %v1634, %v1653
    %vm1659 = vc.u32 %v1634, %v1653
    %v1660 = vadd.s32 %v1656, 1
    %v1661 = vsel %vm1659, %v1660, %v1656
    %v1662 = vadd.s32 %v1657, %v1661
    %v1663 = vadd.s32 %v1662, 536870912
    %v1664 = vshrl.u32 %v1663, 30
    %v1665 = vshll.u32 %v1664, 30
    %v1666 = vsub.s32 %v1662, %v1665
    %vm1667 = vcmp.lt.s32.totalorder %v1666, 0
    %v1668 = vsub.s32 0, %v1666
    %v1669 = vsel %vm1667, %v1668, %v1666
    %v1670 = vclz %v1669
    %v1671 = vsub.s32 %v1670, 2
    %vm1672 = vcmp.gt.s32.totalorder 0, %v1671
    %v1673 = vsel %vm1672, 0, %v1671
    %v1674 = vsub.s32 32, %v1673
    %v1675 = vshll.u32 %v1666, %v1673
    %v1676 = vshrl.u32 %v1658, %v1674
    %v1677 = vor.u32 %v1675, %v1676
    %v1678 = vsub.s32 4294967266, %v1673
    %v1679 = vadd.s32 %v1678, 127
    %v1680 = vshll.u32 %v1679, 23
    %v1681 = vor.u32 4788187, %v1680
    %v1682 = vand.u32 2147483647, %v1681
    %v1684 = vcvt.s32.f32 %v1677
    %v1685 = vmul.f32 %v1684, %v1682
    %v1686 = vxor.u32 %v1685, 2147483648
    %v1687 = vsel %vm1566, %v1686, %v1685
    %v1688 = vsub.s32 4, %v1664
    %v1689 = vsel %vm1566, %v1688, %v1664
    %v1690 = vsel %vm1565, %v301, %v1687
    %v1691 = vsel %vm1565, 0, %v1689
    %v1692 = vmul.f32 %v1690, %v1690
    %v1693 = vmul.f32 %v1692, -0.001358992
    %v1694 = vadd.f32 %v1693, 0.041655596
    %v1695 = vmul.f32 %v1692, %v1694
    %v1696 = vadd.f32 %v1695, -0.4999988
    %v1697 = vmul.f32 %v1692, %v1696
    %v1698 = vadd.f32 1.0, %v1697
    %v1699 = vmul.f32 %v1690, %v1690
    %v1700 = vmul.f32 %v1699, -0.00019511016
    %v1701 = vadd.f32 %v1700, 0.008332121
    %v1702 = vmul.f32 %v1699, %v1701
    %v1703 = vadd.f32 %v1702, -0.16666654
    %v1704 = vmul.f32 %v1699, %v1703
    %v1705 = vadd.f32 %v1704, 1.0
    %v1706 = vmul.f32 %v1705, %v1690
    %vm1707 = vweird.f32 %v301
    %v1708 = vadd.s32 %v1691, 3
    %v1709 = vand.u32 %v1708, 3
    %vm1710 = vcmp.lt.s32.totalorder %v1709, 2
    %vm1711 = vcmp.eq.s32.totalorder %v1709, 0
    %v1712 = vxor.u32 %v1706, 2147483648
    %v1713 = vsel %vm1711, %v1698, %v1712
    %vm1714 = vcmp.eq.s32.totalorder %v1709, 2
    %v1715 = vxor.u32 %v1698, 2147483648
    %v1716 = vsel %vm1714, %v1715, %v1706
    %v1717 = vsel %vm1710, %v1713, %v1716
    %v1718 = vsel %vm1707, nan, %v1717
    %v1719 = vand.u32 2147483647, %v304
    %vm1720 = vcmp.le.f32.partialorder %v1719, 0.7853982
    %vm1721 = vcmp.lt.s32.totalorder %v304, 0
    %v1722 = vand.u32 %v304, 2139095040
    %v1723 = vshrl.u32 %v1722, 23
    %v1724 = vsub.s32 %v1723, 127
    %v1725 = vand.u32 2147483647, %v304
    %v1726 = vand.u32 %v1725, 8388607
    %v1727 = vor.u32 %v1726, 8388608
    %v1728 = vsub.s32 0, %v1727
    %v1729 = vadd.s32 %v1724, 1
    %vm1730 = vcmp.gt.s32.totalorder %v1729, 0
    %v1731 = vsel %vm1730, %v1729, 0
    %v1732 = vshrl.u32 %v1731, 5
    %v1733 = vand.u32 %v1731, 31
    %v1734 = vsub.s32 32, %v1733
    %v1735 = vshrl.u32 683565275, %v1734
    %v1736 = vshll.u32 683565275, %v1733
    %v1737 = vshrl.u32 2475754826, %v1734
    %v1738 = vor.u32 %v1736, %v1737
    %v1739 = vshll.u32 2475754826, %v1733
    %v1740 = vshrl.u32 2131351028, %v1734
    %v1741 = vor.u32 %v1739, %v1740
    %v1742 = vshll.u32 2131351028, %v1733
    %v1743 = vshrl.u32 2102212464, %v1734
    %v1744 = vor.u32 %v1742, %v1743
    %v1745 = vshll.u32 2102212464, %v1733
    %v1746 = vshrl.u32 920167782, %v1734
    %v1747 = vor.u32 %v1745, %v1746
    %v1748 = vshll.u32 920167782, %v1733
    %v1749 = vshrl.u32 1326507024, %v1734
    %v1750 = vor.u32 %v1748, %v1749
    %vm1751 = vcmp.lt.s32.totalorder %v1732, 1
    %vm1752 = vcmp.lt.s32.totalorder %v1732, 2
    %vm1753 = vcmp.lt.s32.totalorder %v1732, 3
    %vm1754 = vcmp.lt.s32.totalorder %v1732, 4
    %v1755 = vsel %vm1751, %v1735, %v1738
    %v1756 = vsel %vm1754, %v1744, 2102212464
    %v1757 = vsel %vm1753, %v1741, %v1756
    %v1758 = vsel %vm1752, %v1755, %v1757
    %v1759 = vsel %vm1751, %v1738, %v1741
    %v1760 = vsel %vm1754, %v1747, 920167782
    %v1761 = vsel %vm1753, %v1744, %v1760
    %v1762 = vsel %vm1752, %v1759, %v1761
    %v1763 = vsel %vm1751, %v1741, %v1744
    %v1764 = vsel %vm1754, %v1750, 1326507024
    %v1765 = vsel %vm1753, %v1747, %v1764
    %v1766 = vsel %vm1752, %v1763, %v1765
    %v1767 = vshll.u32 %v1727, 8
    %v1768 = vand.u32 %v1767, 65535
    %v1769 = vshrl.u32 %v1767, 16
    %v1770 = vand.u32 %v1766, 65535
    %v1771 = vshrl.u32 %v1766, 16
    %v1772 = vmul.u32 %v1768, %v1770
    %v1773 = vmul.u32 %v1768, %v1771
    %v1774 = vmul.u32 %v1769, %v1770
    %v1775 = vmul.u32 %v1769, %v1771
    %v1776 = vshll.u32 %v1773, 16
    %v1777 = vshrl.u32 %v1773, 16
    %v1778 = vshll.u32 %v1774, 16
    %v1779 = vshrl.u32 %v1774, 16
    %vm1780 = vc.u32 %v1772, %v1776
    %v1781 = vsel %vm1780, 1, 0
    %v1782 = vadd.s32 %v1772, %v1776
    %v1783 = vadd.s32 %v1775, %v1781
    %vm1784 = vc.u32 %v1782, %v1778
    %v1785 = vsel %vm1784, 1, 0
    %v1786 = vadd.s32 %v1782, %v1778
    %v1787 = vadd.s32 %v1783, %v1785
    %v1788 = vadd.s32 %v1787, %v1777
    %v1789 = vadd.s32 %v1788, %v1779
    %v1790 = vand.u32 %v1767, 65535
    %v1791 = vshrl.u32 %v1767, 16
    %v1792 = vand.u32 %v1762, 65535
    %v1793 = vshrl.u32 %v1762, 16
    %v1794 = vmul.u32 %v1790, %v1792
    %v1795 = vmul.u32 %v1790, %v1793
    %v1796 = vmul.u32 %v1791, %v1792
    %v1797 = vmul.u32 %v1791, %v1793
    %v1798 = vshll.u32 %v1795, 16
    %v1799 = vshrl.u32 %v1795, 16
    %v1800 = vshll.u32 %v1796, 16
    %v1801 = vshrl.u32 %v1796, 16
    %vm1802 = vc.u32 %v1794, %v1798
    %v1803 = vsel %vm1802, 1, 0
    %v1804 = vadd.s32 %v1794, %v1798
    %v1805 = vadd.s32 %v1797, %v1803
    %vm1806 = vc.u32 %v1804, %v1800
    %v1807 = vsel %vm1806, 1, 0
    %v1808 = vadd.s32 %v1804, %v1800
    %v1809 = vadd.s32 %v1805, %v1807
    %v1810 = vadd.s32 %v1809, %v1799
    %v1811 = vadd.s32 %v1810, %v1801
    %v1812 = vmul.u32 %v1767, %v1758
    %v1813 = vadd.s32 %v1789, %v1808
    %vm1814 = vc.u32 %v1789, %v1808
    %v1815 = vadd.s32 %v1811, 1
    %v1816 = vsel %vm1814, %v1815, %v1811
    %v1817 = vadd.s32 %v1812, %v1816
    %v1818 = vadd.s32 %v1817, 536870912
    %v1819 = vshrl.u32 %v1818, 30
    %v1820 = vshll.u32 %v1819, 30
    %v1821 = vsub.s32 %v1817, %v1820
    %vm1822 = vcmp.lt.s32.totalorder %v1821, 0
    %v1823 = vsub.s32 0, %v1821
    %v1824 = vsel %vm1822, %v1823, %v1821
    %v1825 = vclz %v1824
    %v1826 = vsub.s32 %v1825, 2
    %vm1827 = vcmp.gt.s32.totalorder 0, %v1826
    %v1828 = vsel %vm1827, 0, %v1826
    %v1829 = vsub.s32 32, %v1828
    %v1830 = vshll.u32 %v1821, %v1828
    %v1831 = vshrl.u32 %v1813, %v1829
    %v1832 = vor.u32 %v1830, %v1831
    %v1833 = vsub.s32 4294967266, %v1828
    %v1834 = vadd.s32 %v1833, 127
    %v1835 = vshll.u32 %v1834, 23
    %v1836 = vor.u32 4788187, %v1835
    %v1837 = vand.u32 2147483647, %v1836
    %v1839 = vcvt.s32.f32 %v1832
    %v1840 = vmul.f32 %v1839, %v1837
    %v1841 = vxor.u32 %v1840, 2147483648
    %v1842 = vsel %vm1721, %v1841, %v1840
    %v1843 = vsub.s32 4, %v1819
    %v1844 = vsel %vm1721, %v1843, %v1819
    %v1845 = vsel %vm1720, %v304, %v1842
    %v1846 = vsel %vm1720, 0, %v1844
    %v1847 = vmul.f32 %v1845, %v1845
    %v1848 = vmul.f32 %v1847, -0.001358992
    %v1849 = vadd.f32 %v1848, 0.041655596
    %v1850 = vmul.f32 %v1847, %v1849
    %v1851 = vadd.f32 %v1850, -0.4999988
    %v1852 = vmul.f32 %v1847, %v1851
    %v1853 = vadd.f32 1.0, %v1852
    %v1854 = vmul.f32 %v1845, %v1845
    %v1855 = vmul.f32 %v1854, -0.00019511016
    %v1856 = vadd.f32 %v1855, 0.008332121
    %v1857 = vmul.f32 %v1854, %v1856
    %v1858 = vadd.f32 %v1857, -0.16666654
    %v1859 = vmul.f32 %v1854, %v1858
    %v1860 = vadd.f32 %v1859, 1.0
    %v1861 = vmul.f32 %v1860, %v1845
    %vm1862 = vweird.f32 %v304
    %v1863 = vadd.s32 %v1846, 3
    %v1864 = vand.u32 %v1863, 3
    %vm1865 = vcmp.lt.s32.totalorder %v1864, 2
    %vm1866 = vcmp.eq.s32.totalorder %v1864, 0
    %v1867 = vxor.u32 %v1861, 2147483648
    %v1868 = vsel %vm1866, %v1853, %v1867
    %vm1869 = vcmp.eq.s32.totalorder %v1864, 2
    %v1870 = vxor.u32 %v1853, 2147483648
    %v1871 = vsel %vm1869, %v1870, %v1861
    %v1872 = vsel %vm1865, %v1868, %v1871
    %v1873 = vsel %vm1862, nan, %v1872
    %v1874 = vand.u32 2147483647, %v307
    %vm1875 = vcmp.le.f32.partialorder %v1874, 0.7853982
    %vm1876 = vcmp.lt.s32.totalorder %v307, 0
    %v1877 = vand.u32 %v307, 2139095040
    %v1878 = vshrl.u32 %v1877, 23
    %v1879 = vsub.s32 %v1878, 127
    %v1880 = vand.u32 2147483647, %v307
    %v1881 = vand.u32 %v1880, 8388607
    %v1882 = vor.u32 %v1881, 8388608
    %v1883 = vsub.s32 0, %v1882
    %v1884 = vadd.s32 %v1879, 1
    %vm1885 = vcmp.gt.s32.totalorder %v1884, 0
    %v1886 = vsel %vm1885, %v1884, 0
    %v1887 = vshrl.u32 %v1886, 5
    %v1888 = vand.u32 %v1886, 31
    %v1889 = vsub.s32 32, %v1888
    %v1890 = vshrl.u32 683565275, %v1889
    %v1891 = vshll.u32 683565275, %v1888
    %v1892 = vshrl.u32 2475754826, %v1889
    %v1893 = vor.u32 %v1891, %v1892
    %v1894 = vshll.u32 2475754826, %v1888
    %v1895 = vshrl.u32 2131351028, %v1889
    %v1896 = vor.u32 %v1894, %v1895
    %v1897 = vshll.u32 2131351028, %v1888
    %v1898 = vshrl.u32 2102212464, %v1889
    %v1899 = vor.u32 %v1897, %v1898
    %v1900 = vshll.u32 2102212464, %v1888
    %v1901 = vshrl.u32 920167782, %v1889
    %v1902 = vor.u32 %v1900, %v1901
    %v1903 = vshll.u32 920167782, %v1888
    %v1904 = vshrl.u32 1326507024, %v1889
    %v1905 = vor.u32 %v1903, %v1904
    %vm1906 = vcmp.lt.s32.totalorder %v1887, 1
    %vm1907 = vcmp.lt.s32.totalorder %v1887, 2
    %vm1908 = vcmp.lt.s32.totalorder %v1887, 3
    %vm1909 = vcmp.lt.s32.totalorder %v1887, 4
    %v1910 = vsel %vm1906, %v1890, %v1893
    %v1911 = vsel %vm1909, %v1899, 2102212464
    %v1912 = vsel %vm1908, %v1896, %v1911
    %v1913 = vsel %vm1907, %v1910, %v1912
    %v1914 = vsel %vm1906, %v1893, %v1896
    %v1915 = vsel %vm1909, %v1902, 920167782
    %v1916 = vsel %vm1908, %v1899, %v1915
    %v1917 = vsel %vm1907, %v1914, %v1916
    %v1918 = vsel %vm1906, %v1896, %v1899
    %v1919 = vsel %vm1909, %v1905, 1326507024
    %v1920 = vsel %vm1908, %v1902, %v1919
    %v1921 = vsel %vm1907, %v1918, %v1920
    %v1922 = vshll.u32 %v1882, 8
    %v1923 = vand.u32 %v1922, 65535
    %v1924 = vshrl.u32 %v1922, 16
    %v1925 = vand.u32 %v1921, 65535
    %v1926 = vshrl.u32 %v1921, 16
    %v1927 = vmul.u32 %v1923, %v1925
    %v1928 = vmul.u32 %v1923, %v1926
    %v1929 = vmul.u32 %v1924, %v1925
    %v1930 = vmul.u32 %v1924, %v1926
    %v1931 = vshll.u32 %v1928, 16
    %v1932 = vshrl.u32 %v1928, 16
    %v1933 = vshll.u32 %v1929, 16
    %v1934 = vshrl.u32 %v1929, 16
    %vm1935 = vc.u32 %v1927, %v1931
    %v1936 = vsel %vm1935, 1, 0
    %v1937 = vadd.s32 %v1927, %v1931
    %v1938 = vadd.s32 %v1930, %v1936
    %vm1939 = vc.u32 %v1937, %v1933
    %v1940 = vsel %vm1939, 1, 0
    %v1941 = vadd.s32 %v1937, %v1933
    %v1942 = vadd.s32 %v1938, %v1940
    %v1943 = vadd.s32 %v1942, %v1932
    %v1944 = vadd.s32 %v1943, %v1934
    %v1945 = vand.u32 %v1922, 65535
    %v1946 = vshrl.u32 %v1922, 16
    %v1947 = vand.u32 %v1917, 65535
    %v1948 = vshrl.u32 %v1917, 16
    %v1949 = vmul.u32 %v1945, %v1947
    %v1950 = vmul.u32 %v1945, %v1948
    %v1951 = vmul.u32 %v1946, %v1947
    %v1952 = vmul.u32 %v1946, %v1948
    %v1953 = vshll.u32 %v1950, 16
    %v1954 = vshrl.u32 %v1950, 16
    %v1955 = vshll.u32 %v1951, 16
    %v1956 = vshrl.u32 %v1951, 16
    %vm1957 = vc.u32 %v1949, %v1953
    %v1958 = vsel %vm1957, 1, 0
    %v1959 = vadd.s32 %v1949, %v1953
    %v1960 = vadd.s32 %v1952, %v1958
    %vm1961 = vc.u32 %v1959, %v1955
    %v1962 = vsel %vm1961, 1, 0
    %v1963 = vadd.s32 %v1959, %v1955
    %v1964 = vadd.s32 %v1960, %v1962
    %v1965 = vadd.s32 %v1964, %v1954
    %v1966 = vadd.s32 %v1965, %v1956
    %v1967 = vmul.u32 %v1922, %v1913
    %v1968 = vadd.s32 %v1944, %v1963
    %vm1969 = vc.u32 %v1944, %v1963
    %v1970 = vadd.s32 %v1966, 1
    %v1971 = vsel %vm1969, %v1970, %v1966
    %v1972 = vadd.s32 %v1967, %v1971
    %v1973 = vadd.s32 %v1972, 536870912
    %v1974 = vshrl.u32 %v1973, 30
    %v1975 = vshll.u32 %v1974, 30
    %v1976 = vsub.s32 %v1972, %v1975
    %vm1977 = vcmp.lt.s32.totalorder %v1976, 0
    %v1978 = vsub.s32 0, %v1976
    %v1979 = vsel %vm1977, %v1978, %v1976
    %v1980 = vclz %v1979
    %v1981 = vsub.s32 %v1980, 2
    %vm1982 = vcmp.gt.s32.totalorder 0, %v1981
    %v1983 = vsel %vm1982, 0, %v1981
    %v1984 = vsub.s32 32, %v1983
    %v1985 = vshll.u32 %v1976, %v1983
    %v1986 = vshrl.u32 %v1968, %v1984
    %v1987 = vor.u32 %v1985, %v1986
    %v1988 = vsub.s32 4294967266, %v1983
    %v1989 = vadd.s32 %v1988, 127
    %v1990 = vshll.u32 %v1989, 23
    %v1991 = vor.u32 4788187, %v1990
    %v1992 = vand.u32 2147483647, %v1991
    %v1994 = vcvt.s32.f32 %v1987
    %v1995 = vmul.f32 %v1994, %v1992
    %v1996 = vxor.u32 %v1995, 2147483648
    %v1997 = vsel %vm1876, %v1996, %v1995
    %v1998 = vsub.s32 4, %v1974
    %v1999 = vsel %vm1876, %v1998, %v1974
    %v2000 = vsel %vm1875, %v307, %v1997
    %v2001 = vsel %vm1875, 0, %v1999
    %v2002 = vmul.f32 %v2000, %v2000
    %v2003 = vmul.f32 %v2002, -0.001358992
    %v2004 = vadd.f32 %v2003, 0.041655596
    %v2005 = vmul.f32 %v2002, %v2004
    %v2006 = vadd.f32 %v2005, -0.4999988
    %v2007 = vmul.f32 %v2002, %v2006
    %v2008 = vadd.f32 1.0, %v2007
    %v2009 = vmul.f32 %v2000, %v2000
    %v2010 = vmul.f32 %v2009, -0.00019511016
    %v2011 = vadd.f32 %v2010, 0.008332121
    %v2012 = vmul.f32 %v2009, %v2011
    %v2013 = vadd.f32 %v2012, -0.16666654
    %v2014 = vmul.f32 %v2009, %v2013
    %v2015 = vadd.f32 %v2014, 1.0
    %v2016 = vmul.f32 %v2015, %v2000
    %vm2017 = vweird.f32 %v307
    %v2018 = vadd.s32 %v2001, 3
    %v2019 = vand.u32 %v2018, 3
    %vm2020 = vcmp.lt.s32.totalorder %v2019, 2
    %vm2021 = vcmp.eq.s32.totalorder %v2019, 0
    %v2022 = vxor.u32 %v2016, 2147483648
    %v2023 = vsel %vm2021, %v2008, %v2022
    %vm2024 = vcmp.eq.s32.totalorder %v2019, 2
    %v2025 = vxor.u32 %v2008, 2147483648
    %v2026 = vsel %vm2024, %v2025, %v2016
    %v2027 = vsel %vm2020, %v2023, %v2026
    %v2028 = vsel %vm2017, nan, %v2027
    %v2029 = vand.u32 2147483647, %v310
    %vm2030 = vcmp.le.f32.partialorder %v2029, 0.7853982
    %vm2031 = vcmp.lt.s32.totalorder %v310, 0
    %v2032 = vand.u32 %v310, 2139095040
    %v2033 = vshrl.u32 %v2032, 23
    %v2034 = vsub.s32 %v2033, 127
    %v2035 = vand.u32 2147483647, %v310
    %v2036 = vand.u32 %v2035, 8388607
    %v2037 = vor.u32 %v2036, 8388608
    %v2038 = vsub.s32 0, %v2037
    %v2039 = vadd.s32 %v2034, 1
    %vm2040 = vcmp.gt.s32.totalorder %v2039, 0
    %v2041 = vsel %vm2040, %v2039, 0
    %v2042 = vshrl.u32 %v2041, 5
    %v2043 = vand.u32 %v2041, 31
    %v2044 = vsub.s32 32, %v2043
    %v2045 = vshrl.u32 683565275, %v2044
    %v2046 = vshll.u32 683565275, %v2043
    %v2047 = vshrl.u32 2475754826, %v2044
    %v2048 = vor.u32 %v2046, %v2047
    %v2049 = vshll.u32 2475754826, %v2043
    %v2050 = vshrl.u32 2131351028, %v2044
    %v2051 = vor.u32 %v2049, %v2050
    %v2052 = vshll.u32 2131351028, %v2043
    %v2053 = vshrl.u32 2102212464, %v2044
    %v2054 = vor.u32 %v2052, %v2053
    %v2055 = vshll.u32 2102212464, %v2043
    %v2056 = vshrl.u32 920167782, %v2044
    %v2057 = vor.u32 %v2055, %v2056
    %v2058 = vshll.u32 920167782, %v2043
    %v2059 = vshrl.u32 1326507024, %v2044
    %v2060 = vor.u32 %v2058, %v2059
    %vm2061 = vcmp.lt.s32.totalorder %v2042, 1
    %vm2062 = vcmp.lt.s32.totalorder %v2042, 2
    %vm2063 = vcmp.lt.s32.totalorder %v2042, 3
    %vm2064 = vcmp.lt.s32.totalorder %v2042, 4
    %v2065 = vsel %vm2061, %v2045, %v2048
    %v2066 = vsel %vm2064, %v2054, 2102212464
    %v2067 = vsel %vm2063, %v2051, %v2066
    %v2068 = vsel %vm2062, %v2065, %v2067
    %v2069 = vsel %vm2061, %v2048, %v2051
    %v2070 = vsel %vm2064, %v2057, 920167782
    %v2071 = vsel %vm2063, %v2054, %v2070
    %v2072 = vsel %vm2062, %v2069, %v2071
    %v2073 = vsel %vm2061, %v2051, %v2054
    %v2074 = vsel %vm2064, %v2060, 1326507024
    %v2075 = vsel %vm2063, %v2057, %v2074
    %v2076 = vsel %vm2062, %v2073, %v2075
    %v2077 = vshll.u32 %v2037, 8
    %v2078 = vand.u32 %v2077, 65535
    %v2079 = vshrl.u32 %v2077, 16
    %v2080 = vand.u32 %v2076, 65535
    %v2081 = vshrl.u32 %v2076, 16
    %v2082 = vmul.u32 %v2078, %v2080
    %v2083 = vmul.u32 %v2078, %v2081
    %v2084 = vmul.u32 %v2079, %v2080
    %v2085 = vmul.u32 %v2079, %v2081
    %v2086 = vshll.u32 %v2083, 16
    %v2087 = vshrl.u32 %v2083, 16
    %v2088 = vshll.u32 %v2084, 16
    %v2089 = vshrl.u32 %v2084, 16
    %vm2090 = vc.u32 %v2082, %v2086
    %v2091 = vsel %vm2090, 1, 0
    %v2092 = vadd.s32 %v2082, %v2086
    %v2093 = vadd.s32 %v2085, %v2091
    %vm2094 = vc.u32 %v2092, %v2088
    %v2095 = vsel %vm2094, 1, 0
    %v2096 = vadd.s32 %v2092, %v2088
    %v2097 = vadd.s32 %v2093, %v2095
    %v2098 = vadd.s32 %v2097, %v2087
    %v2099 = vadd.s32 %v2098, %v2089
    %v2100 = vand.u32 %v2077, 65535
    %v2101 = vshrl.u32 %v2077, 16
    %v2102 = vand.u32 %v2072, 65535
    %v2103 = vshrl.u32 %v2072, 16
    %v2104 = vmul.u32 %v2100, %v2102
    %v2105 = vmul.u32 %v2100, %v2103
    %v2106 = vmul.u32 %v2101, %v2102
    %v2107 = vmul.u32 %v2101, %v2103
    %v2108 = vshll.u32 %v2105, 16
    %v2109 = vshrl.u32 %v2105, 16
    %v2110 = vshll.u32 %v2106, 16
    %v2111 = vshrl.u32 %v2106, 16
    %vm2112 = vc.u32 %v2104, %v2108
    %v2113 = vsel %vm2112, 1, 0
    %v2114 = vadd.s32 %v2104, %v2108
    %v2115 = vadd.s32 %v2107, %v2113
    %vm2116 = vc.u32 %v2114, %v2110
    %v2117 = vsel %vm2116, 1, 0
    %v2118 = vadd.s32 %v2114, %v2110
    %v2119 = vadd.s32 %v2115, %v2117
    %v2120 = vadd.s32 %v2119, %v2109
    %v2121 = vadd.s32 %v2120, %v2111
    %v2122 = vmul.u32 %v2077, %v2068
    %v2123 = vadd.s32 %v2099, %v2118
    %vm2124 = vc.u32 %v2099, %v2118
    %v2125 = vadd.s32 %v2121, 1
    %v2126 = vsel %vm2124, %v2125, %v2121
    %v2127 = vadd.s32 %v2122, %v2126
    %v2128 = vadd.s32 %v2127, 536870912
    %v2129 = vshrl.u32 %v2128, 30
    %v2130 = vshll.u32 %v2129, 30
    %v2131 = vsub.s32 %v2127, %v2130
    %vm2132 = vcmp.lt.s32.totalorder %v2131, 0
    %v2133 = vsub.s32 0, %v2131
    %v2134 = vsel %vm2132, %v2133, %v2131
    %v2135 = vclz %v2134
    %v2136 = vsub.s32 %v2135, 2
    %vm2137 = vcmp.gt.s32.totalorder 0, %v2136
    %v2138 = vsel %vm2137, 0, %v2136
    %v2139 = vsub.s32 32, %v2138
    %v2140 = vshll.u32 %v2131, %v2138
    %v2141 = vshrl.u32 %v2123, %v2139
    %v2142 = vor.u32 %v2140, %v2141
    %v2143 = vsub.s32 4294967266, %v2138
    %v2144 = vadd.s32 %v2143, 127
    %v2145 = vshll.u32 %v2144, 23
    %v2146 = vor.u32 4788187, %v2145
    %v2147 = vand.u32 2147483647, %v2146
    %v2149 = vcvt.s32.f32 %v2142
    %v2150 = vmul.f32 %v2149, %v2147
    %v2151 = vxor.u32 %v2150, 2147483648
    %v2152 = vsel %vm2031, %v2151, %v2150
    %v2153 = vsub.s32 4, %v2129
    %v2154 = vsel %vm2031, %v2153, %v2129
    %v2155 = vsel %vm2030, %v310, %v2152
    %v2156 = vsel %vm2030, 0, %v2154
    %v2157 = vmul.f32 %v2155, %v2155
    %v2158 = vmul.f32 %v2157, -0.001358992
    %v2159 = vadd.f32 %v2158, 0.041655596
    %v2160 = vmul.f32 %v2157, %v2159
    %v2161 = vadd.f32 %v2160, -0.4999988
    %v2162 = vmul.f32 %v2157, %v2161
    %v2163 = vadd.f32 1.0, %v2162
    %v2164 = vmul.f32 %v2155, %v2155
    %v2165 = vmul.f32 %v2164, -0.00019511016
    %v2166 = vadd.f32 %v2165, 0.008332121
    %v2167 = vmul.f32 %v2164, %v2166
    %v2168 = vadd.f32 %v2167, -0.16666654
    %v2169 = vmul.f32 %v2164, %v2168
    %v2170 = vadd.f32 %v2169, 1.0
    %v2171 = vmul.f32 %v2170, %v2155
    %vm2172 = vweird.f32 %v310
    %v2173 = vadd.s32 %v2156, 3
    %v2174 = vand.u32 %v2173, 3
    %vm2175 = vcmp.lt.s32.totalorder %v2174, 2
    %vm2176 = vcmp.eq.s32.totalorder %v2174, 0
    %v2177 = vxor.u32 %v2171, 2147483648
    %v2178 = vsel %vm2176, %v2163, %v2177
    %vm2179 = vcmp.eq.s32.totalorder %v2174, 2
    %v2180 = vxor.u32 %v2163, 2147483648
    %v2181 = vsel %vm2179, %v2180, %v2171
    %v2182 = vsel %vm2175, %v2178, %v2181
    %v2183 = vsel %vm2172, nan, %v2182
    %v2184 = vand.u32 2147483647, %v313
    %vm2185 = vcmp.le.f32.partialorder %v2184, 0.7853982
    %vm2186 = vcmp.lt.s32.totalorder %v313, 0
    %v2187 = vand.u32 %v313, 2139095040
    %v2188 = vshrl.u32 %v2187, 23
    %v2189 = vsub.s32 %v2188, 127
    %v2190 = vand.u32 2147483647, %v313
    %v2191 = vand.u32 %v2190, 8388607
    %v2192 = vor.u32 %v2191, 8388608
    %v2193 = vsub.s32 0, %v2192
    %v2194 = vadd.s32 %v2189, 1
    %vm2195 = vcmp.gt.s32.totalorder %v2194, 0
    %v2196 = vsel %vm2195, %v2194, 0
    %v2197 = vshrl.u32 %v2196, 5
    %v2198 = vand.u32 %v2196, 31
    %v2199 = vsub.s32 32, %v2198
    %v2200 = vshrl.u32 683565275, %v2199
    %v2201 = vshll.u32 683565275, %v2198
    %v2202 = vshrl.u32 2475754826, %v2199
    %v2203 = vor.u32 %v2201, %v2202
    %v2204 = vshll.u32 2475754826, %v2198
    %v2205 = vshrl.u32 2131351028, %v2199
    %v2206 = vor.u32 %v2204, %v2205
    %v2207 = vshll.u32 2131351028, %v2198
    %v2208 = vshrl.u32 2102212464, %v2199
    %v2209 = vor.u32 %v2207, %v2208
    %v2210 = vshll.u32 2102212464, %v2198
    %v2211 = vshrl.u32 920167782, %v2199
    %v2212 = vor.u32 %v2210, %v2211
    %v2213 = vshll.u32 920167782, %v2198
    %v2214 = vshrl.u32 1326507024, %v2199
    %v2215 = vor.u32 %v2213, %v2214
    %vm2216 = vcmp.lt.s32.totalorder %v2197, 1
    %vm2217 = vcmp.lt.s32.totalorder %v2197, 2
    %vm2218 = vcmp.lt.s32.totalorder %v2197, 3
    %vm2219 = vcmp.lt.s32.totalorder %v2197, 4
    %v2220 = vsel %vm2216, %v2200, %v2203
    %v2221 = vsel %vm2219, %v2209, 2102212464
    %v2222 = vsel %vm2218, %v2206, %v2221
    %v2223 = vsel %vm2217, %v2220, %v2222
    %v2224 = vsel %vm2216, %v2203, %v2206
    %v2225 = vsel %vm2219, %v2212, 920167782
    %v2226 = vsel %vm2218, %v2209, %v2225
    %v2227 = vsel %vm2217, %v2224, %v2226
    %v2228 = vsel %vm2216, %v2206, %v2209
    %v2229 = vsel %vm2219, %v2215, 1326507024
    %v2230 = vsel %vm2218, %v2212, %v2229
    %v2231 = vsel %vm2217, %v2228, %v2230
    %v2232 = vshll.u32 %v2192, 8
    %v2233 = vand.u32 %v2232, 65535
    %v2234 = vshrl.u32 %v2232, 16
    %v2235 = vand.u32 %v2231, 65535
    %v2236 = vshrl.u32 %v2231, 16
    %v2237 = vmul.u32 %v2233, %v2235
    %v2238 = vmul.u32 %v2233, %v2236
    %v2239 = vmul.u32 %v2234, %v2235
    %v2240 = vmul.u32 %v2234, %v2236
    %v2241 = vshll.u32 %v2238, 16
    %v2242 = vshrl.u32 %v2238, 16
    %v2243 = vshll.u32 %v2239, 16
    %v2244 = vshrl.u32 %v2239, 16
    %vm2245 = vc.u32 %v2237, %v2241
    %v2246 = vsel %vm2245, 1, 0
    %v2247 = vadd.s32 %v2237, %v2241
    %v2248 = vadd.s32 %v2240, %v2246
    %vm2249 = vc.u32 %v2247, %v2243
    %v2250 = vsel %vm2249, 1, 0
    %v2251 = vadd.s32 %v2247, %v2243
    %v2252 = vadd.s32 %v2248, %v2250
    %v2253 = vadd.s32 %v2252, %v2242
    %v2254 = vadd.s32 %v2253, %v2244
    %v2255 = vand.u32 %v2232, 65535
    %v2256 = vshrl.u32 %v2232, 16
    %v2257 = vand.u32 %v2227, 65535
    %v2258 = vshrl.u32 %v2227, 16
    %v2259 = vmul.u32 %v2255, %v2257
    %v2260 = vmul.u32 %v2255, %v2258
    %v2261 = vmul.u32 %v2256, %v2257
    %v2262 = vmul.u32 %v2256, %v2258
    %v2263 = vshll.u32 %v2260, 16
    %v2264 = vshrl.u32 %v2260, 16
    %v2265 = vshll.u32 %v2261, 16
    %v2266 = vshrl.u32 %v2261, 16
    %vm2267 = vc.u32 %v2259, %v2263
    %v2268 = vsel %vm2267, 1, 0
    %v2269 = vadd.s32 %v2259, %v2263
    %v2270 = vadd.s32 %v2262, %v2268
    %vm2271 = vc.u32 %v2269, %v2265
    %v2272 = vsel %vm2271, 1, 0
    %v2273 = vadd.s32 %v2269, %v2265
    %v2274 = vadd.s32 %v2270, %v2272
    %v2275 = vadd.s32 %v2274, %v2264
    %v2276 = vadd.s32 %v2275, %v2266
    %v2277 = vmul.u32 %v2232, %v2223
    %v2278 = vadd.s32 %v2254, %v2273
    %vm2279 = vc.u32 %v2254, %v2273
    %v2280 = vadd.s32 %v2276, 1
    %v2281 = vsel %vm2279, %v2280, %v2276
    %v2282 = vadd.s32 %v2277, %v2281
    %v2283 = vadd.s32 %v2282, 536870912
    %v2284 = vshrl.u32 %v2283, 30
    %v2285 = vshll.u32 %v2284, 30
    %v2286 = vsub.s32 %v2282, %v2285
    %vm2287 = vcmp.lt.s32.totalorder %v2286, 0
    %v2288 = vsub.s32 0, %v2286
    %v2289 = vsel %vm2287, %v2288, %v2286
    %v2290 = vclz %v2289
    %v2291 = vsub.s32 %v2290, 2
    %vm2292 = vcmp.gt.s32.totalorder 0, %v2291
    %v2293 = vsel %vm2292, 0, %v2291
    %v2294 = vsub.s32 32, %v2293
    %v2295 = vshll.u32 %v2286, %v2293
    %v2296 = vshrl.u32 %v2278, %v2294
    %v2297 = vor.u32 %v2295, %v2296
    %v2298 = vsub.s32 4294967266, %v2293
    %v2299 = vadd.s32 %v2298, 127
    %v2300 = vshll.u32 %v2299, 23
    %v2301 = vor.u32 4788187, %v2300
    %v2302 = vand.u32 2147483647, %v2301
    %v2304 = vcvt.s32.f32 %v2297
    %v2305 = vmul.f32 %v2304, %v2302
    %v2306 = vxor.u32 %v2305, 2147483648
    %v2307 = vsel %vm2186, %v2306, %v2305
    %v2308 = vsub.s32 4, %v2284
    %v2309 = vsel %vm2186, %v2308, %v2284
    %v2310 = vsel %vm2185, %v313, %v2307
    %v2311 = vsel %vm2185, 0, %v2309
    %v2312 = vmul.f32 %v2310, %v2310
    %v2313 = vmul.f32 %v2312, -0.001358992
    %v2314 = vadd.f32 %v2313, 0.041655596
    %v2315 = vmul.f32 %v2312, %v2314
    %v2316 = vadd.f32 %v2315, -0.4999988
    %v2317 = vmul.f32 %v2312, %v2316
    %v2318 = vadd.f32 1.0, %v2317
    %v2319 = vmul.f32 %v2310, %v2310
    %v2320 = vmul.f32 %v2319, -0.00019511016
    %v2321 = vadd.f32 %v2320, 0.008332121
    %v2322 = vmul.f32 %v2319, %v2321
    %v2323 = vadd.f32 %v2322, -0.16666654
    %v2324 = vmul.f32 %v2319, %v2323
    %v2325 = vadd.f32 %v2324, 1.0
    %v2326 = vmul.f32 %v2325, %v2310
    %vm2327 = vweird.f32 %v313
    %v2328 = vadd.s32 %v2311, 3
    %v2329 = vand.u32 %v2328, 3
    %vm2330 = vcmp.lt.s32.totalorder %v2329, 2
    %vm2331 = vcmp.eq.s32.totalorder %v2329, 0
    %v2332 = vxor.u32 %v2326, 2147483648
    %v2333 = vsel %vm2331, %v2318, %v2332
    %vm2334 = vcmp.eq.s32.totalorder %v2329, 2
    %v2335 = vxor.u32 %v2318, 2147483648
    %v2336 = vsel %vm2334, %v2335, %v2326
    %v2337 = vsel %vm2330, %v2333, %v2336
    %v2338 = vsel %vm2327, nan, %v2337
    %v2339 = vand.u32 2147483647, %v316
    %vm2340 = vcmp.le.f32.partialorder %v2339, 0.7853982
    %vm2341 = vcmp.lt.s32.totalorder %v316, 0
    %v2342 = vand.u32 %v316, 2139095040
    %v2343 = vshrl.u32 %v2342, 23
    %v2344 = vsub.s32 %v2343, 127
    %v2345 = vand.u32 2147483647, %v316
    %v2346 = vand.u32 %v2345, 8388607
    %v2347 = vor.u32 %v2346, 8388608
    %v2348 = vsub.s32 0, %v2347
    %v2349 = vadd.s32 %v2344, 1
    %vm2350 = vcmp.gt.s32.totalorder %v2349, 0
    %v2351 = vsel %vm2350, %v2349, 0
    %v2352 = vshrl.u32 %v2351, 5
    %v2353 = vand.u32 %v2351, 31
    %v2354 = vsub.s32 32, %v2353
    %v2355 = vshrl.u32 683565275, %v2354
    %v2356 = vshll.u32 683565275, %v2353
    %v2357 = vshrl.u32 2475754826, %v2354
    %v2358 = vor.u32 %v2356, %v2357
    %v2359 = vshll.u32 2475754826, %v2353
    %v2360 = vshrl.u32 2131351028, %v2354
    %v2361 = vor.u32 %v2359, %v2360
    %v2362 = vshll.u32 2131351028, %v2353
    %v2363 = vshrl.u32 2102212464, %v2354
    %v2364 = vor.u32 %v2362, %v2363
    %v2365 = vshll.u32 2102212464, %v2353
    %v2366 = vshrl.u32 920167782, %v2354
    %v2367 = vor.u32 %v2365, %v2366
    %v2368 = vshll.u32 920167782, %v2353
    %v2369 = vshrl.u32 1326507024, %v2354
    %v2370 = vor.u32 %v2368, %v2369
    %vm2371 = vcmp.lt.s32.totalorder %v2352, 1
    %vm2372 = vcmp.lt.s32.totalorder %v2352, 2
    %vm2373 = vcmp.lt.s32.totalorder %v2352, 3
    %vm2374 = vcmp.lt.s32.totalorder %v2352, 4
    %v2375 = vsel %vm2371, %v2355, %v2358
    %v2376 = vsel %vm2374, %v2364, 2102212464
    %v2377 = vsel %vm2373, %v2361, %v2376
    %v2378 = vsel %vm2372, %v2375, %v2377
    %v2379 = vsel %vm2371, %v2358, %v2361
    %v2380 = vsel %vm2374, %v2367, 920167782
    %v2381 = vsel %vm2373, %v2364, %v2380
    %v2382 = vsel %vm2372, %v2379, %v2381
    %v2383 = vsel %vm2371, %v2361, %v2364
    %v2384 = vsel %vm2374, %v2370, 1326507024
    %v2385 = vsel %vm2373, %v2367, %v2384
    %v2386 = vsel %vm2372, %v2383, %v2385
    %v2387 = vshll.u32 %v2347, 8
    %v2388 = vand.u32 %v2387, 65535
    %v2389 = vshrl.u32 %v2387, 16
    %v2390 = vand.u32 %v2386, 65535
    %v2391 = vshrl.u32 %v2386, 16
    %v2392 = vmul.u32 %v2388, %v2390
    %v2393 = vmul.u32 %v2388, %v2391
    %v2394 = vmul.u32 %v2389, %v2390
    %v2395 = vmul.u32 %v2389, %v2391
    %v2396 = vshll.u32 %v2393, 16
    %v2397 = vshrl.u32 %v2393, 16
    %v2398 = vshll.u32 %v2394, 16
    %v2399 = vshrl.u32 %v2394, 16
    %vm2400 = vc.u32 %v2392, %v2396
    %v2401 = vsel %vm2400, 1, 0
    %v2402 = vadd.s32 %v2392, %v2396
    %v2403 = vadd.s32 %v2395, %v2401
    %vm2404 = vc.u32 %v2402, %v2398
    %v2405 = vsel %vm2404, 1, 0
    %v2406 = vadd.s32 %v2402, %v2398
    %v2407 = vadd.s32 %v2403, %v2405
    %v2408 = vadd.s32 %v2407, %v2397
    %v2409 = vadd.s32 %v2408, %v2399
    %v2410 = vand.u32 %v2387, 65535
    %v2411 = vshrl.u32 %v2387, 16
    %v2412 = vand.u32 %v2382, 65535
    %v2413 = vshrl.u32 %v2382, 16
    %v2414 = vmul.u32 %v2410, %v2412
    %v2415 = vmul.u32 %v2410, %v2413
    %v2416 = vmul.u32 %v2411, %v2412
    %v2417 = vmul.u32 %v2411, %v2413
    %v2418 = vshll.u32 %v2415, 16
    %v2419 = vshrl.u32 %v2415, 16
    %v2420 = vshll.u32 %v2416, 16
    %v2421 = vshrl.u32 %v2416, 16
    %vm2422 = vc.u32 %v2414, %v2418
    %v2423 = vsel %vm2422, 1, 0
    %v2424 = vadd.s32 %v2414, %v2418
    %v2425 = vadd.s32 %v2417, %v2423
    %vm2426 = vc.u32 %v2424, %v2420
    %v2427 = vsel %vm2426, 1, 0
    %v2428 = vadd.s32 %v2424, %v2420
    %v2429 = vadd.s32 %v2425, %v2427
    %v2430 = vadd.s32 %v2429, %v2419
    %v2431 = vadd.s32 %v2430, %v2421
    %v2432 = vmul.u32 %v2387, %v2378
    %v2433 = vadd.s32 %v2409, %v2428
    %vm2434 = vc.u32 %v2409, %v2428
    %v2435 = vadd.s32 %v2431, 1
    %v2436 = vsel %vm2434, %v2435, %v2431
    %v2437 = vadd.s32 %v2432, %v2436
    %v2438 = vadd.s32 %v2437, 536870912
    %v2439 = vshrl.u32 %v2438, 30
    %v2440 = vshll.u32 %v2439, 30
    %v2441 = vsub.s32 %v2437, %v2440
    %vm2442 = vcmp.lt.s32.totalorder %v2441, 0
    %v2443 = vsub.s32 0, %v2441
    %v2444 = vsel %vm2442, %v2443, %v2441
    %v2445 = vclz %v2444
    %v2446 = vsub.s32 %v2445, 2
    %vm2447 = vcmp.gt.s32.totalorder 0, %v2446
    %v2448 = vsel %vm2447, 0, %v2446
    %v2449 = vsub.s32 32, %v2448
    %v2450 = vshll.u32 %v2441, %v2448
    %v2451 = vshrl.u32 %v2433, %v2449
    %v2452 = vor.u32 %v2450, %v2451
    %v2453 = vsub.s32 4294967266, %v2448
    %v2454 = vadd.s32 %v2453, 127
    %v2455 = vshll.u32 %v2454, 23
    %v2456 = vor.u32 4788187, %v2455
    %v2457 = vand.u32 2147483647, %v2456
    %v2459 = vcvt.s32.f32 %v2452
    %v2460 = vmul.f32 %v2459, %v2457
    %v2461 = vxor.u32 %v2460, 2147483648
    %v2462 = vsel %vm2341, %v2461, %v2460
    %v2463 = vsub.s32 4, %v2439
    %v2464 = vsel %vm2341, %v2463, %v2439
    %v2465 = vsel %vm2340, %v316, %v2462
    %v2466 = vsel %vm2340, 0, %v2464
    %v2467 = vmul.f32 %v2465, %v2465
    %v2468 = vmul.f32 %v2467, -0.001358992
    %v2469 = vadd.f32 %v2468, 0.041655596
    %v2470 = vmul.f32 %v2467, %v2469
    %v2471 = vadd.f32 %v2470, -0.4999988
    %v2472 = vmul.f32 %v2467, %v2471
    %v2473 = vadd.f32 1.0, %v2472
    %v2474 = vmul.f32 %v2465, %v2465
    %v2475 = vmul.f32 %v2474, -0.00019511016
    %v2476 = vadd.f32 %v2475, 0.008332121
    %v2477 = vmul.f32 %v2474, %v2476
    %v2478 = vadd.f32 %v2477, -0.16666654
    %v2479 = vmul.f32 %v2474, %v2478
    %v2480 = vadd.f32 %v2479, 1.0
    %v2481 = vmul.f32 %v2480, %v2465
    %vm2482 = vweird.f32 %v316
    %v2483 = vadd.s32 %v2466, 3
    %v2484 = vand.u32 %v2483, 3
    %vm2485 = vcmp.lt.s32.totalorder %v2484, 2
    %vm2486 = vcmp.eq.s32.totalorder %v2484, 0
    %v2487 = vxor.u32 %v2481, 2147483648
    %v2488 = vsel %vm2486, %v2473, %v2487
    %vm2489 = vcmp.eq.s32.totalorder %v2484, 2
    %v2490 = vxor.u32 %v2473, 2147483648
    %v2491 = vsel %vm2489, %v2490, %v2481
    %v2492 = vsel %vm2485, %v2488, %v2491
    %v2493 = vsel %vm2482, nan, %v2492
    %v2494 = vand.u32 2147483647, %v319
    %vm2495 = vcmp.le.f32.partialorder %v2494, 0.7853982
    %vm2496 = vcmp.lt.s32.totalorder %v319, 0
    %v2497 = vand.u32 %v319, 2139095040
    %v2498 = vshrl.u32 %v2497, 23
    %v2499 = vsub.s32 %v2498, 127
    %v2500 = vand.u32 2147483647, %v319
    %v2501 = vand.u32 %v2500, 8388607
    %v2502 = vor.u32 %v2501, 8388608
    %v2503 = vsub.s32 0, %v2502
    %v2504 = vadd.s32 %v2499, 1
    %vm2505 = vcmp.gt.s32.totalorder %v2504, 0
    %v2506 = vsel %vm2505, %v2504, 0
    %v2507 = vshrl.u32 %v2506, 5
    %v2508 = vand.u32 %v2506, 31
    %v2509 = vsub.s32 32, %v2508
    %v2510 = vshrl.u32 683565275, %v2509
    %v2511 = vshll.u32 683565275, %v2508
    %v2512 = vshrl.u32 2475754826, %v2509
    %v2513 = vor.u32 %v2511, %v2512
    %v2514 = vshll.u32 2475754826, %v2508
    %v2515 = vshrl.u32 2131351028, %v2509
    %v2516 = vor.u32 %v2514, %v2515
    %v2517 = vshll.u32 2131351028, %v2508
    %v2518 = vshrl.u32 2102212464, %v2509
    %v2519 = vor.u32 %v2517, %v2518
    %v2520 = vshll.u32 2102212464, %v2508
    %v2521 = vshrl.u32 920167782, %v2509
    %v2522 = vor.u32 %v2520, %v2521
    %v2523 = vshll.u32 920167782, %v2508
    %v2524 = vshrl.u32 1326507024, %v2509
    %v2525 = vor.u32 %v2523, %v2524
    %vm2526 = vcmp.lt.s32.totalorder %v2507, 1
    %vm2527 = vcmp.lt.s32.totalorder %v2507, 2
    %vm2528 = vcmp.lt.s32.totalorder %v2507, 3
    %vm2529 = vcmp.lt.s32.totalorder %v2507, 4
    %v2530 = vsel %vm2526, %v2510, %v2513
    %v2531 = vsel %vm2529, %v2519, 2102212464
    %v2532 = vsel %vm2528, %v2516, %v2531
    %v2533 = vsel %vm2527, %v2530, %v2532
    %v2534 = vsel %vm2526, %v2513, %v2516
    %v2535 = vsel %vm2529, %v2522, 920167782
    %v2536 = vsel %vm2528, %v2519, %v2535
    %v2537 = vsel %vm2527, %v2534, %v2536
    %v2538 = vsel %vm2526, %v2516, %v2519
    %v2539 = vsel %vm2529, %v2525, 1326507024
    %v2540 = vsel %vm2528, %v2522, %v2539
    %v2541 = vsel %vm2527, %v2538, %v2540
    %v2542 = vshll.u32 %v2502, 8
    %v2543 = vand.u32 %v2542, 65535
    %v2544 = vshrl.u32 %v2542, 16
    %v2545 = vand.u32 %v2541, 65535
    %v2546 = vshrl.u32 %v2541, 16
    %v2547 = vmul.u32 %v2543, %v2545
    %v2548 = vmul.u32 %v2543, %v2546
    %v2549 = vmul.u32 %v2544, %v2545
    %v2550 = vmul.u32 %v2544, %v2546
    %v2551 = vshll.u32 %v2548, 16
    %v2552 = vshrl.u32 %v2548, 16
    %v2553 = vshll.u32 %v2549, 16
    %v2554 = vshrl.u32 %v2549, 16
    %vm2555 = vc.u32 %v2547, %v2551
    %v2556 = vsel %vm2555, 1, 0
    %v2557 = vadd.s32 %v2547, %v2551
    %v2558 = vadd.s32 %v2550, %v2556
    %vm2559 = vc.u32 %v2557, %v2553
    %v2560 = vsel %vm2559, 1, 0
    %v2561 = vadd.s32 %v2557, %v2553
    %v2562 = vadd.s32 %v2558, %v2560
    %v2563 = vadd.s32 %v2562, %v2552
    %v2564 = vadd.s32 %v2563, %v2554
    %v2565 = vand.u32 %v2542, 65535
    %v2566 = vshrl.u32 %v2542, 16
    %v2567 = vand.u32 %v2537, 65535
    %v2568 = vshrl.u32 %v2537, 16
    %v2569 = vmul.u32 %v2565, %v2567
    %v2570 = vmul.u32 %v2565, %v2568
    %v2571 = vmul.u32 %v2566, %v2567
    %v2572 = vmul.u32 %v2566, %v2568
    %v2573 = vshll.u32 %v2570, 16
    %v2574 = vshrl.u32 %v2570, 16
    %v2575 = vshll.u32 %v2571, 16
    %v2576 = vshrl.u32 %v2571, 16
    %vm2577 = vc.u32 %v2569, %v2573
    %v2578 = vsel %vm2577, 1, 0
    %v2579 = vadd.s32 %v2569, %v2573
    %v2580 = vadd.s32 %v2572, %v2578
    %vm2581 = vc.u32 %v2579, %v2575
    %v2582 = vsel %vm2581, 1, 0
    %v2583 = vadd.s32 %v2579, %v2575
    %v2584 = vadd.s32 %v2580, %v2582
    %v2585 = vadd.s32 %v2584, %v2574
    %v2586 = vadd.s32 %v2585, %v2576
    %v2587 = vmul.u32 %v2542, %v2533
    %v2588 = vadd.s32 %v2564, %v2583
    %vm2589 = vc.u32 %v2564, %v2583
    %v2590 = vadd.s32 %v2586, 1
    %v2591 = vsel %vm2589, %v2590, %v2586
    %v2592 = vadd.s32 %v2587, %v2591
    %v2593 = vadd.s32 %v2592, 536870912
    %v2594 = vshrl.u32 %v2593, 30
    %v2595 = vshll.u32 %v2594, 30
    %v2596 = vsub.s32 %v2592, %v2595
    %vm2597 = vcmp.lt.s32.totalorder %v2596, 0
    %v2598 = vsub.s32 0, %v2596
    %v2599 = vsel %vm2597, %v2598, %v2596
    %v2600 = vclz %v2599
    %v2601 = vsub.s32 %v2600, 2
    %vm2602 = vcmp.gt.s32.totalorder 0, %v2601
    %v2603 = vsel %vm2602, 0, %v2601
    %v2604 = vsub.s32 32, %v2603
    %v2605 = vshll.u32 %v2596, %v2603
    %v2606 = vshrl.u32 %v2588, %v2604
    %v2607 = vor.u32 %v2605, %v2606
    %v2608 = vsub.s32 4294967266, %v2603
    %v2609 = vadd.s32 %v2608, 127
    %v2610 = vshll.u32 %v2609, 23
    %v2611 = vor.u32 4788187, %v2610
    %v2612 = vand.u32 2147483647, %v2611
    %v2614 = vcvt.s32.f32 %v2607
    %v2615 = vmul.f32 %v2614, %v2612
    %v2616 = vxor.u32 %v2615, 2147483648
    %v2617 = vsel %vm2496, %v2616, %v2615
    %v2618 = vsub.s32 4, %v2594
    %v2619 = vsel %vm2496, %v2618, %v2594
    %v2620 = vsel %vm2495, %v319, %v2617
    %v2621 = vsel %vm2495, 0, %v2619
    %v2622 = vmul.f32 %v2620, %v2620
    %v2623 = vmul.f32 %v2622, -0.001358992
    %v2624 = vadd.f32 %v2623, 0.041655596
    %v2625 = vmul.f32 %v2622, %v2624
    %v2626 = vadd.f32 %v2625, -0.4999988
    %v2627 = vmul.f32 %v2622, %v2626
    %v2628 = vadd.f32 1.0, %v2627
    %v2629 = vmul.f32 %v2620, %v2620
    %v2630 = vmul.f32 %v2629, -0.00019511016
    %v2631 = vadd.f32 %v2630, 0.008332121
    %v2632 = vmul.f32 %v2629, %v2631
    %v2633 = vadd.f32 %v2632, -0.16666654
    %v2634 = vmul.f32 %v2629, %v2633
    %v2635 = vadd.f32 %v2634, 1.0
    %v2636 = vmul.f32 %v2635, %v2620
    %vm2637 = vweird.f32 %v319
    %v2638 = vadd.s32 %v2621, 3
    %v2639 = vand.u32 %v2638, 3
    %vm2640 = vcmp.lt.s32.totalorder %v2639, 2
    %vm2641 = vcmp.eq.s32.totalorder %v2639, 0
    %v2642 = vxor.u32 %v2636, 2147483648
    %v2643 = vsel %vm2641, %v2628, %v2642
    %vm2644 = vcmp.eq.s32.totalorder %v2639, 2
    %v2645 = vxor.u32 %v2628, 2147483648
    %v2646 = vsel %vm2644, %v2645, %v2636
    %v2647 = vsel %vm2640, %v2643, %v2646
    %v2648 = vsel %vm2637, nan, %v2647
    %v2649 = vand.u32 2147483647, %v322
    %vm2650 = vcmp.le.f32.partialorder %v2649, 0.7853982
    %vm2651 = vcmp.lt.s32.totalorder %v322, 0
    %v2652 = vand.u32 %v322, 2139095040
    %v2653 = vshrl.u32 %v2652, 23
    %v2654 = vsub.s32 %v2653, 127
    %v2655 = vand.u32 2147483647, %v322
    %v2656 = vand.u32 %v2655, 8388607
    %v2657 = vor.u32 %v2656, 8388608
    %v2658 = vsub.s32 0, %v2657
    %v2659 = vadd.s32 %v2654, 1
    %vm2660 = vcmp.gt.s32.totalorder %v2659, 0
    %v2661 = vsel %vm2660, %v2659, 0
    %v2662 = vshrl.u32 %v2661, 5
    %v2663 = vand.u32 %v2661, 31
    %v2664 = vsub.s32 32, %v2663
    %v2665 = vshrl.u32 683565275, %v2664
    %v2666 = vshll.u32 683565275, %v2663
    %v2667 = vshrl.u32 2475754826, %v2664
    %v2668 = vor.u32 %v2666, %v2667
    %v2669 = vshll.u32 2475754826, %v2663
    %v2670 = vshrl.u32 2131351028, %v2664
    %v2671 = vor.u32 %v2669, %v2670
    %v2672 = vshll.u32 2131351028, %v2663
    %v2673 = vshrl.u32 2102212464, %v2664
    %v2674 = vor.u32 %v2672, %v2673
    %v2675 = vshll.u32 2102212464, %v2663
    %v2676 = vshrl.u32 920167782, %v2664
    %v2677 = vor.u32 %v2675, %v2676
    %v2678 = vshll.u32 920167782, %v2663
    %v2679 = vshrl.u32 1326507024, %v2664
    %v2680 = vor.u32 %v2678, %v2679
    %vm2681 = vcmp.lt.s32.totalorder %v2662, 1
    %vm2682 = vcmp.lt.s32.totalorder %v2662, 2
    %vm2683 = vcmp.lt.s32.totalorder %v2662, 3
    %vm2684 = vcmp.lt.s32.totalorder %v2662, 4
    %v2685 = vsel %vm2681, %v2665, %v2668
    %v2686 = vsel %vm2684, %v2674, 2102212464
    %v2687 = vsel %vm2683, %v2671, %v2686
    %v2688 = vsel %vm2682, %v2685, %v2687
    %v2689 = vsel %vm2681, %v2668, %v2671
    %v2690 = vsel %vm2684, %v2677, 920167782
    %v2691 = vsel %vm2683, %v2674, %v2690
    %v2692 = vsel %vm2682, %v2689, %v2691
    %v2693 = vsel %vm2681, %v2671, %v2674
    %v2694 = vsel %vm2684, %v2680, 1326507024
    %v2695 = vsel %vm2683, %v2677, %v2694
    %v2696 = vsel %vm2682, %v2693, %v2695
    %v2697 = vshll.u32 %v2657, 8
    %v2698 = vand.u32 %v2697, 65535
    %v2699 = vshrl.u32 %v2697, 16
    %v2700 = vand.u32 %v2696, 65535
    %v2701 = vshrl.u32 %v2696, 16
    %v2702 = vmul.u32 %v2698, %v2700
    %v2703 = vmul.u32 %v2698, %v2701
    %v2704 = vmul.u32 %v2699, %v2700
    %v2705 = vmul.u32 %v2699, %v2701
    %v2706 = vshll.u32 %v2703, 16
    %v2707 = vshrl.u32 %v2703, 16
    %v2708 = vshll.u32 %v2704, 16
    %v2709 = vshrl.u32 %v2704, 16
    %vm2710 = vc.u32 %v2702, %v2706
    %v2711 = vsel %vm2710, 1, 0
    %v2712 = vadd.s32 %v2702, %v2706
    %v2713 = vadd.s32 %v2705, %v2711
    %vm2714 = vc.u32 %v2712, %v2708
    %v2715 = vsel %vm2714, 1, 0
    %v2716 = vadd.s32 %v2712, %v2708
    %v2717 = vadd.s32 %v2713, %v2715
    %v2718 = vadd.s32 %v2717, %v2707
    %v2719 = vadd.s32 %v2718, %v2709
    %v2720 = vand.u32 %v2697, 65535
    %v2721 = vshrl.u32 %v2697, 16
    %v2722 = vand.u32 %v2692, 65535
    %v2723 = vshrl.u32 %v2692, 16
    %v2724 = vmul.u32 %v2720, %v2722
    %v2725 = vmul.u32 %v2720, %v2723
    %v2726 = vmul.u32 %v2721, %v2722
    %v2727 = vmul.u32 %v2721, %v2723
    %v2728 = vshll.u32 %v2725, 16
    %v2729 = vshrl.u32 %v2725, 16
    %v2730 = vshll.u32 %v2726, 16
    %v2731 = vshrl.u32 %v2726, 16
    %vm2732 = vc.u32 %v2724, %v2728
    %v2733 = vsel %vm2732, 1, 0
    %v2734 = vadd.s32 %v2724, %v2728
    %v2735 = vadd.s32 %v2727, %v2733
    %vm2736 = vc.u32 %v2734, %v2730
    %v2737 = vsel %vm2736, 1, 0
    %v2738 = vadd.s32 %v2734, %v2730
    %v2739 = vadd.s32 %v2735, %v2737
    %v2740 = vadd.s32 %v2739, %v2729
    %v2741 = vadd.s32 %v2740, %v2731
    %v2742 = vmul.u32 %v2697, %v2688
    %v2743 = vadd.s32 %v2719, %v2738
    %vm2744 = vc.u32 %v2719, %v2738
    %v2745 = vadd.s32 %v2741, 1
    %v2746 = vsel %vm2744, %v2745, %v2741
    %v2747 = vadd.s32 %v2742, %v2746
    %v2748 = vadd.s32 %v2747, 536870912
    %v2749 = vshrl.u32 %v2748, 30
    %v2750 = vshll.u32 %v2749, 30
    %v2751 = vsub.s32 %v2747, %v2750
    %vm2752 = vcmp.lt.s32.totalorder %v2751, 0
    %v2753 = vsub.s32 0, %v2751
    %v2754 = vsel %vm2752, %v2753, %v2751
    %v2755 = vclz %v2754
    %v2756 = vsub.s32 %v2755, 2
    %vm2757 = vcmp.gt.s32.totalorder 0, %v2756
    %v2758 = vsel %vm2757, 0, %v2756
    %v2759 = vsub.s32 32, %v2758
    %v2760 = vshll.u32 %v2751, %v2758
    %v2761 = vshrl.u32 %v2743, %v2759
    %v2762 = vor.u32 %v2760, %v2761
    %v2763 = vsub.s32 4294967266, %v2758
    %v2764 = vadd.s32 %v2763, 127
    %v2765 = vshll.u32 %v2764, 23
    %v2766 = vor.u32 4788187, %v2765
    %v2767 = vand.u32 2147483647, %v2766
    %v2769 = vcvt.s32.f32 %v2762
    %v2770 = vmul.f32 %v2769, %v2767
    %v2771 = vxor.u32 %v2770, 2147483648
    %v2772 = vsel %vm2651, %v2771, %v2770
    %v2773 = vsub.s32 4, %v2749
    %v2774 = vsel %vm2651, %v2773, %v2749
    %v2775 = vsel %vm2650, %v322, %v2772
    %v2776 = vsel %vm2650, 0, %v2774
    %v2777 = vmul.f32 %v2775, %v2775
    %v2778 = vmul.f32 %v2777, -0.001358992
    %v2779 = vadd.f32 %v2778, 0.041655596
    %v2780 = vmul.f32 %v2777, %v2779
    %v2781 = vadd.f32 %v2780, -0.4999988
    %v2782 = vmul.f32 %v2777, %v2781
    %v2783 = vadd.f32 1.0, %v2782
    %v2784 = vmul.f32 %v2775, %v2775
    %v2785 = vmul.f32 %v2784, -0.00019511016
    %v2786 = vadd.f32 %v2785, 0.008332121
    %v2787 = vmul.f32 %v2784, %v2786
    %v2788 = vadd.f32 %v2787, -0.16666654
    %v2789 = vmul.f32 %v2784, %v2788
    %v2790 = vadd.f32 %v2789, 1.0
    %v2791 = vmul.f32 %v2790, %v2775
    %vm2792 = vweird.f32 %v322
    %v2793 = vadd.s32 %v2776, 3
    %v2794 = vand.u32 %v2793, 3
    %vm2795 = vcmp.lt.s32.totalorder %v2794, 2
    %vm2796 = vcmp.eq.s32.totalorder %v2794, 0
    %v2797 = vxor.u32 %v2791, 2147483648
    %v2798 = vsel %vm2796, %v2783, %v2797
    %vm2799 = vcmp.eq.s32.totalorder %v2794, 2
    %v2800 = vxor.u32 %v2783, 2147483648
    %v2801 = vsel %vm2799, %v2800, %v2791
    %v2802 = vsel %vm2795, %v2798, %v2801
    %v2803 = vsel %vm2792, nan, %v2802
    %v2804 = vld [vmem:[%s7] sm:$0x3f]
    %v2805 = vld [vmem:[%s9] sm:$0xff]
    %v2806 = vld [vmem:[%s9 + $0x8] sm:$0xff]
    %v2807 = vld [vmem:[%s9 + $0x10] sm:$0xff]
    %v2808 = vld [vmem:[%s9 + $0x18] sm:$0xff]
    %v2809 = vld [vmem:[%s9 + $0x20] sm:$0xff]
    %v2810 = vld [vmem:[%s9 + $0x28] sm:$0xff]
    %v2811 = vld [vmem:[%s9 + $0x30] sm:$0xff]
    %v2812 = vld [vmem:[%s9 + $0x38] sm:$0xf]
    %vm2813 = vcmask 490496
    %v2815 = vsel %vm2813, %v478, 0
    %v2818 = vsel %vm2813, %v633, 0
    %v2821 = vsel %vm2813, %v788, 0
    %v2824 = vsel %vm2813, %v943, 0
    %v2827 = vsel %vm2813, %v1098, 0
    %v2830 = vsel %vm2813, %v1253, 0
    %v2833 = vsel %vm2813, %v1408, 0
    %v2836 = vsel %vm2813, %v1563, 0
    %v2839 = vsel %vm2813, %v1718, 0
    %v2842 = vsel %vm2813, %v1873, 0
    %v2845 = vsel %vm2813, %v2028, 0
    %v2848 = vsel %vm2813, %v2183, 0
    %v2851 = vsel %vm2813, %v2338, 0
    %v2854 = vsel %vm2813, %v2493, 0
    %v2857 = vsel %vm2813, %v2648, 0
    %v2860 = vsel %vm2813, %v2803, 0
    %vm2862 = vcmask 1043456
    %v2864 = vsel %vm2862, %v2812, 0
    %2866 = vmatpush.msra.mxu0 0.0
    %2867 = vmatpush.msra.mxu0 0.0
    %2868 = vmatpush.msra.mxu0 0.0
    %2869 = vmatpush.msra.mxu0 0.0
    %2870 = vmatpush.msra.mxu0 0.0
    %2871 = vmatpush.msra.mxu0 0.0
    %2872 = vmatpush.msra.mxu0 0.0
    %2873 = vmatpush.msra.mxu0 0.0
    %2874 = vmatpush.msra.mxu0 %v2864
    %2875 = vmatpush.msra.mxu0 %v2811
    %2876 = vmatpush.msra.mxu0 %v2810
    %2877 = vmatpush.msra.mxu0 %v2809
    %2878 = vmatpush.msra.mxu0 %v2808
    %2879 = vmatpush.msra.mxu0 %v2807
    %2880 = vmatpush.msra.mxu0 %v2806
    %2881 = vmatpush.msra.mxu0 %v2805
    %2882 = vmatmul.f32.gmra.mxu0 %v2815
    %v2883 = vpop.f32.mrf.mxu0
    %v2884 = vadd.f32 0.0, %v2883
    %2885 = vmatmul.f32.gmra.mxu0 %v2818
    %v2886 = vpop.f32.mrf.mxu0
    %v2887 = vadd.f32 0.0, %v2886
    %2888 = vmatmul.f32.gmra.mxu0 %v2821
    %v2889 = vpop.f32.mrf.mxu0
    %v2890 = vadd.f32 0.0, %v2889
    %2891 = vmatmul.f32.gmra.mxu0 %v2824
    %v2892 = vpop.f32.mrf.mxu0
    %v2893 = vadd.f32 0.0, %v2892
    %2894 = vmatmul.f32.gmra.mxu0 %v2827
    %v2895 = vpop.f32.mrf.mxu0
    %v2896 = vadd.f32 0.0, %v2895
    %2897 = vmatmul.f32.gmra.mxu0 %v2830
    %v2898 = vpop.f32.mrf.mxu0
    %v2899 = vadd.f32 0.0, %v2898
    %2900 = vmatmul.f32.gmra.mxu0 %v2833
    %v2901 = vpop.f32.mrf.mxu0
    %v2902 = vadd.f32 0.0, %v2901
    %2903 = vmatmul.f32.gmra.mxu0 %v2836
    %v2904 = vpop.f32.mrf.mxu0
    %v2905 = vadd.f32 0.0, %v2904
    %2906 = vmatmul.f32.gmra.mxu0 %v2839
    %v2907 = vpop.f32.mrf.mxu0
    %v2908 = vadd.f32 0.0, %v2907
    %2909 = vmatmul.f32.gmra.mxu0 %v2842
    %v2910 = vpop.f32.mrf.mxu0
    %v2911 = vadd.f32 0.0, %v2910
    %2912 = vmatmul.f32.gmra.mxu0 %v2845
    %v2913 = vpop.f32.mrf.mxu0
    %v2914 = vadd.f32 0.0, %v2913
    %2915 = vmatmul.f32.gmra.mxu0 %v2848
    %v2916 = vpop.f32.mrf.mxu0
    %v2917 = vadd.f32 0.0, %v2916
    %2918 = vmatmul.f32.gmra.mxu0 %v2851
    %v2919 = vpop.f32.mrf.mxu0
    %v2920 = vadd.f32 0.0, %v2919
    %2921 = vmatmul.f32.gmra.mxu0 %v2854
    %v2922 = vpop.f32.mrf.mxu0
    %v2923 = vadd.f32 0.0, %v2922
    %2924 = vmatmul.f32.gmra.mxu0 %v2857
    %v2925 = vpop.f32.mrf.mxu0
    %v2926 = vadd.f32 0.0, %v2925
    %2927 = vmatmul.f32.gmra.mxu0 %v2860
    %v2928 = vpop.f32.mrf.mxu0
    %v2929 = vadd.f32 0.0, %v2928
    %2930 = vdwg.mxu0
    %v2932 = vsel %vm255, %v2804, 0
    %2934 = vmatpush.msra.mxu0 0.0
    %2935 = vmatpush.msra.mxu0 0.0
    %2936 = vmatpush.msra.mxu0 0.0
    %2937 = vmatpush.msra.mxu0 0.0
    %2938 = vmatpush.msra.mxu0 0.0
    %2939 = vmatpush.msra.mxu0 0.0
    %2940 = vmatpush.msra.mxu0 0.0
    %2941 = vmatpush.msra.mxu0 0.0
    %2942 = vmatpush.msra.mxu0 0.0
    %2943 = vmatpush.msra.mxu0 0.0
    %2944 = vmatpush.msra.mxu0 0.0
    %2945 = vmatpush.msra.mxu0 0.0
    %2946 = vmatpush.msra.mxu0 0.0
    %2947 = vmatpush.msra.mxu0 0.0
    %2948 = vmatpush.msra.mxu0 0.0
    %2949 = vmatpush.msra.mxu0 %v2932
    %2950 = vmatmul.f32.gmra.mxu0 %v208
    %v2951 = vpop.f32.mrf.mxu0
    %v2952 = vadd.f32 %v2884, %v2951
    %2953 = vmatmul.f32.gmra.mxu0 %v211
    %v2954 = vpop.f32.mrf.mxu0
    %v2955 = vadd.f32 %v2887, %v2954
    %2956 = vmatmul.f32.gmra.mxu0 %v214
    %v2957 = vpop.f32.mrf.mxu0
    %v2958 = vadd.f32 %v2890, %v2957
    %2959 = vmatmul.f32.gmra.mxu0 %v217
    %v2960 = vpop.f32.mrf.mxu0
    %v2961 = vadd.f32 %v2893, %v2960
    %2962 = vmatmul.f32.gmra.mxu0 %v220
    %v2963 = vpop.f32.mrf.mxu0
    %v2964 = vadd.f32 %v2896, %v2963
    %2965 = vmatmul.f32.gmra.mxu0 %v223
    %v2966 = vpop.f32.mrf.mxu0
    %v2967 = vadd.f32 %v2899, %v2966
    %2968 = vmatmul.f32.gmra.mxu0 %v226
    %v2969 = vpop.f32.mrf.mxu0
    %v2970 = vadd.f32 %v2902, %v2969
    %2971 = vmatmul.f32.gmra.mxu0 %v229
    %v2972 = vpop.f32.mrf.mxu0
    %v2973 = vadd.f32 %v2905, %v2972
    %2974 = vmatmul.f32.gmra.mxu0 %v232
    %v2975 = vpop.f32.mrf.mxu0
    %v2976 = vadd.f32 %v2908, %v2975
    %2977 = vmatmul.f32.gmra.mxu0 %v235
    %v2978 = vpop.f32.mrf.mxu0
    %v2979 = vadd.f32 %v2911, %v2978
    %2980 = vmatmul.f32.gmra.mxu0 %v238
    %v2981 = vpop.f32.mrf.mxu0
    %v2982 = vadd.f32 %v2914, %v2981
    %2983 = vmatmul.f32.gmra.mxu0 %v241
    %v2984 = vpop.f32.mrf.mxu0
    %v2985 = vadd.f32 %v2917, %v2984
    %2986 = vmatmul.f32.gmra.mxu0 %v244
    %v2987 = vpop.f32.mrf.mxu0
    %v2988 = vadd.f32 %v2920, %v2987
    %2989 = vmatmul.f32.gmra.mxu0 %v247
    %v2990 = vpop.f32.mrf.mxu0
    %v2991 = vadd.f32 %v2923, %v2990
    %2992 = vmatmul.f32.gmra.mxu0 %v250
    %v2993 = vpop.f32.mrf.mxu0
    %v2994 = vadd.f32 %v2926, %v2993
    %2995 = vmatmul.f32.gmra.mxu0 %v253
    %v2996 = vpop.f32.mrf.mxu0
    %v2997 = vadd.f32 %v2929, %v2996
    %2998 = vdwg.mxu0
    %v2999 = vld [vmem:[%s11] sm:$0x1]
    %v3001 = vperm.slane %v2999, 0
    %v3003 = vadd.f32 %v2952, %v3001
    %v3004 = vadd.f32 %v2955, %v3001
    %v3005 = vadd.f32 %v2958, %v3001
    %v3006 = vadd.f32 %v2961, %v3001
    %v3007 = vadd.f32 %v2964, %v3001
    %v3008 = vadd.f32 %v2967, %v3001
    %v3009 = vadd.f32 %v2970, %v3001
    %v3010 = vadd.f32 %v2973, %v3001
    %v3011 = vadd.f32 %v2976, %v3001
    %v3012 = vadd.f32 %v2979, %v3001
    %v3013 = vadd.f32 %v2982, %v3001
    %v3014 = vadd.f32 %v2985, %v3001
    %v3015 = vadd.f32 %v2988, %v3001
    %v3016 = vadd.f32 %v2991, %v3001
    %v3017 = vadd.f32 %v2994, %v3001
    %v3018 = vadd.f32 %v2997, %v3001
    %v3019 = vmax.f32 %v3003, 0.0
    %v3020 = vmax.f32 %v3004, 0.0
    %v3021 = vmax.f32 %v3005, 0.0
    %v3022 = vmax.f32 %v3006, 0.0
    %v3023 = vmax.f32 %v3007, 0.0
    %v3024 = vmax.f32 %v3008, 0.0
    %v3025 = vmax.f32 %v3009, 0.0
    %v3026 = vmax.f32 %v3010, 0.0
    %v3027 = vmax.f32 %v3011, 0.0
    %v3028 = vmax.f32 %v3012, 0.0
    %v3029 = vmax.f32 %v3013, 0.0
    %v3030 = vmax.f32 %v3014, 0.0
    %v3031 = vmax.f32 %v3015, 0.0
    %v3032 = vmax.f32 %v3016, 0.0
    %v3033 = vmax.f32 %v3017, 0.0
    %v3034 = vmax.f32 %v3018, 0.0
    %v3035 = vld [vmem:[%s13] sm:$0xff]
    %v3036 = vld [vmem:[%s13 + $0x8] sm:$0xff]
    %v3037 = vld [vmem:[%s13 + $0x10] sm:$0xff]
    %v3038 = vld [vmem:[%s13 + $0x18] sm:$0xff]
    %v3039 = vld [vmem:[%s13 + $0x20] sm:$0xff]
    %v3040 = vld [vmem:[%s13 + $0x28] sm:$0xff]
    %v3041 = vld [vmem:[%s13 + $0x30] sm:$0xff]
    %v3042 = vld [vmem:[%s13 + $0x38] sm:$0xff]
    %v3043 = vld [vmem:[%s15] sm:$0x1]
    %v3045 = vperm.slane %v3043, 0
    %vm3047 = vcmask 523264
    %v3049 = vsel %vm3047, %v3019, 0
    %v3052 = vsel %vm3047, %v3020, 0
    %v3055 = vsel %vm3047, %v3021, 0
    %v3058 = vsel %vm3047, %v3022, 0
    %v3061 = vsel %vm3047, %v3023, 0
    %v3064 = vsel %vm3047, %v3024, 0
    %v3067 = vsel %vm3047, %v3025, 0
    %v3070 = vsel %vm3047, %v3026, 0
    %v3073 = vsel %vm3047, %v3027, 0
    %v3076 = vsel %vm3047, %v3028, 0
    %v3079 = vsel %vm3047, %v3029, 0
    %v3082 = vsel %vm3047, %v3030, 0
    %v3085 = vsel %vm3047, %v3031, 0
    %v3088 = vsel %vm3047, %v3032, 0
    %v3091 = vsel %vm3047, %v3033, 0
    %v3094 = vsel %vm3047, %v3034, 0
    %3096 = vmatpush.msra.mxu0 0.0
    %3097 = vmatpush.msra.mxu0 0.0
    %3098 = vmatpush.msra.mxu0 0.0
    %3099 = vmatpush.msra.mxu0 0.0
    %3100 = vmatpush.msra.mxu0 0.0
    %3101 = vmatpush.msra.mxu0 0.0
    %3102 = vmatpush.msra.mxu0 0.0
    %3103 = vmatpush.msra.mxu0 0.0
    %3104 = vmatpush.msra.mxu0 %v3042
    %3105 = vmatpush.msra.mxu0 %v3041
    %3106 = vmatpush.msra.mxu0 %v3040
    %3107 = vmatpush.msra.mxu0 %v3039
    %3108 = vmatpush.msra.mxu0 %v3038
    %3109 = vmatpush.msra.mxu0 %v3037
    %3110 = vmatpush.msra.mxu0 %v3036
    %3111 = vmatpush.msra.mxu0 %v3035
    %3112 = vmatmul.f32.gmra.mxu0 %v3049
    %v3113 = vpop.f32.mrf.mxu0
    %v3114 = vadd.f32 %v3045, %v3113
    %3115 = vmatmul.f32.gmra.mxu0 %v3052
    %v3116 = vpop.f32.mrf.mxu0
    %v3117 = vadd.f32 %v3045, %v3116
    %3118 = vmatmul.f32.gmra.mxu0 %v3055
    %v3119 = vpop.f32.mrf.mxu0
    %v3120 = vadd.f32 %v3045, %v3119
    %3121 = vmatmul.f32.gmra.mxu0 %v3058
    %v3122 = vpop.f32.mrf.mxu0
    %v3123 = vadd.f32 %v3045, %v3122
    %3124 = vmatmul.f32.gmra.mxu0 %v3061
    %v3125 = vpop.f32.mrf.mxu0
    %v3126 = vadd.f32 %v3045, %v3125
    %3127 = vmatmul.f32.gmra.mxu0 %v3064
    %v3128 = vpop.f32.mrf.mxu0
    %v3129 = vadd.f32 %v3045, %v3128
    %3130 = vmatmul.f32.gmra.mxu0 %v3067
    %v3131 = vpop.f32.mrf.mxu0
    %v3132 = vadd.f32 %v3045, %v3131
    %3133 = vmatmul.f32.gmra.mxu0 %v3070
    %v3134 = vpop.f32.mrf.mxu0
    %v3135 = vadd.f32 %v3045, %v3134
    %3136 = vmatmul.f32.gmra.mxu0 %v3073
    %v3137 = vpop.f32.mrf.mxu0
    %v3138 = vadd.f32 %v3045, %v3137
    %3139 = vmatmul.f32.gmra.mxu0 %v3076
    %v3140 = vpop.f32.mrf.mxu0
    %v3141 = vadd.f32 %v3045, %v3140
    %3142 = vmatmul.f32.gmra.mxu0 %v3079
    %v3143 = vpop.f32.mrf.mxu0
    %v3144 = vadd.f32 %v3045, %v3143
    %3145 = vmatmul.f32.gmra.mxu0 %v3082
    %v3146 = vpop.f32.mrf.mxu0
    %v3147 = vadd.f32 %v3045, %v3146
    %3148 = vmatmul.f32.gmra.mxu0 %v3085
    %v3149 = vpop.f32.mrf.mxu0
    %v3150 = vadd.f32 %v3045, %v3149
    %3151 = vmatmul.f32.gmra.mxu0 %v3088
    %v3152 = vpop.f32.mrf.mxu0
    %v3153 = vadd.f32 %v3045, %v3152
    %3154 = vmatmul.f32.gmra.mxu0 %v3091
    %v3155 = vpop.f32.mrf.mxu0
    %v3156 = vadd.f32 %v3045, %v3155
    %3157 = vmatmul.f32.gmra.mxu0 %v3094
    %v3158 = vpop.f32.mrf.mxu0
    %v3159 = vadd.f32 %v3045, %v3158
    %3160 = vdwg.mxu0
    %v3161 = vmax.f32 %v3114, 0.0
    %v3162 = vmax.f32 %v3117, 0.0
    %v3163 = vmax.f32 %v3120, 0.0
    %v3164 = vmax.f32 %v3123, 0.0
    %v3165 = vmax.f32 %v3126, 0.0
    %v3166 = vmax.f32 %v3129, 0.0
    %v3167 = vmax.f32 %v3132, 0.0
    %v3168 = vmax.f32 %v3135, 0.0
    %v3169 = vmax.f32 %v3138, 0.0
    %v3170 = vmax.f32 %v3141, 0.0
    %v3171 = vmax.f32 %v3144, 0.0
    %v3172 = vmax.f32 %v3147, 0.0
    %v3173 = vmax.f32 %v3150, 0.0
    %v3174 = vmax.f32 %v3153, 0.0
    %v3175 = vmax.f32 %v3156, 0.0
    %v3176 = vmax.f32 %v3159, 0.0
    %v3177 = vld [vmem:[%s17] sm:$0xff]
    %v3178 = vld [vmem:[%s17 + $0x8] sm:$0xff]
    %v3179 = vld [vmem:[%s17 + $0x10] sm:$0xff]
    %v3180 = vld [vmem:[%s17 + $0x18] sm:$0xff]
    %v3181 = vld [vmem:[%s17 + $0x20] sm:$0xff]
    %v3182 = vld [vmem:[%s17 + $0x28] sm:$0xff]
    %v3183 = vld [vmem:[%s17 + $0x30] sm:$0xff]
    %v3184 = vld [vmem:[%s17 + $0x38] sm:$0xff]
    %v3185 = vld [vmem:[%s19] sm:$0x1]
    %v3187 = vperm.slane %v3185, 0
    %v3190 = vsel %vm3047, %v3161, 0
    %v3193 = vsel %vm3047, %v3162, 0
    %v3196 = vsel %vm3047, %v3163, 0
    %v3199 = vsel %vm3047, %v3164, 0
    %v3202 = vsel %vm3047, %v3165, 0
    %v3205 = vsel %vm3047, %v3166, 0
    %v3208 = vsel %vm3047, %v3167, 0
    %v3211 = vsel %vm3047, %v3168, 0
    %v3214 = vsel %vm3047, %v3169, 0
    %v3217 = vsel %vm3047, %v3170, 0
    %v3220 = vsel %vm3047, %v3171, 0
    %v3223 = vsel %vm3047, %v3172, 0
    %v3226 = vsel %vm3047, %v3173, 0
    %v3229 = vsel %vm3047, %v3174, 0
    %v3232 = vsel %vm3047, %v3175, 0
    %v3235 = vsel %vm3047, %v3176, 0
    %3237 = vmatpush.msra.mxu0 0.0
    %3238 = vmatpush.msra.mxu0 0.0
    %3239 = vmatpush.msra.mxu0 0.0
    %3240 = vmatpush.msra.mxu0 0.0
    %3241 = vmatpush.msra.mxu0 0.0
    %3242 = vmatpush.msra.mxu0 0.0
    %3243 = vmatpush.msra.mxu0 0.0
    %3244 = vmatpush.msra.mxu0 0.0
    %3245 = vmatpush.msra.mxu0 %v3184
    %3246 = vmatpush.msra.mxu0 %v3183
    %3247 = vmatpush.msra.mxu0 %v3182
    %3248 = vmatpush.msra.mxu0 %v3181
    %3249 = vmatpush.msra.mxu0 %v3180
    %3250 = vmatpush.msra.mxu0 %v3179
    %3251 = vmatpush.msra.mxu0 %v3178
    %3252 = vmatpush.msra.mxu0 %v3177
    %3253 = vmatmul.f32.gmra.mxu0 %v3190
    %v3254 = vpop.f32.mrf.mxu0
    %v3255 = vadd.f32 %v3187, %v3254
    %3256 = vmatmul.f32.gmra.mxu0 %v3193
    %v3257 = vpop.f32.mrf.mxu0
    %v3258 = vadd.f32 %v3187, %v3257
    %3259 = vmatmul.f32.gmra.mxu0 %v3196
    %v3260 = vpop.f32.mrf.mxu0
    %v3261 = vadd.f32 %v3187, %v3260
    %3262 = vmatmul.f32.gmra.mxu0 %v3199
    %v3263 = vpop.f32.mrf.mxu0
    %v3264 = vadd.f32 %v3187, %v3263
    %3265 = vmatmul.f32.gmra.mxu0 %v3202
    %v3266 = vpop.f32.mrf.mxu0
    %v3267 = vadd.f32 %v3187, %v3266
    %3268 = vmatmul.f32.gmra.mxu0 %v3205
    %v3269 = vpop.f32.mrf.mxu0
    %v3270 = vadd.f32 %v3187, %v3269
    %3271 = vmatmul.f32.gmra.mxu0 %v3208
    %v3272 = vpop.f32.mrf.mxu0
    %v3273 = vadd.f32 %v3187, %v3272
    %3274 = vmatmul.f32.gmra.mxu0 %v3211
    %v3275 = vpop.f32.mrf.mxu0
    %v3276 = vadd.f32 %v3187, %v3275
    %3277 = vmatmul.f32.gmra.mxu0 %v3214
    %v3278 = vpop.f32.mrf.mxu0
    %v3279 = vadd.f32 %v3187, %v3278
    %3280 = vmatmul.f32.gmra.mxu0 %v3217
    %v3281 = vpop.f32.mrf.mxu0
    %v3282 = vadd.f32 %v3187, %v3281
    %3283 = vmatmul.f32.gmra.mxu0 %v3220
    %v3284 = vpop.f32.mrf.mxu0
    %v3285 = vadd.f32 %v3187, %v3284
    %3286 = vmatmul.f32.gmra.mxu0 %v3223
    %v3287 = vpop.f32.mrf.mxu0
    %v3288 = vadd.f32 %v3187, %v3287
    %3289 = vmatmul.f32.gmra.mxu0 %v3226
    %v3290 = vpop.f32.mrf.mxu0
    %v3291 = vadd.f32 %v3187, %v3290
    %3292 = vmatmul.f32.gmra.mxu0 %v3229
    %v3293 = vpop.f32.mrf.mxu0
    %v3294 = vadd.f32 %v3187, %v3293
    %3295 = vmatmul.f32.gmra.mxu0 %v3232
    %v3296 = vpop.f32.mrf.mxu0
    %v3297 = vadd.f32 %v3187, %v3296
    %3298 = vmatmul.f32.gmra.mxu0 %v3235
    %v3299 = vpop.f32.mrf.mxu0
    %v3300 = vadd.f32 %v3187, %v3299
    %3301 = vdwg.mxu0
    %v3302 = vmax.f32 %v3255, 0.0
    %v3303 = vmax.f32 %v3258, 0.0
    %v3304 = vmax.f32 %v3261, 0.0
    %v3305 = vmax.f32 %v3264, 0.0
    %v3306 = vmax.f32 %v3267, 0.0
    %v3307 = vmax.f32 %v3270, 0.0
    %v3308 = vmax.f32 %v3273, 0.0
    %v3309 = vmax.f32 %v3276, 0.0
    %v3310 = vmax.f32 %v3279, 0.0
    %v3311 = vmax.f32 %v3282, 0.0
    %v3312 = vmax.f32 %v3285, 0.0
    %v3313 = vmax.f32 %v3288, 0.0
    %v3314 = vmax.f32 %v3291, 0.0
    %v3315 = vmax.f32 %v3294, 0.0
    %v3316 = vmax.f32 %v3297, 0.0
    %v3317 = vmax.f32 %v3300, 0.0
    %v3318 = vld [vmem:[%s21] sm:$0xff]
    %v3319 = vld [vmem:[%s21 + $0x8] sm:$0xff]
    %v3320 = vld [vmem:[%s21 + $0x10] sm:$0xff]
    %v3321 = vld [vmem:[%s21 + $0x18] sm:$0xff]
    %v3322 = vld [vmem:[%s21 + $0x20] sm:$0xff]
    %v3323 = vld [vmem:[%s21 + $0x28] sm:$0xff]
    %v3324 = vld [vmem:[%s21 + $0x30] sm:$0xff]
    %v3325 = vld [vmem:[%s21 + $0x38] sm:$0xff]
    %v3326 = vld [vmem:[%s23] sm:$0x1]
    %v3328 = vperm.slane %v3326, 0
    %v3331 = vsel %vm3047, %v3302, 0
    %v3334 = vsel %vm3047, %v3303, 0
    %v3337 = vsel %vm3047, %v3304, 0
    %v3340 = vsel %vm3047, %v3305, 0
    %v3343 = vsel %vm3047, %v3306, 0
    %v3346 = vsel %vm3047, %v3307, 0
    %v3349 = vsel %vm3047, %v3308, 0
    %v3352 = vsel %vm3047, %v3309, 0
    %v3355 = vsel %vm3047, %v3310, 0
    %v3358 = vsel %vm3047, %v3311, 0
    %v3361 = vsel %vm3047, %v3312, 0
    %v3364 = vsel %vm3047, %v3313, 0
    %v3367 = vsel %vm3047, %v3314, 0
    %v3370 = vsel %vm3047, %v3315, 0
    %v3373 = vsel %vm3047, %v3316, 0
    %v3376 = vsel %vm3047, %v3317, 0
    %3378 = vmatpush.msra.mxu0 0.0
    %3379 = vmatpush.msra.mxu0 0.0
    %3380 = vmatpush.msra.mxu0 0.0
    %3381 = vmatpush.msra.mxu0 0.0
    %3382 = vmatpush.msra.mxu0 0.0
    %3383 = vmatpush.msra.mxu0 0.0
    %3384 = vmatpush.msra.mxu0 0.0
    %3385 = vmatpush.msra.mxu0 0.0
    %3386 = vmatpush.msra.mxu0 %v3325
    %3387 = vmatpush.msra.mxu0 %v3324
    %3388 = vmatpush.msra.mxu0 %v3323
    %3389 = vmatpush.msra.mxu0 %v3322
    %3390 = vmatpush.msra.mxu0 %v3321
    %3391 = vmatpush.msra.mxu0 %v3320
    %3392 = vmatpush.msra.mxu0 %v3319
    %3393 = vmatpush.msra.mxu0 %v3318
    %3394 = vmatmul.f32.gmra.mxu0 %v3331
    %v3395 = vpop.f32.mrf.mxu0
    %v3396 = vadd.f32 %v3328, %v3395
    %3397 = vmatmul.f32.gmra.mxu0 %v3334
    %v3398 = vpop.f32.mrf.mxu0
    %v3399 = vadd.f32 %v3328, %v3398
    %3400 = vmatmul.f32.gmra.mxu0 %v3337
    %v3401 = vpop.f32.mrf.mxu0
    %v3402 = vadd.f32 %v3328, %v3401
    %3403 = vmatmul.f32.gmra.mxu0 %v3340
    %v3404 = vpop.f32.mrf.mxu0
    %v3405 = vadd.f32 %v3328, %v3404
    %3406 = vmatmul.f32.gmra.mxu0 %v3343
    %v3407 = vpop.f32.mrf.mxu0
    %v3408 = vadd.f32 %v3328, %v3407
    %3409 = vmatmul.f32.gmra.mxu0 %v3346
    %v3410 = vpop.f32.mrf.mxu0
    %v3411 = vadd.f32 %v3328, %v3410
    %3412 = vmatmul.f32.gmra.mxu0 %v3349
    %v3413 = vpop.f32.mrf.mxu0
    %v3414 = vadd.f32 %v3328, %v3413
    %3415 = vmatmul.f32.gmra.mxu0 %v3352
    %v3416 = vpop.f32.mrf.mxu0
    %v3417 = vadd.f32 %v3328, %v3416
    %3418 = vmatmul.f32.gmra.mxu0 %v3355
    %v3419 = vpop.f32.mrf.mxu0
    %v3420 = vadd.f32 %v3328, %v3419
    %3421 = vmatmul.f32.gmra.mxu0 %v3358
    %v3422 = vpop.f32.mrf.mxu0
    %v3423 = vadd.f32 %v3328, %v3422
    %3424 = vmatmul.f32.gmra.mxu0 %v3361
    %v3425 = vpop.f32.mrf.mxu0
    %v3426 = vadd.f32 %v3328, %v3425
    %3427 = vmatmul.f32.gmra.mxu0 %v3364
    %v3428 = vpop.f32.mrf.mxu0
    %v3429 = vadd.f32 %v3328, %v3428
    %3430 = vmatmul.f32.gmra.mxu0 %v3367
    %v3431 = vpop.f32.mrf.mxu0
    %v3432 = vadd.f32 %v3328, %v3431
    %3433 = vmatmul.f32.gmra.mxu0 %v3370
    %v3434 = vpop.f32.mrf.mxu0
    %v3435 = vadd.f32 %v3328, %v3434
    %3436 = vmatmul.f32.gmra.mxu0 %v3373
    %v3437 = vpop.f32.mrf.mxu0
    %v3438 = vadd.f32 %v3328, %v3437
    %3439 = vmatmul.f32.gmra.mxu0 %v3376
    %v3440 = vpop.f32.mrf.mxu0
    %v3441 = vadd.f32 %v3328, %v3440
    %3442 = vdwg.mxu0
    %v3443 = vmax.f32 %v3396, 0.0
    %v3444 = vmax.f32 %v3399, 0.0
    %v3445 = vmax.f32 %v3402, 0.0
    %v3446 = vmax.f32 %v3405, 0.0
    %v3447 = vmax.f32 %v3408, 0.0
    %v3448 = vmax.f32 %v3411, 0.0
    %v3449 = vmax.f32 %v3414, 0.0
    %v3450 = vmax.f32 %v3417, 0.0
    %v3451 = vmax.f32 %v3420, 0.0
    %v3452 = vmax.f32 %v3423, 0.0
    %v3453 = vmax.f32 %v3426, 0.0
    %v3454 = vmax.f32 %v3429, 0.0
    %v3455 = vmax.f32 %v3432, 0.0
    %v3456 = vmax.f32 %v3435, 0.0
    %v3457 = vmax.f32 %v3438, 0.0
    %v3458 = vmax.f32 %v3441, 0.0
    %v3459 = vld [vmem:[%s25] sm:$0xff]
    %v3460 = vld [vmem:[%s25 + $0x8] sm:$0xff]
    %v3461 = vld [vmem:[%s25 + $0x10] sm:$0xff]
    %v3462 = vld [vmem:[%s25 + $0x18] sm:$0xff]
    %v3463 = vld [vmem:[%s25 + $0x20] sm:$0xff]
    %v3464 = vld [vmem:[%s25 + $0x28] sm:$0xff]
    %v3465 = vld [vmem:[%s25 + $0x30] sm:$0xff]
    %v3466 = vld [vmem:[%s25 + $0x38] sm:$0xff]
    %v3467 = vld [vmem:[%s27] sm:$0x1]
    %v3469 = vperm.slane %v3467, 0
    %v3472 = vsel %vm3047, %v3443, 0
    %v3475 = vsel %vm3047, %v3444, 0
    %v3478 = vsel %vm3047, %v3445, 0
    %v3481 = vsel %vm3047, %v3446, 0
    %v3484 = vsel %vm3047, %v3447, 0
    %v3487 = vsel %vm3047, %v3448, 0
    %v3490 = vsel %vm3047, %v3449, 0
    %v3493 = vsel %vm3047, %v3450, 0
    %v3496 = vsel %vm3047, %v3451, 0
    %v3499 = vsel %vm3047, %v3452, 0
    %v3502 = vsel %vm3047, %v3453, 0
    %v3505 = vsel %vm3047, %v3454, 0
    %v3508 = vsel %vm3047, %v3455, 0
    %v3511 = vsel %vm3047, %v3456, 0
    %v3514 = vsel %vm3047, %v3457, 0
    %v3517 = vsel %vm3047, %v3458, 0
    %3519 = vmatpush.msra.mxu0 0.0
    %3520 = vmatpush.msra.mxu0 0.0
    %3521 = vmatpush.msra.mxu0 0.0
    %3522 = vmatpush.msra.mxu0 0.0
    %3523 = vmatpush.msra.mxu0 0.0
    %3524 = vmatpush.msra.mxu0 0.0
    %3525 = vmatpush.msra.mxu0 0.0
    %3526 = vmatpush.msra.mxu0 0.0
    %3527 = vmatpush.msra.mxu0 %v3466
    %3528 = vmatpush.msra.mxu0 %v3465
    %3529 = vmatpush.msra.mxu0 %v3464
    %3530 = vmatpush.msra.mxu0 %v3463
    %3531 = vmatpush.msra.mxu0 %v3462
    %3532 = vmatpush.msra.mxu0 %v3461
    %3533 = vmatpush.msra.mxu0 %v3460
    %3534 = vmatpush.msra.mxu0 %v3459
    %3535 = vmatmul.f32.gmra.mxu0 %v3472
    %v3536 = vpop.f32.mrf.mxu0
    %v3537 = vadd.f32 %v3469, %v3536
    %3538 = vmatmul.f32.gmra.mxu0 %v3475
    %v3539 = vpop.f32.mrf.mxu0
    %v3540 = vadd.f32 %v3469, %v3539
    %3541 = vmatmul.f32.gmra.mxu0 %v3478
    %v3542 = vpop.f32.mrf.mxu0
    %v3543 = vadd.f32 %v3469, %v3542
    %3544 = vmatmul.f32.gmra.mxu0 %v3481
    %v3545 = vpop.f32.mrf.mxu0
    %v3546 = vadd.f32 %v3469, %v3545
    %3547 = vmatmul.f32.gmra.mxu0 %v3484
    %v3548 = vpop.f32.mrf.mxu0
    %v3549 = vadd.f32 %v3469, %v3548
    %3550 = vmatmul.f32.gmra.mxu0 %v3487
    %v3551 = vpop.f32.mrf.mxu0
    %v3552 = vadd.f32 %v3469, %v3551
    %3553 = vmatmul.f32.gmra.mxu0 %v3490
    %v3554 = vpop.f32.mrf.mxu0
    %v3555 = vadd.f32 %v3469, %v3554
    %3556 = vmatmul.f32.gmra.mxu0 %v3493
    %v3557 = vpop.f32.mrf.mxu0
    %v3558 = vadd.f32 %v3469, %v3557
    %3559 = vmatmul.f32.gmra.mxu0 %v3496
    %v3560 = vpop.f32.mrf.mxu0
    %v3561 = vadd.f32 %v3469, %v3560
    %3562 = vmatmul.f32.gmra.mxu0 %v3499
    %v3563 = vpop.f32.mrf.mxu0
    %v3564 = vadd.f32 %v3469, %v3563
    %3565 = vmatmul.f32.gmra.mxu0 %v3502
    %v3566 = vpop.f32.mrf.mxu0
    %v3567 = vadd.f32 %v3469, %v3566
    %3568 = vmatmul.f32.gmra.mxu0 %v3505
    %v3569 = vpop.f32.mrf.mxu0
    %v3570 = vadd.f32 %v3469, %v3569
    %3571 = vmatmul.f32.gmra.mxu0 %v3508
    %v3572 = vpop.f32.mrf.mxu0
    %v3573 = vadd.f32 %v3469, %v3572
    %3574 = vmatmul.f32.gmra.mxu0 %v3511
    %v3575 = vpop.f32.mrf.mxu0
    %v3576 = vadd.f32 %v3469, %v3575
    %3577 = vmatmul.f32.gmra.mxu0 %v3514
    %v3578 = vpop.f32.mrf.mxu0
    %v3579 = vadd.f32 %v3469, %v3578
    %3580 = vmatmul.f32.gmra.mxu0 %v3517
    %v3581 = vpop.f32.mrf.mxu0
    %v3582 = vadd.f32 %v3469, %v3581
    %3583 = vdwg.mxu0
    %v3584 = vmax.f32 %v3537, 0.0
    %v3585 = vmax.f32 %v3540, 0.0
    %v3586 = vmax.f32 %v3543, 0.0
    %v3587 = vmax.f32 %v3546, 0.0
    %v3588 = vmax.f32 %v3549, 0.0
    %v3589 = vmax.f32 %v3552, 0.0
    %v3590 = vmax.f32 %v3555, 0.0
    %v3591 = vmax.f32 %v3558, 0.0
    %v3592 = vmax.f32 %v3561, 0.0
    %v3593 = vmax.f32 %v3564, 0.0
    %v3594 = vmax.f32 %v3567, 0.0
    %v3595 = vmax.f32 %v3570, 0.0
    %v3596 = vmax.f32 %v3573, 0.0
    %v3597 = vmax.f32 %v3576, 0.0
    %v3598 = vmax.f32 %v3579, 0.0
    %v3599 = vmax.f32 %v3582, 0.0
    %v3600 = vld [vmem:[#allocation2] sm:$0xff]
    %v3601 = vld [vmem:[#allocation2 + $0x8] sm:$0xff]
    %v3602 = vld [vmem:[#allocation2 + $0x10] sm:$0xff]
    %v3603 = vld [vmem:[#allocation2 + $0x18] sm:$0xff]
    %v3604 = vld [vmem:[#allocation2 + $0x20] sm:$0xff]
    %v3605 = vld [vmem:[#allocation2 + $0x28] sm:$0xff]
    %v3606 = vld [vmem:[#allocation2 + $0x30] sm:$0xff]
    %v3607 = vld [vmem:[#allocation2 + $0x38] sm:$0xff]
    %v3608 = vld [vmem:[%s31] sm:$0x3f]
    %v3610 = vsel %vm255, %v3608, 0
    %3612 = vmatpush.msra.mxu0 0.0
    %3613 = vmatpush.msra.mxu0 0.0
    %3614 = vmatpush.msra.mxu0 0.0
    %3615 = vmatpush.msra.mxu0 0.0
    %3616 = vmatpush.msra.mxu0 0.0
    %3617 = vmatpush.msra.mxu0 0.0
    %3618 = vmatpush.msra.mxu0 0.0
    %3619 = vmatpush.msra.mxu0 0.0
    %3620 = vmatpush.msra.mxu0 0.0
    %3621 = vmatpush.msra.mxu0 0.0
    %3622 = vmatpush.msra.mxu0 0.0
    %3623 = vmatpush.msra.mxu0 0.0
    %3624 = vmatpush.msra.mxu0 0.0
    %3625 = vmatpush.msra.mxu0 0.0
    %3626 = vmatpush.msra.mxu0 0.0
    %3627 = vmatpush.msra.mxu0 %v3610
    %3628 = vmatmul.f32.gmra.mxu0 %v208
    %v3629 = vpop.f32.mrf.mxu0
    %v3630 = vadd.f32 0.0, %v3629
    %3631 = vmatmul.f32.gmra.mxu0 %v211
    %v3632 = vpop.f32.mrf.mxu0
    %v3633 = vadd.f32 0.0, %v3632
    %3634 = vmatmul.f32.gmra.mxu0 %v214
    %v3635 = vpop.f32.mrf.mxu0
    %v3636 = vadd.f32 0.0, %v3635
    %3637 = vmatmul.f32.gmra.mxu0 %v217
    %v3638 = vpop.f32.mrf.mxu0
    %v3639 = vadd.f32 0.0, %v3638
    %3640 = vmatmul.f32.gmra.mxu0 %v220
    %v3641 = vpop.f32.mrf.mxu0
    %v3642 = vadd.f32 0.0, %v3641
    %3643 = vmatmul.f32.gmra.mxu0 %v223
    %v3644 = vpop.f32.mrf.mxu0
    %v3645 = vadd.f32 0.0, %v3644
    %3646 = vmatmul.f32.gmra.mxu0 %v226
    %v3647 = vpop.f32.mrf.mxu0
    %v3648 = vadd.f32 0.0, %v3647
    %3649 = vmatmul.f32.gmra.mxu0 %v229
    %v3650 = vpop.f32.mrf.mxu0
    %v3651 = vadd.f32 0.0, %v3650
    %3652 = vmatmul.f32.gmra.mxu0 %v232
    %v3653 = vpop.f32.mrf.mxu0
    %v3654 = vadd.f32 0.0, %v3653
    %3655 = vmatmul.f32.gmra.mxu0 %v235
    %v3656 = vpop.f32.mrf.mxu0
    %v3657 = vadd.f32 0.0, %v3656
    %3658 = vmatmul.f32.gmra.mxu0 %v238
    %v3659 = vpop.f32.mrf.mxu0
    %v3660 = vadd.f32 0.0, %v3659
    %3661 = vmatmul.f32.gmra.mxu0 %v241
    %v3662 = vpop.f32.mrf.mxu0
    %v3663 = vadd.f32 0.0, %v3662
    %3664 = vmatmul.f32.gmra.mxu0 %v244
    %v3665 = vpop.f32.mrf.mxu0
    %v3666 = vadd.f32 0.0, %v3665
    %3667 = vmatmul.f32.gmra.mxu0 %v247
    %v3668 = vpop.f32.mrf.mxu0
    %v3669 = vadd.f32 0.0, %v3668
    %3670 = vmatmul.f32.gmra.mxu0 %v250
    %v3671 = vpop.f32.mrf.mxu0
    %v3672 = vadd.f32 0.0, %v3671
    %3673 = vmatmul.f32.gmra.mxu0 %v253
    %v3674 = vpop.f32.mrf.mxu0
    %v3675 = vadd.f32 0.0, %v3674
    %3676 = vdwg.mxu0
    %v3678 = vsel %vm3047, %v3584, 0
    %v3681 = vsel %vm3047, %v3585, 0
    %v3684 = vsel %vm3047, %v3586, 0
    %v3687 = vsel %vm3047, %v3587, 0
    %v3690 = vsel %vm3047, %v3588, 0
    %v3693 = vsel %vm3047, %v3589, 0
    %v3696 = vsel %vm3047, %v3590, 0
    %v3699 = vsel %vm3047, %v3591, 0
    %v3702 = vsel %vm3047, %v3592, 0
    %v3705 = vsel %vm3047, %v3593, 0
    %v3708 = vsel %vm3047, %v3594, 0
    %v3711 = vsel %vm3047, %v3595, 0
    %v3714 = vsel %vm3047, %v3596, 0
    %v3717 = vsel %vm3047, %v3597, 0
    %v3720 = vsel %vm3047, %v3598, 0
    %v3723 = vsel %vm3047, %v3599, 0
    %3725 = vmatpush.msra.mxu0 0.0
    %3726 = vmatpush.msra.mxu0 0.0
    %3727 = vmatpush.msra.mxu0 0.0
    %3728 = vmatpush.msra.mxu0 0.0
    %3729 = vmatpush.msra.mxu0 0.0
    %3730 = vmatpush.msra.mxu0 0.0
    %3731 = vmatpush.msra.mxu0 0.0
    %3732 = vmatpush.msra.mxu0 0.0
    %3733 = vmatpush.msra.mxu0 %v3607
    %3734 = vmatpush.msra.mxu0 %v3606
    %3735 = vmatpush.msra.mxu0 %v3605
    %3736 = vmatpush.msra.mxu0 %v3604
    %3737 = vmatpush.msra.mxu0 %v3603
    %3738 = vmatpush.msra.mxu0 %v3602
    %3739 = vmatpush.msra.mxu0 %v3601
    %3740 = vmatpush.msra.mxu0 %v3600
    %3741 = vmatmul.f32.gmra.mxu0 %v3678
    %v3742 = vpop.f32.mrf.mxu0
    %v3743 = vadd.f32 %v3630, %v3742
    %3744 = vmatmul.f32.gmra.mxu0 %v3681
    %v3745 = vpop.f32.mrf.mxu0
    %v3746 = vadd.f32 %v3633, %v3745
    %3747 = vmatmul.f32.gmra.mxu0 %v3684
    %v3748 = vpop.f32.mrf.mxu0
    %v3749 = vadd.f32 %v3636, %v3748
    %3750 = vmatmul.f32.gmra.mxu0 %v3687
    %v3751 = vpop.f32.mrf.mxu0
    %v3752 = vadd.f32 %v3639, %v3751
    %3753 = vmatmul.f32.gmra.mxu0 %v3690
    %v3754 = vpop.f32.mrf.mxu0
    %v3755 = vadd.f32 %v3642, %v3754
    %3756 = vmatmul.f32.gmra.mxu0 %v3693
    %v3757 = vpop.f32.mrf.mxu0
    %v3758 = vadd.f32 %v3645, %v3757
    %3759 = vmatmul.f32.gmra.mxu0 %v3696
    %v3760 = vpop.f32.mrf.mxu0
    %v3761 = vadd.f32 %v3648, %v3760
    %3762 = vmatmul.f32.gmra.mxu0 %v3699
    %v3763 = vpop.f32.mrf.mxu0
    %v3764 = vadd.f32 %v3651, %v3763
    %3765 = vmatmul.f32.gmra.mxu0 %v3702
    %v3766 = vpop.f32.mrf.mxu0
    %v3767 = vadd.f32 %v3654, %v3766
    %3768 = vmatmul.f32.gmra.mxu0 %v3705
    %v3769 = vpop.f32.mrf.mxu0
    %v3770 = vadd.f32 %v3657, %v3769
    %3771 = vmatmul.f32.gmra.mxu0 %v3708
    %v3772 = vpop.f32.mrf.mxu0
    %v3773 = vadd.f32 %v3660, %v3772
    %3774 = vmatmul.f32.gmra.mxu0 %v3711
    %v3775 = vpop.f32.mrf.mxu0
    %v3776 = vadd.f32 %v3663, %v3775
    %3777 = vmatmul.f32.gmra.mxu0 %v3714
    %v3778 = vpop.f32.mrf.mxu0
    %v3779 = vadd.f32 %v3666, %v3778
    %3780 = vmatmul.f32.gmra.mxu0 %v3717
    %v3781 = vpop.f32.mrf.mxu0
    %v3782 = vadd.f32 %v3669, %v3781
    %3783 = vmatmul.f32.gmra.mxu0 %v3720
    %v3784 = vpop.f32.mrf.mxu0
    %v3785 = vadd.f32 %v3672, %v3784
    %3786 = vmatmul.f32.gmra.mxu0 %v3723
    %v3787 = vpop.f32.mrf.mxu0
    %v3788 = vadd.f32 %v3675, %v3787
    %3789 = vdwg.mxu0
    %v3790 = vld [vmem:[#allocation4] sm:$0xff]
    %v3791 = vld [vmem:[#allocation4 + $0x8] sm:$0xff]
    %v3792 = vld [vmem:[#allocation4 + $0x10] sm:$0xff]
    %v3793 = vld [vmem:[#allocation4 + $0x18] sm:$0xff]
    %v3794 = vld [vmem:[#allocation4 + $0x20] sm:$0xff]
    %v3795 = vld [vmem:[#allocation4 + $0x28] sm:$0xff]
    %v3796 = vld [vmem:[#allocation4 + $0x30] sm:$0xff]
    %v3797 = vld [vmem:[#allocation4 + $0x38] sm:$0xf]
    %v3799 = vsel %vm2862, %v3797, 0
    %3801 = vmatpush.msra.mxu0 0.0
    %3802 = vmatpush.msra.mxu0 0.0
    %3803 = vmatpush.msra.mxu0 0.0
    %3804 = vmatpush.msra.mxu0 0.0
    %3805 = vmatpush.msra.mxu0 0.0
    %3806 = vmatpush.msra.mxu0 0.0
    %3807 = vmatpush.msra.mxu0 0.0
    %3808 = vmatpush.msra.mxu0 0.0
    %3809 = vmatpush.msra.mxu0 %v3799
    %3810 = vmatpush.msra.mxu0 %v3796
    %3811 = vmatpush.msra.mxu0 %v3795
    %3812 = vmatpush.msra.mxu0 %v3794
    %3813 = vmatpush.msra.mxu0 %v3793
    %3814 = vmatpush.msra.mxu0 %v3792
    %3815 = vmatpush.msra.mxu0 %v3791
    %3816 = vmatpush.msra.mxu0 %v3790
    %3817 = vmatmul.f32.gmra.mxu0 %v2815
    %v3818 = vpop.f32.mrf.mxu0
    %v3819 = vadd.f32 0.0, %v3818
    %3820 = vmatmul.f32.gmra.mxu0 %v2818
    %v3821 = vpop.f32.mrf.mxu0
    %v3822 = vadd.f32 0.0, %v3821
    %3823 = vmatmul.f32.gmra.mxu0 %v2821
    %v3824 = vpop.f32.mrf.mxu0
    %v3825 = vadd.f32 0.0, %v3824
    %3826 = vmatmul.f32.gmra.mxu0 %v2824
    %v3827 = vpop.f32.mrf.mxu0
    %v3828 = vadd.f32 0.0, %v3827
    %3829 = vmatmul.f32.gmra.mxu0 %v2827
    %v3830 = vpop.f32.mrf.mxu0
    %v3831 = vadd.f32 0.0, %v3830
    %3832 = vmatmul.f32.gmra.mxu0 %v2830
    %v3833 = vpop.f32.mrf.mxu0
    %v3834 = vadd.f32 0.0, %v3833
    %3835 = vmatmul.f32.gmra.mxu0 %v2833
    %v3836 = vpop.f32.mrf.mxu0
    %v3837 = vadd.f32 0.0, %v3836
    %3838 = vmatmul.f32.gmra.mxu0 %v2836
    %v3839 = vpop.f32.mrf.mxu0
    %v3840 = vadd.f32 0.0, %v3839
    %3841 = vmatmul.f32.gmra.mxu0 %v2839
    %v3842 = vpop.f32.mrf.mxu0
    %v3843 = vadd.f32 0.0, %v3842
    %3844 = vmatmul.f32.gmra.mxu0 %v2842
    %v3845 = vpop.f32.mrf.mxu0
    %v3846 = vadd.f32 0.0, %v3845
    %3847 = vmatmul.f32.gmra.mxu0 %v2845
    %v3848 = vpop.f32.mrf.mxu0
    %v3849 = vadd.f32 0.0, %v3848
    %3850 = vmatmul.f32.gmra.mxu0 %v2848
    %v3851 = vpop.f32.mrf.mxu0
    %v3852 = vadd.f32 0.0, %v3851
    %3853 = vmatmul.f32.gmra.mxu0 %v2851
    %v3854 = vpop.f32.mrf.mxu0
    %v3855 = vadd.f32 0.0, %v3854
    %3856 = vmatmul.f32.gmra.mxu0 %v2854
    %v3857 = vpop.f32.mrf.mxu0
    %v3858 = vadd.f32 0.0, %v3857
    %3859 = vmatmul.f32.gmra.mxu0 %v2857
    %v3860 = vpop.f32.mrf.mxu0
    %v3861 = vadd.f32 0.0, %v3860
    %3862 = vmatmul.f32.gmra.mxu0 %v2860
    %v3863 = vpop.f32.mrf.mxu0
    %v3864 = vadd.f32 0.0, %v3863
    %3865 = vdwg.mxu0
    %v3866 = vadd.f32 %v3743, %v3819
    %v3867 = vadd.f32 %v3746, %v3822
    %v3868 = vadd.f32 %v3749, %v3825
    %v3869 = vadd.f32 %v3752, %v3828
    %v3870 = vadd.f32 %v3755, %v3831
    %v3871 = vadd.f32 %v3758, %v3834
    %v3872 = vadd.f32 %v3761, %v3837
    %v3873 = vadd.f32 %v3764, %v3840
    %v3874 = vadd.f32 %v3767, %v3843
    %v3875 = vadd.f32 %v3770, %v3846
    %v3876 = vadd.f32 %v3773, %v3849
    %v3877 = vadd.f32 %v3776, %v3852
    %v3878 = vadd.f32 %v3779, %v3855
    %v3879 = vadd.f32 %v3782, %v3858
    %v3880 = vadd.f32 %v3785, %v3861
    %v3881 = vadd.f32 %v3788, %v3864
    %v3882 = vld [vmem:[%s35] sm:$0x1]
    %v3884 = vperm.slane %v3882, 0
    %v3886 = vadd.f32 %v3866, %v3884
    %v3887 = vadd.f32 %v3867, %v3884
    %v3888 = vadd.f32 %v3868, %v3884
    %v3889 = vadd.f32 %v3869, %v3884
    %v3890 = vadd.f32 %v3870, %v3884
    %v3891 = vadd.f32 %v3871, %v3884
    %v3892 = vadd.f32 %v3872, %v3884
    %v3893 = vadd.f32 %v3873, %v3884
    %v3894 = vadd.f32 %v3874, %v3884
    %v3895 = vadd.f32 %v3875, %v3884
    %v3896 = vadd.f32 %v3876, %v3884
    %v3897 = vadd.f32 %v3877, %v3884
    %v3898 = vadd.f32 %v3878, %v3884
    %v3899 = vadd.f32 %v3879, %v3884
    %v3900 = vadd.f32 %v3880, %v3884
    %v3901 = vadd.f32 %v3881, %v3884
    %v3902 = vmax.f32 %v3886, 0.0
    %v3903 = vmax.f32 %v3887, 0.0
    %v3904 = vmax.f32 %v3888, 0.0
    %v3905 = vmax.f32 %v3889, 0.0
    %v3906 = vmax.f32 %v3890, 0.0
    %v3907 = vmax.f32 %v3891, 0.0
    %v3908 = vmax.f32 %v3892, 0.0
    %v3909 = vmax.f32 %v3893, 0.0
    %v3910 = vmax.f32 %v3894, 0.0
    %v3911 = vmax.f32 %v3895, 0.0
    %v3912 = vmax.f32 %v3896, 0.0
    %v3913 = vmax.f32 %v3897, 0.0
    %v3914 = vmax.f32 %v3898, 0.0
    %v3915 = vmax.f32 %v3899, 0.0
    %v3916 = vmax.f32 %v3900, 0.0
    %v3917 = vmax.f32 %v3901, 0.0
    %v3918 = vld [vmem:[#allocation6] sm:$0xff]
    %v3919 = vld [vmem:[#allocation6 + $0x8] sm:$0xff]
    %v3920 = vld [vmem:[#allocation6 + $0x10] sm:$0xff]
    %v3921 = vld [vmem:[#allocation6 + $0x18] sm:$0xff]
    %v3922 = vld [vmem:[#allocation6 + $0x20] sm:$0xff]
    %v3923 = vld [vmem:[#allocation6 + $0x28] sm:$0xff]
    %v3924 = vld [vmem:[#allocation6 + $0x30] sm:$0xff]
    %v3925 = vld [vmem:[#allocation6 + $0x38] sm:$0xff]
    %v3926 = vld [vmem:[%s39] sm:$0x1]
    %v3928 = vperm.slane %v3926, 0
    %v3931 = vsel %vm3047, %v3902, 0
    %v3934 = vsel %vm3047, %v3903, 0
    %v3937 = vsel %vm3047, %v3904, 0
    %v3940 = vsel %vm3047, %v3905, 0
    %v3943 = vsel %vm3047, %v3906, 0
    %v3946 = vsel %vm3047, %v3907, 0
    %v3949 = vsel %vm3047, %v3908, 0
    %v3952 = vsel %vm3047, %v3909, 0
    %v3955 = vsel %vm3047, %v3910, 0
    %v3958 = vsel %vm3047, %v3911, 0
    %v3961 = vsel %vm3047, %v3912, 0
    %v3964 = vsel %vm3047, %v3913, 0
    %v3967 = vsel %vm3047, %v3914, 0
    %v3970 = vsel %vm3047, %v3915, 0
    %v3973 = vsel %vm3047, %v3916, 0
    %v3976 = vsel %vm3047, %v3917, 0
    %3978 = vmatpush.msra.mxu0 0.0
    %3979 = vmatpush.msra.mxu0 0.0
    %3980 = vmatpush.msra.mxu0 0.0
    %3981 = vmatpush.msra.mxu0 0.0
    %3982 = vmatpush.msra.mxu0 0.0
    %3983 = vmatpush.msra.mxu0 0.0
    %3984 = vmatpush.msra.mxu0 0.0
    %3985 = vmatpush.msra.mxu0 0.0
    %3986 = vmatpush.msra.mxu0 %v3925
    %3987 = vmatpush.msra.mxu0 %v3924
    %3988 = vmatpush.msra.mxu0 %v3923
    %3989 = vmatpush.msra.mxu0 %v3922
    %3990 = vmatpush.msra.mxu0 %v3921
    %3991 = vmatpush.msra.mxu0 %v3920
    %3992 = vmatpush.msra.mxu0 %v3919
    %3993 = vmatpush.msra.mxu0 %v3918
    %3994 = vmatmul.f32.gmra.mxu0 %v3931
    %v3995 = vpop.f32.mrf.mxu0
    %v3996 = vadd.f32 %v3928, %v3995
    %3997 = vmatmul.f32.gmra.mxu0 %v3934
    %v3998 = vpop.f32.mrf.mxu0
    %v3999 = vadd.f32 %v3928, %v3998
    %4000 = vmatmul.f32.gmra.mxu0 %v3937
    %v4001 = vpop.f32.mrf.mxu0
    %v4002 = vadd.f32 %v3928, %v4001
    %4003 = vmatmul.f32.gmra.mxu0 %v3940
    %v4004 = vpop.f32.mrf.mxu0
    %v4005 = vadd.f32 %v3928, %v4004
    %4006 = vmatmul.f32.gmra.mxu0 %v3943
    %v4007 = vpop.f32.mrf.mxu0
    %v4008 = vadd.f32 %v3928, %v4007
    %4009 = vmatmul.f32.gmra.mxu0 %v3946
    %v4010 = vpop.f32.mrf.mxu0
    %v4011 = vadd.f32 %v3928, %v4010
    %4012 = vmatmul.f32.gmra.mxu0 %v3949
    %v4013 = vpop.f32.mrf.mxu0
    %v4014 = vadd.f32 %v3928, %v4013
    %4015 = vmatmul.f32.gmra.mxu0 %v3952
    %v4016 = vpop.f32.mrf.mxu0
    %v4017 = vadd.f32 %v3928, %v4016
    %4018 = vmatmul.f32.gmra.mxu0 %v3955
    %v4019 = vpop.f32.mrf.mxu0
    %v4020 = vadd.f32 %v3928, %v4019
    %4021 = vmatmul.f32.gmra.mxu0 %v3958
    %v4022 = vpop.f32.mrf.mxu0
    %v4023 = vadd.f32 %v3928, %v4022
    %4024 = vmatmul.f32.gmra.mxu0 %v3961
    %v4025 = vpop.f32.mrf.mxu0
    %v4026 = vadd.f32 %v3928, %v4025
    %4027 = vmatmul.f32.gmra.mxu0 %v3964
    %v4028 = vpop.f32.mrf.mxu0
    %v4029 = vadd.f32 %v3928, %v4028
    %4030 = vmatmul.f32.gmra.mxu0 %v3967
    %v4031 = vpop.f32.mrf.mxu0
    %v4032 = vadd.f32 %v3928, %v4031
    %4033 = vmatmul.f32.gmra.mxu0 %v3970
    %v4034 = vpop.f32.mrf.mxu0
    %v4035 = vadd.f32 %v3928, %v4034
    %4036 = vmatmul.f32.gmra.mxu0 %v3973
    %v4037 = vpop.f32.mrf.mxu0
    %v4038 = vadd.f32 %v3928, %v4037
    %4039 = vmatmul.f32.gmra.mxu0 %v3976
    %v4040 = vpop.f32.mrf.mxu0
    %v4041 = vadd.f32 %v3928, %v4040
    %4042 = vdwg.mxu0
    %v4043 = vmax.f32 %v3996, 0.0
    %v4044 = vmax.f32 %v3999, 0.0
    %v4045 = vmax.f32 %v4002, 0.0
    %v4046 = vmax.f32 %v4005, 0.0
    %v4047 = vmax.f32 %v4008, 0.0
    %v4048 = vmax.f32 %v4011, 0.0
    %v4049 = vmax.f32 %v4014, 0.0
    %v4050 = vmax.f32 %v4017, 0.0
    %v4051 = vmax.f32 %v4020, 0.0
    %v4052 = vmax.f32 %v4023, 0.0
    %v4053 = vmax.f32 %v4026, 0.0
    %v4054 = vmax.f32 %v4029, 0.0
    %v4055 = vmax.f32 %v4032, 0.0
    %v4056 = vmax.f32 %v4035, 0.0
    %v4057 = vmax.f32 %v4038, 0.0
    %v4058 = vmax.f32 %v4041, 0.0
    %v4059 = vld [vmem:[#allocation7] sm:$0xff]
    %v4060 = vld [vmem:[#allocation7 + $0x8] sm:$0xff]
    %v4061 = vld [vmem:[#allocation7 + $0x10] sm:$0xff]
    %v4062 = vld [vmem:[#allocation7 + $0x18] sm:$0xff]
    %v4063 = vld [vmem:[#allocation7 + $0x20] sm:$0xff]
    %v4064 = vld [vmem:[#allocation7 + $0x28] sm:$0xff]
    %v4065 = vld [vmem:[#allocation7 + $0x30] sm:$0xff]
    %v4066 = vld [vmem:[#allocation7 + $0x38] sm:$0xff]
    %v4067 = vld [vmem:[%s43] sm:$0x1]
    %v4069 = vperm.slane %v4067, 0
    %v4072 = vsel %vm3047, %v4043, 0
    %v4075 = vsel %vm3047, %v4044, 0
    %v4078 = vsel %vm3047, %v4045, 0
    %v4081 = vsel %vm3047, %v4046, 0
    %v4084 = vsel %vm3047, %v4047, 0
    %v4087 = vsel %vm3047, %v4048, 0
    %v4090 = vsel %vm3047, %v4049, 0
    %v4093 = vsel %vm3047, %v4050, 0
    %v4096 = vsel %vm3047, %v4051, 0
    %v4099 = vsel %vm3047, %v4052, 0
    %v4102 = vsel %vm3047, %v4053, 0
    %v4105 = vsel %vm3047, %v4054, 0
    %v4108 = vsel %vm3047, %v4055, 0
    %v4111 = vsel %vm3047, %v4056, 0
    %v4114 = vsel %vm3047, %v4057, 0
    %v4117 = vsel %vm3047, %v4058, 0
    %4119 = vmatpush.msra.mxu0 0.0
    %4120 = vmatpush.msra.mxu0 0.0
    %4121 = vmatpush.msra.mxu0 0.0
    %4122 = vmatpush.msra.mxu0 0.0
    %4123 = vmatpush.msra.mxu0 0.0
    %4124 = vmatpush.msra.mxu0 0.0
    %4125 = vmatpush.msra.mxu0 0.0
    %4126 = vmatpush.msra.mxu0 0.0
    %4127 = vmatpush.msra.mxu0 %v4066
    %4128 = vmatpush.msra.mxu0 %v4065
    %4129 = vmatpush.msra.mxu0 %v4064
    %4130 = vmatpush.msra.mxu0 %v4063
    %4131 = vmatpush.msra.mxu0 %v4062
    %4132 = vmatpush.msra.mxu0 %v4061
    %4133 = vmatpush.msra.mxu0 %v4060
    %4134 = vmatpush.msra.mxu0 %v4059
    %4135 = vmatmul.f32.gmra.mxu0 %v4072
    %v4136 = vpop.f32.mrf.mxu0
    %v4137 = vadd.f32 %v4069, %v4136
    %4138 = vmatmul.f32.gmra.mxu0 %v4075
    %v4139 = vpop.f32.mrf.mxu0
    %v4140 = vadd.f32 %v4069, %v4139
    %4141 = vmatmul.f32.gmra.mxu0 %v4078
    %v4142 = vpop.f32.mrf.mxu0
    %v4143 = vadd.f32 %v4069, %v4142
    %4144 = vmatmul.f32.gmra.mxu0 %v4081
    %v4145 = vpop.f32.mrf.mxu0
    %v4146 = vadd.f32 %v4069, %v4145
    %4147 = vmatmul.f32.gmra.mxu0 %v4084
    %v4148 = vpop.f32.mrf.mxu0
    %v4149 = vadd.f32 %v4069, %v4148
    %4150 = vmatmul.f32.gmra.mxu0 %v4087
    %v4151 = vpop.f32.mrf.mxu0
    %v4152 = vadd.f32 %v4069, %v4151
    %4153 = vmatmul.f32.gmra.mxu0 %v4090
    %v4154 = vpop.f32.mrf.mxu0
    %v4155 = vadd.f32 %v4069, %v4154
    %4156 = vmatmul.f32.gmra.mxu0 %v4093
    %v4157 = vpop.f32.mrf.mxu0
    %v4158 = vadd.f32 %v4069, %v4157
    %4159 = vmatmul.f32.gmra.mxu0 %v4096
    %v4160 = vpop.f32.mrf.mxu0
    %v4161 = vadd.f32 %v4069, %v4160
    %4162 = vmatmul.f32.gmra.mxu0 %v4099
    %v4163 = vpop.f32.mrf.mxu0
    %v4164 = vadd.f32 %v4069, %v4163
    %4165 = vmatmul.f32.gmra.mxu0 %v4102
    %v4166 = vpop.f32.mrf.mxu0
    %v4167 = vadd.f32 %v4069, %v4166
    %4168 = vmatmul.f32.gmra.mxu0 %v4105
    %v4169 = vpop.f32.mrf.mxu0
    %v4170 = vadd.f32 %v4069, %v4169
    %4171 = vmatmul.f32.gmra.mxu0 %v4108
    %v4172 = vpop.f32.mrf.mxu0
    %v4173 = vadd.f32 %v4069, %v4172
    %4174 = vmatmul.f32.gmra.mxu0 %v4111
    %v4175 = vpop.f32.mrf.mxu0
    %v4176 = vadd.f32 %v4069, %v4175
    %4177 = vmatmul.f32.gmra.mxu0 %v4114
    %v4178 = vpop.f32.mrf.mxu0
    %v4179 = vadd.f32 %v4069, %v4178
    %4180 = vmatmul.f32.gmra.mxu0 %v4117
    %v4181 = vpop.f32.mrf.mxu0
    %v4182 = vadd.f32 %v4069, %v4181
    %4183 = vdwg.mxu0
    %v4184 = vmax.f32 %v4137, 0.0
    %v4185 = vmax.f32 %v4140, 0.0
    %v4186 = vmax.f32 %v4143, 0.0
    %v4187 = vmax.f32 %v4146, 0.0
    %v4188 = vmax.f32 %v4149, 0.0
    %v4189 = vmax.f32 %v4152, 0.0
    %v4190 = vmax.f32 %v4155, 0.0
    %v4191 = vmax.f32 %v4158, 0.0
    %v4192 = vmax.f32 %v4161, 0.0
    %v4193 = vmax.f32 %v4164, 0.0
    %v4194 = vmax.f32 %v4167, 0.0
    %v4195 = vmax.f32 %v4170, 0.0
    %v4196 = vmax.f32 %v4173, 0.0
    %v4197 = vmax.f32 %v4176, 0.0
    %v4198 = vmax.f32 %v4179, 0.0
    %v4199 = vmax.f32 %v4182, 0.0
    %v4200 = vld [vmem:[%s47] sm:$0xff]
    %v4201 = vld [vmem:[%s47 + $0x8] sm:$0xff]
    %v4202 = vld [vmem:[%s47 + $0x10] sm:$0xff]
    %v4203 = vld [vmem:[%s47 + $0x18] sm:$0xff]
    %v4204 = vld [vmem:[%s47 + $0x20] sm:$0xff]
    %v4205 = vld [vmem:[%s47 + $0x28] sm:$0xff]
    %v4206 = vld [vmem:[%s47 + $0x30] sm:$0xff]
    %v4207 = vld [vmem:[%s47 + $0x38] sm:$0xff]
    %v4208 = vld [vmem:[%s49] sm:$0x3f]
    %v4210 = vsel %vm255, %v4208, 0
    %4212 = vmatpush.msra.mxu0 0.0
    %4213 = vmatpush.msra.mxu0 0.0
    %4214 = vmatpush.msra.mxu0 0.0
    %4215 = vmatpush.msra.mxu0 0.0
    %4216 = vmatpush.msra.mxu0 0.0
    %4217 = vmatpush.msra.mxu0 0.0
    %4218 = vmatpush.msra.mxu0 0.0
    %4219 = vmatpush.msra.mxu0 0.0
    %4220 = vmatpush.msra.mxu0 0.0
    %4221 = vmatpush.msra.mxu0 0.0
    %4222 = vmatpush.msra.mxu0 0.0
    %4223 = vmatpush.msra.mxu0 0.0
    %4224 = vmatpush.msra.mxu0 0.0
    %4225 = vmatpush.msra.mxu0 0.0
    %4226 = vmatpush.msra.mxu0 0.0
    %4227 = vmatpush.msra.mxu0 %v4210
    %4228 = vmatmul.f32.gmra.mxu0 %v208
    %v4229 = vpop.f32.mrf.mxu0
    %v4230 = vadd.f32 0.0, %v4229
    %4231 = vmatmul.f32.gmra.mxu0 %v211
    %v4232 = vpop.f32.mrf.mxu0
    %v4233 = vadd.f32 0.0, %v4232
    %4234 = vmatmul.f32.gmra.mxu0 %v214
    %v4235 = vpop.f32.mrf.mxu0
    %v4236 = vadd.f32 0.0, %v4235
    %4237 = vmatmul.f32.gmra.mxu0 %v217
    %v4238 = vpop.f32.mrf.mxu0
    %v4239 = vadd.f32 0.0, %v4238
    %4240 = vmatmul.f32.gmra.mxu0 %v220
    %v4241 = vpop.f32.mrf.mxu0
    %v4242 = vadd.f32 0.0, %v4241
    %4243 = vmatmul.f32.gmra.mxu0 %v223
    %v4244 = vpop.f32.mrf.mxu0
    %v4245 = vadd.f32 0.0, %v4244
    %4246 = vmatmul.f32.gmra.mxu0 %v226
    %v4247 = vpop.f32.mrf.mxu0
    %v4248 = vadd.f32 0.0, %v4247
    %4249 = vmatmul.f32.gmra.mxu0 %v229
    %v4250 = vpop.f32.mrf.mxu0
    %v4251 = vadd.f32 0.0, %v4250
    %4252 = vmatmul.f32.gmra.mxu0 %v232
    %v4253 = vpop.f32.mrf.mxu0
    %v4254 = vadd.f32 0.0, %v4253
    %4255 = vmatmul.f32.gmra.mxu0 %v235
    %v4256 = vpop.f32.mrf.mxu0
    %v4257 = vadd.f32 0.0, %v4256
    %4258 = vmatmul.f32.gmra.mxu0 %v238
    %v4259 = vpop.f32.mrf.mxu0
    %v4260 = vadd.f32 0.0, %v4259
    %4261 = vmatmul.f32.gmra.mxu0 %v241
    %v4262 = vpop.f32.mrf.mxu0
    %v4263 = vadd.f32 0.0, %v4262
    %4264 = vmatmul.f32.gmra.mxu0 %v244
    %v4265 = vpop.f32.mrf.mxu0
    %v4266 = vadd.f32 0.0, %v4265
    %4267 = vmatmul.f32.gmra.mxu0 %v247
    %v4268 = vpop.f32.mrf.mxu0
    %v4269 = vadd.f32 0.0, %v4268
    %4270 = vmatmul.f32.gmra.mxu0 %v250
    %v4271 = vpop.f32.mrf.mxu0
    %v4272 = vadd.f32 0.0, %v4271
    %4273 = vmatmul.f32.gmra.mxu0 %v253
    %v4274 = vpop.f32.mrf.mxu0
    %v4275 = vadd.f32 0.0, %v4274
    %4276 = vdwg.mxu0
    %v4278 = vsel %vm3047, %v4184, 0
    %v4281 = vsel %vm3047, %v4185, 0
    %v4284 = vsel %vm3047, %v4186, 0
    %v4287 = vsel %vm3047, %v4187, 0
    %v4290 = vsel %vm3047, %v4188, 0
    %v4293 = vsel %vm3047, %v4189, 0
    %v4296 = vsel %vm3047, %v4190, 0
    %v4299 = vsel %vm3047, %v4191, 0
    %v4302 = vsel %vm3047, %v4192, 0
    %v4305 = vsel %vm3047, %v4193, 0
    %v4308 = vsel %vm3047, %v4194, 0
    %v4311 = vsel %vm3047, %v4195, 0
    %v4314 = vsel %vm3047, %v4196, 0
    %v4317 = vsel %vm3047, %v4197, 0
    %v4320 = vsel %vm3047, %v4198, 0
    %v4323 = vsel %vm3047, %v4199, 0
    %4325 = vmatpush.msra.mxu0 0.0
    %4326 = vmatpush.msra.mxu0 0.0
    %4327 = vmatpush.msra.mxu0 0.0
    %4328 = vmatpush.msra.mxu0 0.0
    %4329 = vmatpush.msra.mxu0 0.0
    %4330 = vmatpush.msra.mxu0 0.0
    %4331 = vmatpush.msra.mxu0 0.0
    %4332 = vmatpush.msra.mxu0 0.0
    %4333 = vmatpush.msra.mxu0 %v4207
    %4334 = vmatpush.msra.mxu0 %v4206
    %4335 = vmatpush.msra.mxu0 %v4205
    %4336 = vmatpush.msra.mxu0 %v4204
    %4337 = vmatpush.msra.mxu0 %v4203
    %4338 = vmatpush.msra.mxu0 %v4202
    %4339 = vmatpush.msra.mxu0 %v4201
    %4340 = vmatpush.msra.mxu0 %v4200
    %4341 = vmatmul.f32.gmra.mxu0 %v4278
    %v4342 = vpop.f32.mrf.mxu0
    %v4343 = vadd.f32 %v4230, %v4342
    %4344 = vmatmul.f32.gmra.mxu0 %v4281
    %v4345 = vpop.f32.mrf.mxu0
    %v4346 = vadd.f32 %v4233, %v4345
    %4347 = vmatmul.f32.gmra.mxu0 %v4284
    %v4348 = vpop.f32.mrf.mxu0
    %v4349 = vadd.f32 %v4236, %v4348
    %4350 = vmatmul.f32.gmra.mxu0 %v4287
    %v4351 = vpop.f32.mrf.mxu0
    %v4352 = vadd.f32 %v4239, %v4351
    %4353 = vmatmul.f32.gmra.mxu0 %v4290
    %v4354 = vpop.f32.mrf.mxu0
    %v4355 = vadd.f32 %v4242, %v4354
    %4356 = vmatmul.f32.gmra.mxu0 %v4293
    %v4357 = vpop.f32.mrf.mxu0
    %v4358 = vadd.f32 %v4245, %v4357
    %4359 = vmatmul.f32.gmra.mxu0 %v4296
    %v4360 = vpop.f32.mrf.mxu0
    %v4361 = vadd.f32 %v4248, %v4360
    %4362 = vmatmul.f32.gmra.mxu0 %v4299
    %v4363 = vpop.f32.mrf.mxu0
    %v4364 = vadd.f32 %v4251, %v4363
    %4365 = vmatmul.f32.gmra.mxu0 %v4302
    %v4366 = vpop.f32.mrf.mxu0
    %v4367 = vadd.f32 %v4254, %v4366
    %4368 = vmatmul.f32.gmra.mxu0 %v4305
    %v4369 = vpop.f32.mrf.mxu0
    %v4370 = vadd.f32 %v4257, %v4369
    %4371 = vmatmul.f32.gmra.mxu0 %v4308
    %v4372 = vpop.f32.mrf.mxu0
    %v4373 = vadd.f32 %v4260, %v4372
    %4374 = vmatmul.f32.gmra.mxu0 %v4311
    %v4375 = vpop.f32.mrf.mxu0
    %v4376 = vadd.f32 %v4263, %v4375
    %4377 = vmatmul.f32.gmra.mxu0 %v4314
    %v4378 = vpop.f32.mrf.mxu0
    %v4379 = vadd.f32 %v4266, %v4378
    %4380 = vmatmul.f32.gmra.mxu0 %v4317
    %v4381 = vpop.f32.mrf.mxu0
    %v4382 = vadd.f32 %v4269, %v4381
    %4383 = vmatmul.f32.gmra.mxu0 %v4320
    %v4384 = vpop.f32.mrf.mxu0
    %v4385 = vadd.f32 %v4272, %v4384
    %4386 = vmatmul.f32.gmra.mxu0 %v4323
    %v4387 = vpop.f32.mrf.mxu0
    %v4388 = vadd.f32 %v4275, %v4387
    %4389 = vdwg.mxu0
    %v4390 = vld [vmem:[%s51] sm:$0xff]
    %v4391 = vld [vmem:[%s51 + $0x8] sm:$0xff]
    %v4392 = vld [vmem:[%s51 + $0x10] sm:$0xff]
    %v4393 = vld [vmem:[%s51 + $0x18] sm:$0xff]
    %v4394 = vld [vmem:[%s51 + $0x20] sm:$0xff]
    %v4395 = vld [vmem:[%s51 + $0x28] sm:$0xff]
    %v4396 = vld [vmem:[%s51 + $0x30] sm:$0xff]
    %v4397 = vld [vmem:[%s51 + $0x38] sm:$0xf]
    %v4399 = vsel %vm2862, %v4397, 0
    %4401 = vmatpush.msra.mxu0 0.0
    %4402 = vmatpush.msra.mxu0 0.0
    %4403 = vmatpush.msra.mxu0 0.0
    %4404 = vmatpush.msra.mxu0 0.0
    %4405 = vmatpush.msra.mxu0 0.0
    %4406 = vmatpush.msra.mxu0 0.0
    %4407 = vmatpush.msra.mxu0 0.0
    %4408 = vmatpush.msra.mxu0 0.0
    %4409 = vmatpush.msra.mxu0 %v4399
    %4410 = vmatpush.msra.mxu0 %v4396
    %4411 = vmatpush.msra.mxu0 %v4395
    %4412 = vmatpush.msra.mxu0 %v4394
    %4413 = vmatpush.msra.mxu0 %v4393
    %4414 = vmatpush.msra.mxu0 %v4392
    %4415 = vmatpush.msra.mxu0 %v4391
    %4416 = vmatpush.msra.mxu0 %v4390
    %4417 = vmatmul.f32.gmra.mxu0 %v2815
    %v4418 = vpop.f32.mrf.mxu0
    %v4419 = vadd.f32 0.0, %v4418
    %4420 = vmatmul.f32.gmra.mxu0 %v2818
    %v4421 = vpop.f32.mrf.mxu0
    %v4422 = vadd.f32 0.0, %v4421
    %4423 = vmatmul.f32.gmra.mxu0 %v2821
    %v4424 = vpop.f32.mrf.mxu0
    %v4425 = vadd.f32 0.0, %v4424
    %4426 = vmatmul.f32.gmra.mxu0 %v2824
    %v4427 = vpop.f32.mrf.mxu0
    %v4428 = vadd.f32 0.0, %v4427
    %4429 = vmatmul.f32.gmra.mxu0 %v2827
    %v4430 = vpop.f32.mrf.mxu0
    %v4431 = vadd.f32 0.0, %v4430
    %4432 = vmatmul.f32.gmra.mxu0 %v2830
    %v4433 = vpop.f32.mrf.mxu0
    %v4434 = vadd.f32 0.0, %v4433
    %4435 = vmatmul.f32.gmra.mxu0 %v2833
    %v4436 = vpop.f32.mrf.mxu0
    %v4437 = vadd.f32 0.0, %v4436
    %4438 = vmatmul.f32.gmra.mxu0 %v2836
    %v4439 = vpop.f32.mrf.mxu0
    %v4440 = vadd.f32 0.0, %v4439
    %4441 = vmatmul.f32.gmra.mxu0 %v2839
    %v4442 = vpop.f32.mrf.mxu0
    %v4443 = vadd.f32 0.0, %v4442
    %4444 = vmatmul.f32.gmra.mxu0 %v2842
    %v4445 = vpop.f32.mrf.mxu0
    %v4446 = vadd.f32 0.0, %v4445
    %4447 = vmatmul.f32.gmra.mxu0 %v2845
    %v4448 = vpop.f32.mrf.mxu0
    %v4449 = vadd.f32 0.0, %v4448
    %4450 = vmatmul.f32.gmra.mxu0 %v2848
    %v4451 = vpop.f32.mrf.mxu0
    %v4452 = vadd.f32 0.0, %v4451
    %4453 = vmatmul.f32.gmra.mxu0 %v2851
    %v4454 = vpop.f32.mrf.mxu0
    %v4455 = vadd.f32 0.0, %v4454
    %4456 = vmatmul.f32.gmra.mxu0 %v2854
    %v4457 = vpop.f32.mrf.mxu0
    %v4458 = vadd.f32 0.0, %v4457
    %4459 = vmatmul.f32.gmra.mxu0 %v2857
    %v4460 = vpop.f32.mrf.mxu0
    %v4461 = vadd.f32 0.0, %v4460
    %4462 = vmatmul.f32.gmra.mxu0 %v2860
    %v4463 = vpop.f32.mrf.mxu0
    %v4464 = vadd.f32 0.0, %v4463
    %4465 = vdwg.mxu0
    %v4466 = vadd.f32 %v4343, %v4419
    %v4467 = vadd.f32 %v4346, %v4422
    %v4468 = vadd.f32 %v4349, %v4425
    %v4469 = vadd.f32 %v4352, %v4428
    %v4470 = vadd.f32 %v4355, %v4431
    %v4471 = vadd.f32 %v4358, %v4434
    %v4472 = vadd.f32 %v4361, %v4437
    %v4473 = vadd.f32 %v4364, %v4440
    %v4474 = vadd.f32 %v4367, %v4443
    %v4475 = vadd.f32 %v4370, %v4446
    %v4476 = vadd.f32 %v4373, %v4449
    %v4477 = vadd.f32 %v4376, %v4452
    %v4478 = vadd.f32 %v4379, %v4455
    %v4479 = vadd.f32 %v4382, %v4458
    %v4480 = vadd.f32 %v4385, %v4461
    %v4481 = vadd.f32 %v4388, %v4464
    %v4482 = vld [vmem:[%s53] sm:$0x1]
    %v4484 = vperm.slane %v4482, 0
    %v4486 = vadd.f32 %v4466, %v4484
    %v4487 = vadd.f32 %v4467, %v4484
    %v4488 = vadd.f32 %v4468, %v4484
    %v4489 = vadd.f32 %v4469, %v4484
    %v4490 = vadd.f32 %v4470, %v4484
    %v4491 = vadd.f32 %v4471, %v4484
    %v4492 = vadd.f32 %v4472, %v4484
    %v4493 = vadd.f32 %v4473, %v4484
    %v4494 = vadd.f32 %v4474, %v4484
    %v4495 = vadd.f32 %v4475, %v4484
    %v4496 = vadd.f32 %v4476, %v4484
    %v4497 = vadd.f32 %v4477, %v4484
    %v4498 = vadd.f32 %v4478, %v4484
    %v4499 = vadd.f32 %v4479, %v4484
    %v4500 = vadd.f32 %v4480, %v4484
    %v4501 = vadd.f32 %v4481, %v4484
    %v4502 = vmax.f32 %v4486, 0.0
    %v4503 = vmax.f32 %v4487, 0.0
    %v4504 = vmax.f32 %v4488, 0.0
    %v4505 = vmax.f32 %v4489, 0.0
    %v4506 = vmax.f32 %v4490, 0.0
    %v4507 = vmax.f32 %v4491, 0.0
    %v4508 = vmax.f32 %v4492, 0.0
    %v4509 = vmax.f32 %v4493, 0.0
    %v4510 = vmax.f32 %v4494, 0.0
    %v4511 = vmax.f32 %v4495, 0.0
    %v4512 = vmax.f32 %v4496, 0.0
    %v4513 = vmax.f32 %v4497, 0.0
    %v4514 = vmax.f32 %v4498, 0.0
    %v4515 = vmax.f32 %v4499, 0.0
    %v4516 = vmax.f32 %v4500, 0.0
    %v4517 = vmax.f32 %v4501, 0.0
    %v4518 = vld [vmem:[%s55] sm:$0xff]
    %v4519 = vld [vmem:[%s55 + $0x8] sm:$0xff]
    %v4520 = vld [vmem:[%s55 + $0x10] sm:$0xff]
    %v4521 = vld [vmem:[%s55 + $0x18] sm:$0xff]
    %v4522 = vld [vmem:[%s45] sm:$0xff]
    %v4523 = vld [vmem:[%s45 + $0x8] sm:$0xff]
    %v4524 = vld [vmem:[%s45 + $0x10] sm:$0xff]
    %v4525 = vld [vmem:[%s45 + $0x18] sm:$0xff]
    %v4526 = vld [vmem:[%s45 + $0x20] sm:$0xff]
    %v4527 = vld [vmem:[%s45 + $0x28] sm:$0xff]
    %v4528 = vld [vmem:[%s45 + $0x30] sm:$0xff]
    %v4529 = vld [vmem:[%s45 + $0x38] sm:$0xff]
    %4530 = vmatpush.msra.mxu0 0.0
    %4531 = vmatpush.msra.mxu0 0.0
    %4532 = vmatpush.msra.mxu0 0.0
    %4533 = vmatpush.msra.mxu0 0.0
    %4534 = vmatpush.msra.mxu0 0.0
    %4535 = vmatpush.msra.mxu0 0.0
    %4536 = vmatpush.msra.mxu0 0.0
    %4537 = vmatpush.msra.mxu0 0.0
    %4538 = vmatpush.msra.mxu0 %v4529
    %4539 = vmatpush.msra.mxu0 %v4528
    %4540 = vmatpush.msra.mxu0 %v4527
    %4541 = vmatpush.msra.mxu0 %v4526
    %4542 = vmatpush.msra.mxu0 %v4525
    %4543 = vmatpush.msra.mxu0 %v4524
    %4544 = vmatpush.msra.mxu0 %v4523
    %4545 = vmatpush.msra.mxu0 %v4522
    %4546 = vmatmul.f32.gmra.mxu0 %v4278
    %v4547 = vpop.f32.mrf.mxu0
    %v4548 = vadd.f32 0.0, %v4547
    %4549 = vmatmul.f32.gmra.mxu0 %v4281
    %v4550 = vpop.f32.mrf.mxu0
    %v4551 = vadd.f32 0.0, %v4550
    %4552 = vmatmul.f32.gmra.mxu0 %v4284
    %v4553 = vpop.f32.mrf.mxu0
    %v4554 = vadd.f32 0.0, %v4553
    %4555 = vmatmul.f32.gmra.mxu0 %v4287
    %v4556 = vpop.f32.mrf.mxu0
    %v4557 = vadd.f32 0.0, %v4556
    %4558 = vmatmul.f32.gmra.mxu0 %v4290
    %v4559 = vpop.f32.mrf.mxu0
    %v4560 = vadd.f32 0.0, %v4559
    %4561 = vmatmul.f32.gmra.mxu0 %v4293
    %v4562 = vpop.f32.mrf.mxu0
    %v4563 = vadd.f32 0.0, %v4562
    %4564 = vmatmul.f32.gmra.mxu0 %v4296
    %v4565 = vpop.f32.mrf.mxu0
    %v4566 = vadd.f32 0.0, %v4565
    %4567 = vmatmul.f32.gmra.mxu0 %v4299
    %v4568 = vpop.f32.mrf.mxu0
    %v4569 = vadd.f32 0.0, %v4568
    %4570 = vmatmul.f32.gmra.mxu0 %v4302
    %v4571 = vpop.f32.mrf.mxu0
    %v4572 = vadd.f32 0.0, %v4571
    %4573 = vmatmul.f32.gmra.mxu0 %v4305
    %v4574 = vpop.f32.mrf.mxu0
    %v4575 = vadd.f32 0.0, %v4574
    %4576 = vmatmul.f32.gmra.mxu0 %v4308
    %v4577 = vpop.f32.mrf.mxu0
    %v4578 = vadd.f32 0.0, %v4577
    %4579 = vmatmul.f32.gmra.mxu0 %v4311
    %v4580 = vpop.f32.mrf.mxu0
    %v4581 = vadd.f32 0.0, %v4580
    %4582 = vmatmul.f32.gmra.mxu0 %v4314
    %v4583 = vpop.f32.mrf.mxu0
    %v4584 = vadd.f32 0.0, %v4583
    %4585 = vmatmul.f32.gmra.mxu0 %v4317
    %v4586 = vpop.f32.mrf.mxu0
    %v4587 = vadd.f32 0.0, %v4586
    %4588 = vmatmul.f32.gmra.mxu0 %v4320
    %v4589 = vpop.f32.mrf.mxu0
    %v4590 = vadd.f32 0.0, %v4589
    %4591 = vmatmul.f32.gmra.mxu0 %v4323
    %v4592 = vpop.f32.mrf.mxu0
    %v4593 = vadd.f32 0.0, %v4592
    %4594 = vdwg.mxu0
    %vm4595 = vcmask 261120
    %v4597 = vsel %vm4595, %v4502, 0
    %v4600 = vsel %vm4595, %v4503, 0
    %v4603 = vsel %vm4595, %v4504, 0
    %v4606 = vsel %vm4595, %v4505, 0
    %v4609 = vsel %vm4595, %v4506, 0
    %v4612 = vsel %vm4595, %v4507, 0
    %v4615 = vsel %vm4595, %v4508, 0
    %v4618 = vsel %vm4595, %v4509, 0
    %v4621 = vsel %vm4595, %v4510, 0
    %v4624 = vsel %vm4595, %v4511, 0
    %v4627 = vsel %vm4595, %v4512, 0
    %v4630 = vsel %vm4595, %v4513, 0
    %v4633 = vsel %vm4595, %v4514, 0
    %v4636 = vsel %vm4595, %v4515, 0
    %v4639 = vsel %vm4595, %v4516, 0
    %v4642 = vsel %vm4595, %v4517, 0
    %4644 = vmatpush.msra.mxu0 0.0
    %4645 = vmatpush.msra.mxu0 0.0
    %4646 = vmatpush.msra.mxu0 0.0
    %4647 = vmatpush.msra.mxu0 0.0
    %4648 = vmatpush.msra.mxu0 0.0
    %4649 = vmatpush.msra.mxu0 0.0
    %4650 = vmatpush.msra.mxu0 0.0
    %4651 = vmatpush.msra.mxu0 0.0
    %4652 = vmatpush.msra.mxu0 0.0
    %4653 = vmatpush.msra.mxu0 0.0
    %4654 = vmatpush.msra.mxu0 0.0
    %4655 = vmatpush.msra.mxu0 0.0
    %4656 = vmatpush.msra.mxu0 %v4521
    %4657 = vmatpush.msra.mxu0 %v4520
    %4658 = vmatpush.msra.mxu0 %v4519
    %4659 = vmatpush.msra.mxu0 %v4518
    %4660 = vmatmul.f32.gmra.mxu0 %v4597
    %v4661 = vpop.f32.mrf.mxu0
    %v4662 = vadd.f32 %v4548, %v4661
    %4663 = vmatmul.f32.gmra.mxu0 %v4600
    %v4664 = vpop.f32.mrf.mxu0
    %v4665 = vadd.f32 %v4551, %v4664
    %4666 = vmatmul.f32.gmra.mxu0 %v4603
    %v4667 = vpop.f32.mrf.mxu0
    %v4668 = vadd.f32 %v4554, %v4667
    %4669 = vmatmul.f32.gmra.mxu0 %v4606
    %v4670 = vpop.f32.mrf.mxu0
    %v4671 = vadd.f32 %v4557, %v4670
    %4672 = vmatmul.f32.gmra.mxu0 %v4609
    %v4673 = vpop.f32.mrf.mxu0
    %v4674 = vadd.f32 %v4560, %v4673
    %4675 = vmatmul.f32.gmra.mxu0 %v4612
    %v4676 = vpop.f32.mrf.mxu0
    %v4677 = vadd.f32 %v4563, %v4676
    %4678 = vmatmul.f32.gmra.mxu0 %v4615
    %v4679 = vpop.f32.mrf.mxu0
    %v4680 = vadd.f32 %v4566, %v4679
    %4681 = vmatmul.f32.gmra.mxu0 %v4618
    %v4682 = vpop.f32.mrf.mxu0
    %v4683 = vadd.f32 %v4569, %v4682
    %4684 = vmatmul.f32.gmra.mxu0 %v4621
    %v4685 = vpop.f32.mrf.mxu0
    %v4686 = vadd.f32 %v4572, %v4685
    %4687 = vmatmul.f32.gmra.mxu0 %v4624
    %v4688 = vpop.f32.mrf.mxu0
    %v4689 = vadd.f32 %v4575, %v4688
    %4690 = vmatmul.f32.gmra.mxu0 %v4627
    %v4691 = vpop.f32.mrf.mxu0
    %v4692 = vadd.f32 %v4578, %v4691
    %4693 = vmatmul.f32.gmra.mxu0 %v4630
    %v4694 = vpop.f32.mrf.mxu0
    %v4695 = vadd.f32 %v4581, %v4694
    %4696 = vmatmul.f32.gmra.mxu0 %v4633
    %v4697 = vpop.f32.mrf.mxu0
    %v4698 = vadd.f32 %v4584, %v4697
    %4699 = vmatmul.f32.gmra.mxu0 %v4636
    %v4700 = vpop.f32.mrf.mxu0
    %v4701 = vadd.f32 %v4587, %v4700
    %4702 = vmatmul.f32.gmra.mxu0 %v4639
    %v4703 = vpop.f32.mrf.mxu0
    %v4704 = vadd.f32 %v4590, %v4703
    %4705 = vmatmul.f32.gmra.mxu0 %v4642
    %v4706 = vpop.f32.mrf.mxu0
    %v4707 = vadd.f32 %v4593, %v4706
    %4708 = vdwg.mxu0
    %v4709 = vld [vmem:[%s57] sm:$0x1]
    %v4711 = vperm.slane %v4709, 0
    %v4713 = vadd.f32 %v4662, %v4711
    %v4714 = vadd.f32 %v4665, %v4711
    %v4715 = vadd.f32 %v4668, %v4711
    %v4716 = vadd.f32 %v4671, %v4711
    %v4717 = vadd.f32 %v4674, %v4711
    %v4718 = vadd.f32 %v4677, %v4711
    %v4719 = vadd.f32 %v4680, %v4711
    %v4720 = vadd.f32 %v4683, %v4711
    %v4721 = vadd.f32 %v4686, %v4711
    %v4722 = vadd.f32 %v4689, %v4711
    %v4723 = vadd.f32 %v4692, %v4711
    %v4724 = vadd.f32 %v4695, %v4711
    %v4725 = vadd.f32 %v4698, %v4711
    %v4726 = vadd.f32 %v4701, %v4711
    %v4727 = vadd.f32 %v4704, %v4711
    %v4728 = vadd.f32 %v4707, %v4711
    %vm4729 = vcmask 31744
    %4730 = vst.msk [vmem:[%s59] sm:$0xff] %vm4729, %v4713
    %4731 = vst.msk [vmem:[%s59 + $0x8] sm:$0xff] %vm4729, %v4714
    %4732 = vst.msk [vmem:[%s59 + $0x10] sm:$0xff] %vm4729, %v4715
    %4733 = vst.msk [vmem:[%s59 + $0x18] sm:$0xff] %vm4729, %v4716
    %4734 = vst.msk [vmem:[%s59 + $0x20] sm:$0xff] %vm4729, %v4717
    %4735 = vst.msk [vmem:[%s59 + $0x28] sm:$0xff] %vm4729, %v4718
    %4736 = vst.msk [vmem:[%s59 + $0x30] sm:$0xff] %vm4729, %v4719
    %4737 = vst.msk [vmem:[%s59 + $0x38] sm:$0xff] %vm4729, %v4720
    %4738 = vst.msk [vmem:[%s59 + $0x40] sm:$0xff] %vm4729, %v4721
    %4739 = vst.msk [vmem:[%s59 + $0x48] sm:$0xff] %vm4729, %v4722
    %4740 = vst.msk [vmem:[%s59 + $0x50] sm:$0xff] %vm4729, %v4723
    %4741 = vst.msk [vmem:[%s59 + $0x58] sm:$0xff] %vm4729, %v4724
    %4742 = vst.msk [vmem:[%s59 + $0x60] sm:$0xff] %vm4729, %v4725
    %4743 = vst.msk [vmem:[%s59 + $0x68] sm:$0xff] %vm4729, %v4726
    %4744 = vst.msk [vmem:[%s59 + $0x70] sm:$0xff] %vm4729, %v4727
    %4745 = vst.msk [vmem:[%s59 + $0x78] sm:$0xff] %vm4729, %v4728
    // Predicated region
    $region134: #{tpu_custom_call.1} parent=1 // pred_check
      _
    $region135: #{tpu_custom_call.1} parent=1 // pred_check_branch
      %4747 = sbr.rel (0) target = $region137
    $region136: #{tpu_custom_call.1} parent=1 // pred_region
      _
    $region137: #{tpu_custom_call.1} parent=1 // pred_fallthru
      _
    // Predicated region
    $region138: #{tpu_custom_call.1} parent=1 // pred_check
      _
    $region139: #{tpu_custom_call.1} parent=1 // pred_check_branch
      %4749 = sbr.rel (0) target = $region141
    $region140: #{tpu_custom_call.1} parent=1 // pred_region
      _
    $region141: #{tpu_custom_call.1} parent=1 // pred_fallthru
      _
    %4750 = vsyncpa [#allocation3], 1
    %4751 = vsyncpa [#allocation5], 1
    %4752 = vsyncpa [#allocation8], 1

</llo_original>
